<compile_context>
chip_gen: v5e
topology: v5e:2x2
jax: 0.10.0
libtpu: 0.0.40
codegen_flags: <defaults>
</compile_context>

<pallas_src>
import functools

import jax
import jax.numpy as jnp
from jax.experimental import pallas as pl
from jax.experimental.pallas import tpu as pltpu


# ----------------------------------------------------------------------------
# Tile-size helpers (generation-aware-ish: keep the double-buffered working set
# well under the 32 MiB default scoped VMEM so the same code is safe on
# v5e/v6e (128 MiB) and v7x (64 MiB)).
# ----------------------------------------------------------------------------
def _largest_divisor_tile(n, cap):
    cap = min(cap, n)
    cap -= cap % 8
    for cand in range(cap, 7, -8):
        if n % cand == 0:
            return cand
    return n  # fall back to the full dim (block == array dim is always legal)


def _pick_row_tile(m, c, bytes_budget=12 << 20, max_rows=512):
    # g-tile + x-tile + out-tile, double buffered, f32.
    per_row_bytes = 3 * 2 * c * 4
    cap = int(min(max_rows, max(8, bytes_budget // per_row_bytes)))
    return _largest_divisor_tile(m, cap)


# ----------------------------------------------------------------------------
# Kernel 1: fused AdaptiveAvgPool2d((2, 2)) of g and x  (NHWC)
# grid = (N, 2, 2, row_tiles);  last axis is the reduction ("arbitrary")
# ----------------------------------------------------------------------------
def _adaptive_pool_kernel(g_ref, x_ref, pg_ref, px_ref, *, inv_area):
    r = pl.program_id(3)

    @pl.when(r == 0)
    def _init():
        pg_ref[...] = jnp.zeros_like(pg_ref)
        px_ref[...] = jnp.zeros_like(px_ref)

    # g_ref/x_ref: (1, TR, W2, C) -> partial quadrant sums (1, C)
    s_g = jnp.sum(g_ref[...], axis=(1, 2)).reshape(pg_ref.shape)
    s_x = jnp.sum(x_ref[...], axis=(1, 2)).reshape(px_ref.shape)
    pg_ref[...] += s_g
    px_ref[...] += s_x

    @pl.when(r == pl.num_programs(3) - 1)
    def _finalize():
        pg_ref[...] = pg_ref[...] * inv_area
        px_ref[...] = px_ref[...] * inv_area


def adaptive_avgpool_2x2_pallas(g, x):
    N, H, W, C = g.shape
    assert H % 2 == 0 and W % 2 == 0, "AdaptiveAvgPool2d((2,2)) tiling needs even H, W"
    H2, W2 = H // 2, W // 2
    assert W2 % 8 == 0, "this kernel requires W to be a multiple of 16"
    TR = _largest_divisor_tile(H2, 256)
    R = H2 // TR

    kern = functools.partial(_adaptive_pool_kernel, inv_area=1.0 / float(H2 * W2))
    in_spec = pl.BlockSpec((1, TR, W2, C), lambda n, qi, qj, r: (n, qi * R + r, qj, 0))
    out_spec = pl.BlockSpec((1, 1, 1, 1, C), lambda n, qi, qj, r: (n, qi, qj, 0, 0))
    pool_shape = jax.ShapeDtypeStruct((N, 2, 2, 1, C), jnp.float32)

    pg, px = pl.pallas_call(
        kern,
        out_shape=(pool_shape, pool_shape),
        grid_spec=pltpu.PrefetchScalarGridSpec(
            num_scalar_prefetch=0,
            grid=(N, 2, 2, R),
            in_specs=[in_spec, in_spec],
            out_specs=[out_spec, out_spec],
        ),
        compiler_params=pltpu.CompilerParams(
            dimension_semantics=("parallel", "parallel", "parallel", "arbitrary"),
            vmem_limit_bytes=64 * 1024 * 1024,
        ),
    )(g, x)
    # (N,2,2,1,C) -> (N*4, C): batch n occupies rows 4n..4n+3 (free reshape)
    return pg.reshape(N * 4, C), px.reshape(N * 4, C)


# ----------------------------------------------------------------------------
# Kernel 2: channel-attention ("GAP") branch on the tiny (N*4, C) pooled data
# ----------------------------------------------------------------------------
def _channel_attn_kernel(pg_ref, px_ref, wgg_ref, wgx_ref, wm_ref, pb_ref,
                         a_ref, b_ref, o_ref):
    pg = pg_ref[...]                      # (N4, C) f32
    px = px_ref[...]
    b_gg = pb_ref[0:1, :]
    b_gx = pb_ref[1:2, :]
    b_m = pb_ref[2:3, :]

    g1 = jnp.dot(pg, wgg_ref[...], preferred_element_type=jnp.float32) + b_gg
    x1 = jnp.dot(px, wgx_ref[...], preferred_element_type=jnp.float32) + b_gx
    # W_gapx(g + x): pooling is linear -> apply to (pooled_g + pooled_x)
    mp = jnp.dot(pg + px, wgx_ref[...], preferred_element_type=jnp.float32) + b_gx
    # AvgPool2d(2) on the 2x2 map == per-batch mean, broadcast back (A matrix)
    mutil = jnp.dot(a_ref[...], mp, preferred_element_type=jnp.float32)

    y = jnp.maximum(x1 * mutil + g1, 0.0)
    y = jnp.dot(y, wm_ref[...], preferred_element_type=jnp.float32) + b_m

    # Softmax2d == softmax over the channel axis (last axis in NHWC)
    y = y - jnp.max(y, axis=-1, keepdims=True)
    e = jnp.exp(y)
    sm = e / jnp.sum(e, axis=-1, keepdims=True)

    # final AvgPool2d(2): per-batch mean (B matrix) -> (N, C) channel weights
    o_ref[...] = jnp.dot(b_ref[...], sm, preferred_element_type=jnp.float32)


def channel_attention_pallas(pg, px, wgg, wgx, wm, pb, a_mat, b_mat):
    n_out, fi = b_mat.shape[0], wgg.shape[1]

    def full(shape):
        return pl.BlockSpec(shape, lambda i, _s=shape: (0,) * len(_s))

    return pl.pallas_call(
        _channel_attn_kernel,
        out_shape=jax.ShapeDtypeStruct((n_out, fi), jnp.float32),
        grid_spec=pltpu.PrefetchScalarGridSpec(
            num_scalar_prefetch=0,
            grid=(1,),
            in_specs=[full(pg.shape), full(px.shape), full(wgg.shape),
                      full(wgx.shape), full(wm.shape), full(pb.shape),
                      full(a_mat.shape), full(b_mat.shape)],
            out_specs=full((n_out, fi)),
        ),
        compiler_params=pltpu.CompilerParams(
            dimension_semantics=("arbitrary",),
            vmem_limit_bytes=64 * 1024 * 1024,
        ),
    )(pg, px, wgg, wgx, wm, pb, a_mat, b_mat)


# ----------------------------------------------------------------------------
# Kernel 3: fused full-resolution spatial-attention path
#   g_s = W_g(g); F_s = W_x(chan * x); psi = sigmoid(BN(conv_psi(relu(F_s+g_s))))
#   out = x * psi
# grid = (N, M_tiles), both "parallel" (megacore-shardable).
# ----------------------------------------------------------------------------
def _spatial_attn_kernel(g_ref, x_ref, c_ref, wg_ref, wx_ref, mp_ref, o_ref):
    gt = g_ref[0]                         # (TM, C) f32
    xt = x_ref[0]                         # (TM, C) f32
    chan = c_ref[0]                       # (1, C)  f32 channel-attention vector
    b_g = mp_ref[0:1, :]
    b_x = mp_ref[1:2, :]
    w_psi = mp_ref[2:3, :]
    b_psi = mp_ref[3:4, 0:1]

    mx = xt * chan                        # M_channel tile, stays in VMEM
    # bf16 MXU matmuls, f32 accumulate + f32 epilogue (per review feedback)
    g_s = jnp.dot(gt.astype(jnp.bfloat16), wg_ref[...],
                  preferred_element_type=jnp.float32) + b_g
    f_s = jnp.dot(mx.astype(jnp.bfloat16), wx_ref[...],
                  preferred_element_type=jnp.float32) + b_x
    m_sp = jnp.maximum(g_s + f_s, 0.0)    # (TM, Fi)

    psi_lin = jnp.sum(m_sp * w_psi, axis=-1, keepdims=True) + b_psi
    psi = 1.0 / (1.0 + jnp.exp(-psi_lin))                     # (TM, 1)

    o_ref[...] = (xt * psi)[None].astype(o_ref.dtype)


def spatial_attention_pallas(g2, x2, chan, wg_bf16, wx_bf16, mp):
    N, M, C = x2.shape
    TM = _pick_row_tile(M, C)
    grid = (N, M // TM)
    row_spec = pl.BlockSpec((1, TM, C), lambda n, i: (n, i, 0))

    return pl.pallas_call(
        _spatial_attn_kernel,
        out_shape=jax.ShapeDtypeStruct((N, M, C), x2.dtype),
        grid_spec=pltpu.PrefetchScalarGridSpec(
            num_scalar_prefetch=0,
            grid=grid,
            in_specs=[
                row_spec,
                row_spec,
                pl.BlockSpec((1, 1, C), lambda n, i: (n, 0, 0)),
                pl.BlockSpec(wg_bf16.shape, lambda n, i: (0, 0)),
                pl.BlockSpec(wx_bf16.shape, lambda n, i: (0, 0)),
                pl.BlockSpec(mp.shape, lambda n, i: (0, 0)),
            ],
            out_specs=row_spec,
        ),
        compiler_params=pltpu.CompilerParams(
            dimension_semantics=("parallel", "parallel"),
            vmem_limit_bytes=64 * 1024 * 1024,
        ),
    )(g2, x2, chan, wg_bf16, wx_bf16, mp)


# ----------------------------------------------------------------------------
# Parameter folding (glue): Conv1x1 + BN(eval) -> (Cin, Cout) weight + bias
# ----------------------------------------------------------------------------
def _fold_conv_bn(br, eps=1e-5):
    w = br["w"].reshape(br["w"].shape[0], br["w"].shape[1])          # (O, I)
    s = br["gamma"] / jnp.sqrt(br["var"] + eps)                      # (O,)
    w_eff = (w * s[:, None]).T.astype(jnp.float32)                   # (I, O)
    b_eff = (s * br["b"] + br["beta"] - s * br["mean"]).astype(jnp.float32)
    return w_eff, b_eff


# ----------------------------------------------------------------------------
# Forward pass
# ----------------------------------------------------------------------------
def augmented_attention_forward_nhwc(g, x, params, eps=1e-5):
    N, H, W, C = x.shape
    Fi = params["W_g"]["w"].shape[0]
    assert g.shape == x.shape
    # The PyTorch module broadcasts (N,F_int,1,1) * (N,F_l,H,W) -> needs F_int == F_l
    assert Fi == C, "F_int must equal F_l for Augmented_Attention_block to run"

    # Stage 1: fused adaptive 2x2 average pooling of g and x (single tiled pass)
    pg, px = adaptive_avgpool_2x2_pallas(g, x)                       # (N*4, C)

    # Stage 2: tiny channel-attention path
    wgg, bgg = _fold_conv_bn(params["W_gapg"], eps)
    wgx, bgx = _fold_conv_bn(params["W_gapx"], eps)
    wm = params["conv_m"]["w"].reshape(Fi, Fi).T.astype(jnp.float32)  # (I, O)
    bm = params["conv_m"]["b"].astype(jnp.float32)
    pb = jnp.stack([bgg, bgx, bm], axis=0)                            # (3, Fi)
    a_mat = jnp.kron(jnp.eye(N, dtype=jnp.float32),
                     jnp.full((4, 4), 0.25, jnp.float32))             # per-batch mean, bcast
    b_mat = jnp.kron(jnp.eye(N, dtype=jnp.float32),
                     jnp.full((1, 4), 0.25, jnp.float32))             # per-batch mean
    chan = channel_attention_pallas(pg, px, wgg, wgx, wm, pb, a_mat, b_mat)
    chan = chan.reshape(N, 1, C)

    # Stage 3: fused full-resolution spatial attention
    wg, bg = _fold_conv_bn(params["W_g"], eps)
    wx, bx = _fold_conv_bn(params["W_x"], eps)
    wpsi, bpsi = _fold_conv_bn(params["psi"], eps)                    # (Fi,1), (1,)
    mp = jnp.concatenate(
        [bg[None, :], bx[None, :], wpsi.T, jnp.full((1, Fi), bpsi[0], jnp.float32)],
        axis=0)                                                       # (4, Fi)

    out = spatial_attention_pallas(
        g.reshape(N, H * W, C), x.reshape(N, H * W, C), chan,
        wg.astype(jnp.bfloat16), wx.astype(jnp.bfloat16), mp)
    return out.reshape(N, H, W, C)


def augmented_attention_forward(g_nchw, x_nchw, params, eps=1e-5):
    """PyTorch-interface wrapper (NCHW in / NCHW out)."""
    g = jnp.transpose(g_nchw, (0, 2, 3, 1))
    x = jnp.transpose(x_nchw, (0, 2, 3, 1))
    out = augmented_attention_forward_nhwc(g, x, params, eps)
    return jnp.transpose(out, (0, 3, 1, 2))


# ----------------------------------------------------------------------------
# Pure-JAX reference (PyTorch-equivalent eval-mode semantics, NCHW)
# ----------------------------------------------------------------------------
def ref_forward(g, x, p, eps=1e-5):
    def conv1x1(t, br):
        w = br["w"].reshape(br["w"].shape[0], br["w"].shape[1])
        return jnp.einsum("oi,nihw->nohw", w, t) + br["b"].reshape(1, -1, 1, 1)

    def bn(t, br):
        s = br["gamma"] / jnp.sqrt(br["var"] + eps)
        return (s.reshape(1, -1, 1, 1) * (t - br["mean"].reshape(1, -1, 1, 1))
                + br["beta"].reshape(1, -1, 1, 1))

    def adaptive_pool_22(t):
        n, c, h, w = t.shape
        return t.reshape(n, c, 2, h // 2, 2, w // 2).mean(axis=(3, 5))

    def avg_pool_2(t):
        n, c, h, w = t.shape
        return t.reshape(n, c, h // 2, 2, w // 2, 2).mean(axis=(3, 5))

    W_gapg = lambda t: bn(conv1x1(adaptive_pool_22(t), p["W_gapg"]), p["W_gapg"])
    W_gapx = lambda t: bn(conv1x1(adaptive_pool_22(t), p["W_gapx"]), p["W_gapx"])

    g1_gap = W_gapg(g)
    x1_gap = W_gapx(x)
    mutil = W_gapx(g + x)
    mutil = avg_pool_2(mutil)
    mutil_x = x1_gap * mutil
    mutil_x_g = jnp.maximum(mutil_x + g1_gap, 0.0)
    mutil_x_g = conv1x1(mutil_x_g, p["conv_m"])
    mutil_x_g = jax.nn.softmax(mutil_x_g, axis=1)
    mutil_x_g = avg_pool_2(mutil_x_g)
    M_channel = mutil_x_g * x
    g_s = bn(conv1x1(g, p["W_g"]), p["W_g"])
    F_s = bn(conv1x1(M_channel, p["W_x"]), p["W_x"])
    M_spatial = jnp.maximum(F_s + g_s, 0.0)
    psi = jax.nn.sigmoid(bn(conv1x1(M_spatial, p["psi"]), p["psi"]))
    return x * psi


# ----------------------------------------------------------------------------
# Deterministic parameter init + demo
# ----------------------------------------------------------------------------
def make_params(key, F_g, F_l, F_int):
    ks = iter(jax.random.split(key, 40))

    def conv_bn(o, i):
        return {
            "w": 0.1 * jax.random.normal(next(ks), (o, i, 1, 1), jnp.float32),
            "b": 0.05 * jax.random.normal(next(ks), (o,), jnp.float32),
            "gamma": 1.0 + 0.1 * jax.random.normal(next(ks), (o,), jnp.float32),
            "beta": 0.05 * jax.random.normal(next(ks), (o,), jnp.float32),
            "mean": 0.05 * jax.random.normal(next(ks), (o,), jnp.float32),
            "var": jax.random.uniform(next(ks), (o,), jnp.float32, 0.5, 1.5),
        }

    return {
        "W_g": conv_bn(F_int, F_g),
        "W_gapg": conv_bn(F_int, F_l),
        "W_x": conv_bn(F_int, F_l),
        "W_gapx": conv_bn(F_int, F_l),
        "psi": conv_bn(1, F_int),
        "conv_m": {
            "w": 0.1 * jax.random.normal(next(ks), (F_int, F_int, 1, 1), jnp.float32),
            "b": 0.05 * jax.random.normal(next(ks), (F_int,), jnp.float32),
        },
    }


if __name__ == "__main__":
    # F_int must equal F_l (= F_g) for the module's broadcasts to be valid.
    B, C, H, W = 2, 8, 32, 32
    Fi = C
    key = jax.random.PRNGKey(0)
    kg, kx, kp = jax.random.split(key, 3)
    g = jax.random.normal(kg, (B, C, H, W), jnp.float32)   # NCHW like PyTorch
    x = jax.random.normal(kx, (B, C, H, W), jnp.float32)
    params = make_params(kp, F_g=C, F_l=C, F_int=Fi)

    fwd = jax.jit(augmented_attention_forward)
    out = jax.block_until_ready(fwd(g, x, params))
    ref = jax.block_until_ready(jax.jit(ref_forward)(g, x, params))

    assert out.shape == (B, C, H, W), out.shape
    assert bool(jnp.all(jnp.isfinite(out)))
    max_err = float(jnp.max(jnp.abs(out - ref)))
    assert jnp.allclose(out, ref, atol=2e-2, rtol=2e-2), max_err

    print("KERNEL_OK")
</pallas_src>

<mosaic_0001>
module attributes {stable_mosaic.version = 11 : i64} {
  func.func @_adaptive_pool_kernel(%arg0: i32, %arg1: i32, %arg2: i32, %arg3: i32, %arg4: memref<1x16x16x8xf32, #tpu.memory_space<vmem>>, %arg5: memref<1x16x16x8xf32, #tpu.memory_space<vmem>>, %arg6: memref<1x1x1x1x8xf32, #tpu.memory_space<vmem>>, %arg7: memref<1x1x1x1x8xf32, #tpu.memory_space<vmem>>) attributes {dimension_semantics = [#tpu.dimension_semantics<parallel>, #tpu.dimension_semantics<parallel>, #tpu.dimension_semantics<parallel>, #tpu.dimension_semantics<arbitrary>], iteration_bounds = array<i64: 2, 2, 2, 1>, scalar_prefetch = 0 : i64, scratch_operands = 0 : i64, tpu.core_type = #tpu.core_type<tc>, window_params = [{transform_indices = @transform_0, window_bounds = array<i64: 1, 16, 16, 8>}, {transform_indices = @transform_1, window_bounds = array<i64: 1, 16, 16, 8>}, {transform_indices = @transform_2, window_bounds = array<i64: 1, 1, 1, 1, 8>}, {transform_indices = @transform_3, window_bounds = array<i64: 1, 1, 1, 1, 8>}]} {
    %c0_i32 = arith.constant 0 : i32
    %0 = arith.cmpi eq, %arg3, %c0_i32 : i32
    %1 = arith.extui %0 : i1 to i32
    %c0_i32_0 = arith.constant 0 : i32
    %2 = arith.cmpi ne, %1, %c0_i32_0 : i32
    scf.if %2 {
      %cst_31 = arith.constant 0.000000e+00 : f32
      %18 = vector.broadcast %cst_31 : f32 to vector<1x1x1x1x8xf32>
      %c0_32 = arith.constant 0 : index
      %c0_33 = arith.constant 0 : index
      %c0_34 = arith.constant 0 : index
      %c0_35 = arith.constant 0 : index
      %c0_36 = arith.constant 0 : index
      %19 = vector.load %arg6[%c0_32, %c0_33, %c0_34, %c0_35, %c0_36] : memref<1x1x1x1x8xf32, #tpu.memory_space<vmem>>, vector<1x1x1x1x8xf32>
      tpu.vector_store %arg6[%c0_32, %c0_33, %c0_34, %c0_35, %c0_36], %18 {strides = array<i32>} : memref<1x1x1x1x8xf32, #tpu.memory_space<vmem>>, vector<1x1x1x1x8xf32>,
      %cst_37 = arith.constant 0.000000e+00 : f32
      %20 = vector.broadcast %cst_37 : f32 to vector<1x1x1x1x8xf32>
      %c0_38 = arith.constant 0 : index
      %c0_39 = arith.constant 0 : index
      %c0_40 = arith.constant 0 : index
      %c0_41 = arith.constant 0 : index
      %c0_42 = arith.constant 0 : index
      %21 = vector.load %arg7[%c0_38, %c0_39, %c0_40, %c0_41, %c0_42] : memref<1x1x1x1x8xf32, #tpu.memory_space<vmem>>, vector<1x1x1x1x8xf32>
      tpu.vector_store %arg7[%c0_38, %c0_39, %c0_40, %c0_41, %c0_42], %20 {strides = array<i32>} : memref<1x1x1x1x8xf32, #tpu.memory_space<vmem>>, vector<1x1x1x1x8xf32>,
    } else {
    }
    %c0 = arith.constant 0 : index
    %c0_1 = arith.constant 0 : index
    %c0_2 = arith.constant 0 : index
    %c0_3 = arith.constant 0 : index
    %3 = vector.load %arg4[%c0, %c0_1, %c0_2, %c0_3] : memref<1x16x16x8xf32, #tpu.memory_space<vmem>>, vector<1x16x16x8xf32>
    %cst = arith.constant dense<0.000000e+00> : vector<1x8xf32>
    %4 = vector.multi_reduction <add>, %3, %cst [1, 2] : vector<1x16x16x8xf32> to vector<1x8xf32>
    %5 = vector.shape_cast %4 : vector<1x8xf32> to vector<1x1x1x1x8xf32>
    %c0_4 = arith.constant 0 : index
    %c0_5 = arith.constant 0 : index
    %c0_6 = arith.constant 0 : index
    %c0_7 = arith.constant 0 : index
    %6 = vector.load %arg5[%c0_4, %c0_5, %c0_6, %c0_7] : memref<1x16x16x8xf32, #tpu.memory_space<vmem>>, vector<1x16x16x8xf32>
    %cst_8 = arith.constant dense<0.000000e+00> : vector<1x8xf32>
    %7 = vector.multi_reduction <add>, %6, %cst_8 [1, 2] : vector<1x16x16x8xf32> to vector<1x8xf32>
    %8 = vector.shape_cast %7 : vector<1x8xf32> to vector<1x1x1x1x8xf32>
    %c0_9 = arith.constant 0 : index
    %c0_10 = arith.constant 0 : index
    %c0_11 = arith.constant 0 : index
    %c0_12 = arith.constant 0 : index
    %c0_13 = arith.constant 0 : index
    %9 = vector.load %arg6[%c0_9, %c0_10, %c0_11, %c0_12, %c0_13] : memref<1x1x1x1x8xf32, #tpu.memory_space<vmem>>, vector<1x1x1x1x8xf32>
    %10 = arith.addf %9, %5 : vector<1x1x1x1x8xf32>
    %c0_14 = arith.constant 0 : index
    %c0_15 = arith.constant 0 : index
    %c0_16 = arith.constant 0 : index
    %c0_17 = arith.constant 0 : index
    %c0_18 = arith.constant 0 : index
    %11 = vector.load %arg6[%c0_14, %c0_15, %c0_16, %c0_17, %c0_18] : memref<1x1x1x1x8xf32, #tpu.memory_space<vmem>>, vector<1x1x1x1x8xf32>
    tpu.vector_store %arg6[%c0_14, %c0_15, %c0_16, %c0_17, %c0_18], %10 {strides = array<i32>} : memref<1x1x1x1x8xf32, #tpu.memory_space<vmem>>, vector<1x1x1x1x8xf32>,
    %c0_19 = arith.constant 0 : index
    %c0_20 = arith.constant 0 : index
    %c0_21 = arith.constant 0 : index
    %c0_22 = arith.constant 0 : index
    %c0_23 = arith.constant 0 : index
    %12 = vector.load %arg7[%c0_19, %c0_20, %c0_21, %c0_22, %c0_23] : memref<1x1x1x1x8xf32, #tpu.memory_space<vmem>>, vector<1x1x1x1x8xf32>
    %13 = arith.addf %12, %8 : vector<1x1x1x1x8xf32>
    %c0_24 = arith.constant 0 : index
    %c0_25 = arith.constant 0 : index
    %c0_26 = arith.constant 0 : index
    %c0_27 = arith.constant 0 : index
    %c0_28 = arith.constant 0 : index
    %14 = vector.load %arg7[%c0_24, %c0_25, %c0_26, %c0_27, %c0_28] : memref<1x1x1x1x8xf32, #tpu.memory_space<vmem>>, vector<1x1x1x1x8xf32>
    tpu.vector_store %arg7[%c0_24, %c0_25, %c0_26, %c0_27, %c0_28], %13 {strides = array<i32>} : memref<1x1x1x1x8xf32, #tpu.memory_space<vmem>>, vector<1x1x1x1x8xf32>,
    %c0_i32_29 = arith.constant 0 : i32
    %15 = arith.cmpi eq, %arg3, %c0_i32_29 : i32
    %16 = arith.extui %15 : i1 to i32
    %c0_i32_30 = arith.constant 0 : i32
    %17 = arith.cmpi ne, %16, %c0_i32_30 : i32
    scf.if %17 {
      %c0_31 = arith.constant 0 : index
      %c0_32 = arith.constant 0 : index
      %c0_33 = arith.constant 0 : index
      %c0_34 = arith.constant 0 : index
      %c0_35 = arith.constant 0 : index
      %18 = vector.load %arg6[%c0_31, %c0_32, %c0_33, %c0_34, %c0_35] : memref<1x1x1x1x8xf32, #tpu.memory_space<vmem>>, vector<1x1x1x1x8xf32>
      %cst_36 = arith.constant 3.906250e-03 : f32
      %19 = vector.broadcast %cst_36 : f32 to vector<1x1x1x1x8xf32>
      %20 = arith.mulf %18, %19 : vector<1x1x1x1x8xf32>
      %c0_37 = arith.constant 0 : index
      %c0_38 = arith.constant 0 : index
      %c0_39 = arith.constant 0 : index
      %c0_40 = arith.constant 0 : index
      %c0_41 = arith.constant 0 : index
      %21 = vector.load %arg6[%c0_37, %c0_38, %c0_39, %c0_40, %c0_41] : memref<1x1x1x1x8xf32, #tpu.memory_space<vmem>>, vector<1x1x1x1x8xf32>
      tpu.vector_store %arg6[%c0_37, %c0_38, %c0_39, %c0_40, %c0_41], %20 {strides = array<i32>} : memref<1x1x1x1x8xf32, #tpu.memory_space<vmem>>, vector<1x1x1x1x8xf32>,
      %c0_42 = arith.constant 0 : index
      %c0_43 = arith.constant 0 : index
      %c0_44 = arith.constant 0 : index
      %c0_45 = arith.constant 0 : index
      %c0_46 = arith.constant 0 : index
      %22 = vector.load %arg7[%c0_42, %c0_43, %c0_44, %c0_45, %c0_46] : memref<1x1x1x1x8xf32, #tpu.memory_space<vmem>>, vector<1x1x1x1x8xf32>
      %cst_47 = arith.constant 3.906250e-03 : f32
      %23 = vector.broadcast %cst_47 : f32 to vector<1x1x1x1x8xf32>
      %24 = arith.mulf %22, %23 : vector<1x1x1x1x8xf32>
      %c0_48 = arith.constant 0 : index
      %c0_49 = arith.constant 0 : index
      %c0_50 = arith.constant 0 : index
      %c0_51 = arith.constant 0 : index
      %c0_52 = arith.constant 0 : index
      %25 = vector.load %arg7[%c0_48, %c0_49, %c0_50, %c0_51, %c0_52] : memref<1x1x1x1x8xf32, #tpu.memory_space<vmem>>, vector<1x1x1x1x8xf32>
      tpu.vector_store %arg7[%c0_48, %c0_49, %c0_50, %c0_51, %c0_52], %24 {strides = array<i32>} : memref<1x1x1x1x8xf32, #tpu.memory_space<vmem>>, vector<1x1x1x1x8xf32>,
    } else {
    }
    return
  }
  func.func @transform_0(%arg0: i32, %arg1: i32, %arg2: i32, %arg3: i32) -> (i32, i32, i32, i32) {
    %c1_i32 = arith.constant 1 : i32
    %0 = arith.muli %arg1, %c1_i32 : i32
    %1 = arith.addi %0, %arg3 : i32
    %c0_i32 = arith.constant 0 : i32
    %c0_i32_0 = arith.constant 0 : i32
    return %arg0, %1, %arg2, %c0_i32 : i32, i32, i32, i32
  }
  func.func @transform_1(%arg0: i32, %arg1: i32, %arg2: i32, %arg3: i32) -> (i32, i32, i32, i32) {
    %c1_i32 = arith.constant 1 : i32
    %0 = arith.muli %arg1, %c1_i32 : i32
    %1 = arith.addi %0, %arg3 : i32
    %c0_i32 = arith.constant 0 : i32
    %c0_i32_0 = arith.constant 0 : i32
    return %arg0, %1, %arg2, %c0_i32 : i32, i32, i32, i32
  }
  func.func @transform_2(%arg0: i32, %arg1: i32, %arg2: i32, %arg3: i32) -> (i32, i32, i32, i32, i32) {
    %c0_i32 = arith.constant 0 : i32
    %c0_i32_0 = arith.constant 0 : i32
    %c0_i32_1 = arith.constant 0 : i32
    return %arg0, %arg1, %arg2, %c0_i32, %c0_i32_0 : i32, i32, i32, i32, i32
  }
  func.func @transform_3(%arg0: i32, %arg1: i32, %arg2: i32, %arg3: i32) -> (i32, i32, i32, i32, i32) {
    %c0_i32 = arith.constant 0 : i32
    %c0_i32_0 = arith.constant 0 : i32
    %c0_i32_1 = arith.constant 0 : i32
    return %arg0, %arg1, %arg2, %c0_i32, %c0_i32_0 : i32, i32, i32, i32, i32
  }
}

module attributes {stable_mosaic.version = 11 : i64} {
  func.func @_channel_attn_kernel(%arg0: i32, %arg1: memref<8x8xf32, #tpu.memory_space<vmem>>, %arg2: memref<8x8xf32, #tpu.memory_space<vmem>>, %arg3: memref<8x8xf32, #tpu.memory_space<vmem>>, %arg4: memref<8x8xf32, #tpu.memory_space<vmem>>, %arg5: memref<8x8xf32, #tpu.memory_space<vmem>>, %arg6: memref<3x8xf32, #tpu.memory_space<vmem>>, %arg7: memref<8x8xf32, #tpu.memory_space<vmem>>, %arg8: memref<2x8xf32, #tpu.memory_space<vmem>>, %arg9: memref<2x8xf32, #tpu.memory_space<vmem>>) attributes {dimension_semantics = [#tpu.dimension_semantics<arbitrary>], iteration_bounds = array<i64: 1>, scalar_prefetch = 0 : i64, scratch_operands = 0 : i64, tpu.core_type = #tpu.core_type<tc>, window_params = [{pipeline_mode = #tpu.pipeline_mode<synchronous>, transform_indices = @transform_0, window_bounds = array<i64: 8, 8>}, {pipeline_mode = #tpu.pipeline_mode<synchronous>, transform_indices = @transform_1, window_bounds = array<i64: 8, 8>}, {pipeline_mode = #tpu.pipeline_mode<synchronous>, transform_indices = @transform_2, window_bounds = array<i64: 8, 8>}, {pipeline_mode = #tpu.pipeline_mode<synchronous>, transform_indices = @transform_3, window_bounds = array<i64: 8, 8>}, {pipeline_mode = #tpu.pipeline_mode<synchronous>, transform_indices = @transform_4, window_bounds = array<i64: 8, 8>}, {pipeline_mode = #tpu.pipeline_mode<synchronous>, transform_indices = @transform_5, window_bounds = array<i64: 3, 8>}, {pipeline_mode = #tpu.pipeline_mode<synchronous>, transform_indices = @transform_6, window_bounds = array<i64: 8, 8>}, {pipeline_mode = #tpu.pipeline_mode<synchronous>, transform_indices = @transform_7, window_bounds = array<i64: 2, 8>}, {pipeline_mode = #tpu.pipeline_mode<synchronous>, transform_indices = @transform_8, window_bounds = array<i64: 2, 8>}]} {
    %c0 = arith.constant 0 : index
    %c0_0 = arith.constant 0 : index
    %0 = vector.load %arg1[%c0, %c0_0] : memref<8x8xf32, #tpu.memory_space<vmem>>, vector<8x8xf32>
    %c0_1 = arith.constant 0 : index
    %c0_2 = arith.constant 0 : index
    %1 = vector.load %arg2[%c0_1, %c0_2] : memref<8x8xf32, #tpu.memory_space<vmem>>, vector<8x8xf32>
    %c0_3 = arith.constant 0 : index
    %c0_4 = arith.constant 0 : index
    %2 = vector.load %arg6[%c0_3, %c0_4] : memref<3x8xf32, #tpu.memory_space<vmem>>, vector<1x8xf32>
    %c1 = arith.constant 1 : index
    %c0_5 = arith.constant 0 : index
    %3 = vector.load %arg6[%c1, %c0_5] : memref<3x8xf32, #tpu.memory_space<vmem>>, vector<1x8xf32>
    %c2 = arith.constant 2 : index
    %c0_6 = arith.constant 0 : index
    %4 = vector.load %arg6[%c2, %c0_6] : memref<3x8xf32, #tpu.memory_space<vmem>>, vector<1x8xf32>
    %c0_7 = arith.constant 0 : index
    %c0_8 = arith.constant 0 : index
    %5 = vector.load %arg3[%c0_7, %c0_8] : memref<8x8xf32, #tpu.memory_space<vmem>>, vector<8x8xf32>
    %cst = arith.constant dense<0.000000e+00> : vector<8x8xf32>
    %6 = tpu.matmul %0, %5, %cst {dimension_numbers = #tpu.dot_dimension_numbers<[1], [0], [0], [1], [0, 0, 1, 1], [], []>} : vector<8x8xf32>, vector<8x8xf32>, vector<8x8xf32> -> vector<8x8xf32>
    %7 = vector.broadcast %2 : vector<1x8xf32> to vector<8x8xf32>
    %8 = arith.addf %6, %7 : vector<8x8xf32>
    %c0_9 = arith.constant 0 : index
    %c0_10 = arith.constant 0 : index
    %9 = vector.load %arg4[%c0_9, %c0_10] : memref<8x8xf32, #tpu.memory_space<vmem>>, vector<8x8xf32>
    %cst_11 = arith.constant dense<0.000000e+00> : vector<8x8xf32>
    %10 = tpu.matmul %1, %9, %cst_11 {dimension_numbers = #tpu.dot_dimension_numbers<[1], [0], [0], [1], [0, 0, 1, 1], [], []>} : vector<8x8xf32>, vector<8x8xf32>, vector<8x8xf32> -> vector<8x8xf32>
    %11 = vector.broadcast %3 : vector<1x8xf32> to vector<8x8xf32>
    %12 = arith.addf %10, %11 : vector<8x8xf32>
    %13 = arith.addf %0, %1 : vector<8x8xf32>
    %c0_12 = arith.constant 0 : index
    %c0_13 = arith.constant 0 : index
    %14 = vector.load %arg4[%c0_12, %c0_13] : memref<8x8xf32, #tpu.memory_space<vmem>>, vector<8x8xf32>
    %cst_14 = arith.constant dense<0.000000e+00> : vector<8x8xf32>
    %15 = tpu.matmul %13, %14, %cst_14 {dimension_numbers = #tpu.dot_dimension_numbers<[1], [0], [0], [1], [0, 0, 1, 1], [], []>} : vector<8x8xf32>, vector<8x8xf32>, vector<8x8xf32> -> vector<8x8xf32>
    %16 = vector.broadcast %3 : vector<1x8xf32> to vector<8x8xf32>
    %17 = arith.addf %15, %16 : vector<8x8xf32>
    %c0_15 = arith.constant 0 : index
    %c0_16 = arith.constant 0 : index
    %18 = vector.load %arg7[%c0_15, %c0_16] : memref<8x8xf32, #tpu.memory_space<vmem>>, vector<8x8xf32>
    %cst_17 = arith.constant dense<0.000000e+00> : vector<8x8xf32>
    %19 = tpu.matmul %18, %17, %cst_17 {dimension_numbers = #tpu.dot_dimension_numbers<[1], [0], [0], [1], [0, 0, 1, 1], [], []>} : vector<8x8xf32>, vector<8x8xf32>, vector<8x8xf32> -> vector<8x8xf32>
    %20 = arith.mulf %12, %19 : vector<8x8xf32>
    %21 = arith.addf %20, %8 : vector<8x8xf32>
    %cst_18 = arith.constant 0.000000e+00 : f32
    %22 = vector.broadcast %cst_18 : f32 to vector<8x8xf32>
    %23 = arith.maximumf %21, %22 : vector<8x8xf32>
    %c0_19 = arith.constant 0 : index
    %c0_20 = arith.constant 0 : index
    %24 = vector.load %arg5[%c0_19, %c0_20] : memref<8x8xf32, #tpu.memory_space<vmem>>, vector<8x8xf32>
    %cst_21 = arith.constant dense<0.000000e+00> : vector<8x8xf32>
    %25 = tpu.matmul %23, %24, %cst_21 {dimension_numbers = #tpu.dot_dimension_numbers<[1], [0], [0], [1], [0, 0, 1, 1], [], []>} : vector<8x8xf32>, vector<8x8xf32>, vector<8x8xf32> -> vector<8x8xf32>
    %26 = vector.broadcast %4 : vector<1x8xf32> to vector<8x8xf32>
    %27 = arith.addf %25, %26 : vector<8x8xf32>
    %cst_22 = arith.constant dense<0xFF800000> : vector<8xf32>
    %28 = vector.multi_reduction <maximumf>, %27, %cst_22 [1] : vector<8x8xf32> to vector<8xf32>
    %29 = vector.shape_cast %28 : vector<8xf32> to vector<8x1xf32>
    %30 = vector.broadcast %29 : vector<8x1xf32> to vector<8x8xf32>
    %31 = arith.subf %27, %30 : vector<8x8xf32>
    %32 = math.exp %31 : vector<8x8xf32>
    %cst_23 = arith.constant dense<0.000000e+00> : vector<8xf32>
    %33 = vector.multi_reduction <add>, %32, %cst_23 [1] : vector<8x8xf32> to vector<8xf32>
    %34 = vector.shape_cast %33 : vector<8xf32> to vector<8x1xf32>
    %35 = vector.broadcast %34 : vector<8x1xf32> to vector<8x8xf32>
    %36 = arith.divf %32, %35 : vector<8x8xf32>
    %c0_24 = arith.constant 0 : index
    %c0_25 = arith.constant 0 : index
    %37 = vector.load %arg8[%c0_24, %c0_25] : memref<2x8xf32, #tpu.memory_space<vmem>>, vector<2x8xf32>
    %cst_26 = arith.constant dense<0.000000e+00> : vector<2x8xf32>
    %38 = tpu.matmul %37, %36, %cst_26 {dimension_numbers = #tpu.dot_dimension_numbers<[1], [0], [0], [1], [0, 0, 1, 1], [], []>} : vector<2x8xf32>, vector<8x8xf32>, vector<2x8xf32> -> vector<2x8xf32>
    %c0_27 = arith.constant 0 : index
    %c0_28 = arith.constant 0 : index
    %39 = vector.load %arg9[%c0_27, %c0_28] : memref<2x8xf32, #tpu.memory_space<vmem>>, vector<2x8xf32>
    tpu.vector_store %arg9[%c0_27, %c0_28], %38 {strides = array<i32>} : memref<2x8xf32, #tpu.memory_space<vmem>>, vector<2x8xf32>,
    return
  }
  func.func @transform_0(%arg0: i32) -> (i32, i32) {
    %c0_i32 = arith.constant 0 : i32
    %c0_i32_0 = arith.constant 0 : i32
    %c0_i32_1 = arith.constant 0 : i32
    return %c0_i32, %c0_i32_0 : i32, i32
  }
  func.func @transform_1(%arg0: i32) -> (i32, i32) {
    %c0_i32 = arith.constant 0 : i32
    %c0_i32_0 = arith.constant 0 : i32
    %c0_i32_1 = arith.constant 0 : i32
    return %c0_i32, %c0_i32_0 : i32, i32
  }
  func.func @transform_2(%arg0: i32) -> (i32, i32) {
    %c0_i32 = arith.constant 0 : i32
    %c0_i32_0 = arith.constant 0 : i32
    %c0_i32_1 = arith.constant 0 : i32
    return %c0_i32, %c0_i32_0 : i32, i32
  }
  func.func @transform_3(%arg0: i32) -> (i32, i32) {
    %c0_i32 = arith.constant 0 : i32
    %c0_i32_0 = arith.constant 0 : i32
    %c0_i32_1 = arith.constant 0 : i32
    return %c0_i32, %c0_i32_0 : i32, i32
  }
  func.func @transform_4(%arg0: i32) -> (i32, i32) {
    %c0_i32 = arith.constant 0 : i32
    %c0_i32_0 = arith.constant 0 : i32
    %c0_i32_1 = arith.constant 0 : i32
    return %c0_i32, %c0_i32_0 : i32, i32
  }
  func.func @transform_5(%arg0: i32) -> (i32, i32) {
    %c0_i32 = arith.constant 0 : i32
    %c0_i32_0 = arith.constant 0 : i32
    %c0_i32_1 = arith.constant 0 : i32
    return %c0_i32, %c0_i32_0 : i32, i32
  }
  func.func @transform_6(%arg0: i32) -> (i32, i32) {
    %c0_i32 = arith.constant 0 : i32
    %c0_i32_0 = arith.constant 0 : i32
    %c0_i32_1 = arith.constant 0 : i32
    return %c0_i32, %c0_i32_0 : i32, i32
  }
  func.func @transform_7(%arg0: i32) -> (i32, i32) {
    %c0_i32 = arith.constant 0 : i32
    %c0_i32_0 = arith.constant 0 : i32
    %c0_i32_1 = arith.constant 0 : i32
    return %c0_i32, %c0_i32_0 : i32, i32
  }
  func.func @transform_8(%arg0: i32) -> (i32, i32) {
    %c0_i32 = arith.constant 0 : i32
    %c0_i32_0 = arith.constant 0 : i32
    %c0_i32_1 = arith.constant 0 : i32
    return %c0_i32, %c0_i32_0 : i32, i32
  }
}

module attributes {stable_mosaic.version = 11 : i64} {
  func.func @_spatial_attn_kernel(%arg0: i32, %arg1: i32, %arg2: memref<1x512x8xf32, #tpu.memory_space<vmem>>, %arg3: memref<1x512x8xf32, #tpu.memory_space<vmem>>, %arg4: memref<1x1x8xf32, #tpu.memory_space<vmem>>, %arg5: memref<8x8xbf16, #tpu.memory_space<vmem>>, %arg6: memref<8x8xbf16, #tpu.memory_space<vmem>>, %arg7: memref<4x8xf32, #tpu.memory_space<vmem>>, %arg8: memref<1x512x8xf32, #tpu.memory_space<vmem>>) attributes {dimension_semantics = [#tpu.dimension_semantics<parallel>, #tpu.dimension_semantics<parallel>], iteration_bounds = array<i64: 2, 2>, scalar_prefetch = 0 : i64, scratch_operands = 0 : i64, tpu.core_type = #tpu.core_type<tc>, window_params = [{transform_indices = @transform_0, window_bounds = array<i64: 1, 512, 8>}, {transform_indices = @transform_1, window_bounds = array<i64: 1, 512, 8>}, {transform_indices = @transform_2, window_bounds = array<i64: 1, 1, 8>}, {pipeline_mode = #tpu.pipeline_mode<synchronous>, transform_indices = @transform_3, window_bounds = array<i64: 8, 8>}, {pipeline_mode = #tpu.pipeline_mode<synchronous>, transform_indices = @transform_4, window_bounds = array<i64: 8, 8>}, {pipeline_mode = #tpu.pipeline_mode<synchronous>, transform_indices = @transform_5, window_bounds = array<i64: 4, 8>}, {transform_indices = @transform_6, window_bounds = array<i64: 1, 512, 8>}]} {
    %c0 = arith.constant 0 : index
    %c0_0 = arith.constant 0 : index
    %c0_1 = arith.constant 0 : index
    %0 = vector.load %arg2[%c0, %c0_0, %c0_1] : memref<1x512x8xf32, #tpu.memory_space<vmem>>, vector<1x512x8xf32>
    %1 = vector.shape_cast %0 : vector<1x512x8xf32> to vector<512x8xf32>
    %c0_2 = arith.constant 0 : index
    %c0_3 = arith.constant 0 : index
    %c0_4 = arith.constant 0 : index
    %2 = vector.load %arg3[%c0_2, %c0_3, %c0_4] : memref<1x512x8xf32, #tpu.memory_space<vmem>>, vector<1x512x8xf32>
    %3 = vector.shape_cast %2 : vector<1x512x8xf32> to vector<512x8xf32>
    %c0_5 = arith.constant 0 : index
    %c0_6 = arith.constant 0 : index
    %c0_7 = arith.constant 0 : index
    %4 = vector.load %arg4[%c0_5, %c0_6, %c0_7] : memref<1x1x8xf32, #tpu.memory_space<vmem>>, vector<1x1x8xf32>
    %5 = vector.shape_cast %4 : vector<1x1x8xf32> to vector<1x8xf32>
    %c0_8 = arith.constant 0 : index
    %c0_9 = arith.constant 0 : index
    %6 = vector.load %arg7[%c0_8, %c0_9] : memref<4x8xf32, #tpu.memory_space<vmem>>, vector<1x8xf32>
    %c1 = arith.constant 1 : index
    %c0_10 = arith.constant 0 : index
    %7 = vector.load %arg7[%c1, %c0_10] : memref<4x8xf32, #tpu.memory_space<vmem>>, vector<1x8xf32>
    %c2 = arith.constant 2 : index
    %c0_11 = arith.constant 0 : index
    %8 = vector.load %arg7[%c2, %c0_11] : memref<4x8xf32, #tpu.memory_space<vmem>>, vector<1x8xf32>
    %c3 = arith.constant 3 : index
    %c0_12 = arith.constant 0 : index
    %9 = vector.load %arg7[%c3, %c0_12] : memref<4x8xf32, #tpu.memory_space<vmem>>, vector<1x1xf32>
    %10 = vector.broadcast %5 : vector<1x8xf32> to vector<512x8xf32>
    %11 = arith.mulf %3, %10 : vector<512x8xf32>
    %12 = arith.truncf %1 : vector<512x8xf32> to vector<512x8xbf16>
    %c0_13 = arith.constant 0 : index
    %c0_14 = arith.constant 0 : index
    %13 = vector.load %arg5[%c0_13, %c0_14] : memref<8x8xbf16, #tpu.memory_space<vmem>>, vector<8x8xbf16>
    %cst = arith.constant dense<0.000000e+00> : vector<512x8xf32>
    %14 = tpu.matmul %12, %13, %cst {dimension_numbers = #tpu.dot_dimension_numbers<[1], [0], [0], [1], [0, 0, 1, 1], [], []>} : vector<512x8xbf16>, vector<8x8xbf16>, vector<512x8xf32> -> vector<512x8xf32>
    %15 = vector.broadcast %6 : vector<1x8xf32> to vector<512x8xf32>
    %16 = arith.addf %14, %15 : vector<512x8xf32>
    %17 = arith.truncf %11 : vector<512x8xf32> to vector<512x8xbf16>
    %c0_15 = arith.constant 0 : index
    %c0_16 = arith.constant 0 : index
    %18 = vector.load %arg6[%c0_15, %c0_16] : memref<8x8xbf16, #tpu.memory_space<vmem>>, vector<8x8xbf16>
    %cst_17 = arith.constant dense<0.000000e+00> : vector<512x8xf32>
    %19 = tpu.matmul %17, %18, %cst_17 {dimension_numbers = #tpu.dot_dimension_numbers<[1], [0], [0], [1], [0, 0, 1, 1], [], []>} : vector<512x8xbf16>, vector<8x8xbf16>, vector<512x8xf32> -> vector<512x8xf32>
    %20 = vector.broadcast %7 : vector<1x8xf32> to vector<512x8xf32>
    %21 = arith.addf %19, %20 : vector<512x8xf32>
    %22 = arith.addf %16, %21 : vector<512x8xf32>
    %cst_18 = arith.constant 0.000000e+00 : f32
    %23 = vector.broadcast %cst_18 : f32 to vector<512x8xf32>
    %24 = arith.maximumf %22, %23 : vector<512x8xf32>
    %25 = vector.broadcast %8 : vector<1x8xf32> to vector<512x8xf32>
    %26 = arith.mulf %24, %25 : vector<512x8xf32>
    %cst_19 = arith.constant dense<0.000000e+00> : vector<512xf32>
    %27 = vector.multi_reduction <add>, %26, %cst_19 [1] : vector<512x8xf32> to vector<512xf32>
    %28 = vector.shape_cast %27 : vector<512xf32> to vector<512x1xf32>
    %29 = vector.broadcast %9 : vector<1x1xf32> to vector<512x1xf32>
    %30 = arith.addf %28, %29 : vector<512x1xf32>
    %cst_20 = arith.constant 0.000000e+00 : f32
    %31 = vector.broadcast %cst_20 : f32 to vector<512x1xf32>
    %32 = arith.subf %31, %30 : vector<512x1xf32>
    %33 = math.exp %32 : vector<512x1xf32>
    %cst_21 = arith.constant 1.000000e+00 : f32
    %34 = vector.broadcast %cst_21 : f32 to vector<512x1xf32>
    %35 = arith.addf %34, %33 : vector<512x1xf32>
    %cst_22 = arith.constant 1.000000e+00 : f32
    %36 = vector.broadcast %cst_22 : f32 to vector<512x1xf32>
    %37 = arith.divf %36, %35 : vector<512x1xf32>
    %38 = vector.broadcast %37 : vector<512x1xf32> to vector<512x8xf32>
    %39 = arith.mulf %3, %38 : vector<512x8xf32>
    %40 = vector.shape_cast %39 : vector<512x8xf32> to vector<1x512x8xf32>
    %c0_23 = arith.constant 0 : index
    %c0_24 = arith.constant 0 : index
    %c0_25 = arith.constant 0 : index
    %41 = vector.load %arg8[%c0_23, %c0_24, %c0_25] : memref<1x512x8xf32, #tpu.memory_space<vmem>>, vector<1x512x8xf32>
    tpu.vector_store %arg8[%c0_23, %c0_24, %c0_25], %40 {strides = array<i32>} : memref<1x512x8xf32, #tpu.memory_space<vmem>>, vector<1x512x8xf32>,
    return
  }
  func.func @transform_0(%arg0: i32, %arg1: i32) -> (i32, i32, i32) {
    %c0_i32 = arith.constant 0 : i32
    %c0_i32_0 = arith.constant 0 : i32
    return %arg0, %arg1, %c0_i32 : i32, i32, i32
  }
  func.func @transform_1(%arg0: i32, %arg1: i32) -> (i32, i32, i32) {
    %c0_i32 = arith.constant 0 : i32
    %c0_i32_0 = arith.constant 0 : i32
    return %arg0, %arg1, %c0_i32 : i32, i32, i32
  }
  func.func @transform_2(%arg0: i32, %arg1: i32) -> (i32, i32, i32) {
    %c0_i32 = arith.constant 0 : i32
    %c0_i32_0 = arith.constant 0 : i32
    %c0_i32_1 = arith.constant 0 : i32
    return %arg0, %c0_i32, %c0_i32_0 : i32, i32, i32
  }
  func.func @transform_3(%arg0: i32, %arg1: i32) -> (i32, i32) {
    %c0_i32 = arith.constant 0 : i32
    %c0_i32_0 = arith.constant 0 : i32
    %c0_i32_1 = arith.constant 0 : i32
    return %c0_i32, %c0_i32_0 : i32, i32
  }
  func.func @transform_4(%arg0: i32, %arg1: i32) -> (i32, i32) {
    %c0_i32 = arith.constant 0 : i32
    %c0_i32_0 = arith.constant 0 : i32
    %c0_i32_1 = arith.constant 0 : i32
    return %c0_i32, %c0_i32_0 : i32, i32
  }
  func.func @transform_5(%arg0: i32, %arg1: i32) -> (i32, i32) {
    %c0_i32 = arith.constant 0 : i32
    %c0_i32_0 = arith.constant 0 : i32
    %c0_i32_1 = arith.constant 0 : i32
    return %c0_i32, %c0_i32_0 : i32, i32
  }
  func.func @transform_6(%arg0: i32, %arg1: i32) -> (i32, i32, i32) {
    %c0_i32 = arith.constant 0 : i32
    %c0_i32_0 = arith.constant 0 : i32
    return %arg0, %arg1, %c0_i32 : i32, i32, i32
  }
}

</mosaic_0001>

<llo_original>
// kernel: augmented_attention_forward.4
$region0: #{augmented_attention_forward.4}
  #allocation0 [shape = 'u32[]', space=smem, size = 0x4, offset = 0x4, fixed_abs, tag = 'smem constant byte address 0x4 - core index']
  #allocation1 [shape = 'u32[72,128]{1,0:T(1,128)}', space=vmem, size = 0x9000, scoped, tag = 'internal scratch']
  %s0 = inlined_call_operand.vmem [shape: f32[8,8], index: 0, kind: input, shape index: {}]
  %s1 = inlined_call_operand.vmem [shape: f32[8,8], index: 1, kind: input, shape index: {}]
  %s2 = inlined_call_operand.vmem [shape: f32[8,8], index: 2, kind: input, shape index: {}]
  %s3 = inlined_call_operand.vmem [shape: f32[8,8], index: 3, kind: input, shape index: {}]
  %s4 = inlined_call_operand.vmem [shape: f32[8,8], index: 4, kind: input, shape index: {}]
  %s5 = inlined_call_operand.vmem [shape: f32[3,8], index: 5, kind: input, shape index: {}]
  %s6 = inlined_call_operand.vmem [shape: f32[8,8], index: 6, kind: input, shape index: {}]
  %s7 = inlined_call_operand.vmem [shape: f32[2,8], index: 7, kind: input, shape index: {}]
  %s8 = inlined_call_operand.vmem [shape: f32[2,8], index: 8, kind: output, shape index: {}]
  %s9 = sld [smem:[#allocation0]]
  $region42: #{augmented_attention_forward.4} parent=0
    _
  %s11 = ssub.s32 1, %s9
  %s12 = scalar_select 0, %s11, %s9
  // Predicated region
  $region2: #{augmented_attention_forward.4} parent=0 // pred_check
    _
  $region3: #{augmented_attention_forward.4} parent=0 // pred_check_branch
    %14 = sbr.rel (0) target = $region5
  $region4: #{augmented_attention_forward.4} parent=0 // pred_region
    _
  $region5: #{augmented_attention_forward.4} parent=0 // pred_fallthru
    _
  // Predicated region
  $region6: #{augmented_attention_forward.4} parent=0 // pred_check
    _
  $region7: #{augmented_attention_forward.4} parent=0 // pred_check_branch
    %16 = sbr.rel (0) target = $region9
  $region8: #{augmented_attention_forward.4} parent=0 // pred_region
    _
  $region9: #{augmented_attention_forward.4} parent=0 // pred_fallthru
    _
  // Predicated region
  $region10: #{augmented_attention_forward.4} parent=0 // pred_check
    _
  $region11: #{augmented_attention_forward.4} parent=0 // pred_check_branch
    %18 = sbr.rel (0) target = $region13
  $region12: #{augmented_attention_forward.4} parent=0 // pred_region
    _
  $region13: #{augmented_attention_forward.4} parent=0 // pred_fallthru
    _
  // Predicated region
  $region14: #{augmented_attention_forward.4} parent=0 // pred_check
    _
  $region15: #{augmented_attention_forward.4} parent=0 // pred_check_branch
    %20 = sbr.rel (0) target = $region17
  $region16: #{augmented_attention_forward.4} parent=0 // pred_region
    _
  $region17: #{augmented_attention_forward.4} parent=0 // pred_fallthru
    _
  // Predicated region
  $region18: #{augmented_attention_forward.4} parent=0 // pred_check
    _
  $region19: #{augmented_attention_forward.4} parent=0 // pred_check_branch
    %22 = sbr.rel (0) target = $region21
  $region20: #{augmented_attention_forward.4} parent=0 // pred_region
    _
  $region21: #{augmented_attention_forward.4} parent=0 // pred_fallthru
    _
  // Predicated region
  $region22: #{augmented_attention_forward.4} parent=0 // pred_check
    _
  $region23: #{augmented_attention_forward.4} parent=0 // pred_check_branch
    %24 = sbr.rel (0) target = $region25
  $region24: #{augmented_attention_forward.4} parent=0 // pred_region
    _
  $region25: #{augmented_attention_forward.4} parent=0 // pred_fallthru
    _
  // Predicated region
  $region26: #{augmented_attention_forward.4} parent=0 // pred_check
    _
  $region27: #{augmented_attention_forward.4} parent=0 // pred_check_branch
    %26 = sbr.rel (0) target = $region29
  $region28: #{augmented_attention_forward.4} parent=0 // pred_region
    _
  $region29: #{augmented_attention_forward.4} parent=0 // pred_fallthru
    _
  // Predicated region
  $region30: #{augmented_attention_forward.4} parent=0 // pred_check
    _
  $region31: #{augmented_attention_forward.4} parent=0 // pred_check_branch
    %28 = sbr.rel (0) target = $region33
  $region32: #{augmented_attention_forward.4} parent=0 // pred_region
    _
  $region33: #{augmented_attention_forward.4} parent=0 // pred_fallthru
    _
  %v29 = vld [vmem:[%s0] sm:$0xff]
  %v30 = vld [vmem:[%s1] sm:$0xff]
  %v31 = vld [vmem:[%s5] sm:$0x1]
  %v32 = vld [vmem:[%s5 + $0x1] sm:$0x1]
  %v33 = vld [vmem:[%s5 + $0x2] sm:$0x1]
  %v34 = vld [vmem:[%s2] sm:$0xff]
  %v35 = vperm.slane %v31, 0
  %vm36 = vcmask 64512
  %v38 = vsel %vm36, %v29, 0
  %40 = vmatpush.msra.mxu0 0.0
  %41 = vmatpush.msra.mxu0 0.0
  %42 = vmatpush.msra.mxu0 0.0
  %43 = vmatpush.msra.mxu0 0.0
  %44 = vmatpush.msra.mxu0 0.0
  %45 = vmatpush.msra.mxu0 0.0
  %46 = vmatpush.msra.mxu0 0.0
  %47 = vmatpush.msra.mxu0 0.0
  %48 = vmatpush.msra.mxu0 0.0
  %49 = vmatpush.msra.mxu0 0.0
  %50 = vmatpush.msra.mxu0 0.0
  %51 = vmatpush.msra.mxu0 0.0
  %52 = vmatpush.msra.mxu0 0.0
  %53 = vmatpush.msra.mxu0 0.0
  %54 = vmatpush.msra.mxu0 0.0
  %55 = vmatpush.msra.mxu0 %v34
  %56 = vmatmul.f32.gmra.mxu0 %v38
  %v57 = vpop.f32.mrf.mxu0
  %v58 = vadd.f32 %v35, %v57
  %59 = vdwg.mxu0
  %v60 = vld [vmem:[%s3] sm:$0xff]
  %v61 = vperm.slane %v32, 0
  %v63 = vsel %vm36, %v30, 0
  %65 = vmatpush.msra.mxu0 0.0
  %66 = vmatpush.msra.mxu0 0.0
  %67 = vmatpush.msra.mxu0 0.0
  %68 = vmatpush.msra.mxu0 0.0
  %69 = vmatpush.msra.mxu0 0.0
  %70 = vmatpush.msra.mxu0 0.0
  %71 = vmatpush.msra.mxu0 0.0
  %72 = vmatpush.msra.mxu0 0.0
  %73 = vmatpush.msra.mxu0 0.0
  %74 = vmatpush.msra.mxu0 0.0
  %75 = vmatpush.msra.mxu0 0.0
  %76 = vmatpush.msra.mxu0 0.0
  %77 = vmatpush.msra.mxu0 0.0
  %78 = vmatpush.msra.mxu0 0.0
  %79 = vmatpush.msra.mxu0 0.0
  %80 = vmatpush.msra.mxu0 %v60
  %81 = vmatmul.f32.gmra.mxu0 %v63
  %v82 = vpop.f32.mrf.mxu0
  %v83 = vadd.f32 %v61, %v82
  %84 = vdwg.mxu0
  %v85 = vadd.f32 %v29, %v30
  %v87 = vsel %vm36, %v85, 0
  %89 = vmatpush.msra.mxu0 0.0
  %90 = vmatpush.msra.mxu0 0.0
  %91 = vmatpush.msra.mxu0 0.0
  %92 = vmatpush.msra.mxu0 0.0
  %93 = vmatpush.msra.mxu0 0.0
  %94 = vmatpush.msra.mxu0 0.0
  %95 = vmatpush.msra.mxu0 0.0
  %96 = vmatpush.msra.mxu0 0.0
  %97 = vmatpush.msra.mxu0 0.0
  %98 = vmatpush.msra.mxu0 0.0
  %99 = vmatpush.msra.mxu0 0.0
  %100 = vmatpush.msra.mxu0 0.0
  %101 = vmatpush.msra.mxu0 0.0
  %102 = vmatpush.msra.mxu0 0.0
  %103 = vmatpush.msra.mxu0 0.0
  %104 = vmatpush.msra.mxu0 %v60
  %105 = vmatmul.f32.gmra.mxu0 %v87
  %v106 = vpop.f32.mrf.mxu0
  %v107 = vadd.f32 %v61, %v106
  %108 = vdwg.mxu0
  %v109 = vld [vmem:[%s6] sm:$0xff]
  %v111 = vsel %vm36, %v109, 0
  %113 = vmatpush.msra.mxu0 0.0
  %114 = vmatpush.msra.mxu0 0.0
  %115 = vmatpush.msra.mxu0 0.0
  %116 = vmatpush.msra.mxu0 0.0
  %117 = vmatpush.msra.mxu0 0.0
  %118 = vmatpush.msra.mxu0 0.0
  %119 = vmatpush.msra.mxu0 0.0
  %120 = vmatpush.msra.mxu0 0.0
  %121 = vmatpush.msra.mxu0 0.0
  %122 = vmatpush.msra.mxu0 0.0
  %123 = vmatpush.msra.mxu0 0.0
  %124 = vmatpush.msra.mxu0 0.0
  %125 = vmatpush.msra.mxu0 0.0
  %126 = vmatpush.msra.mxu0 0.0
  %127 = vmatpush.msra.mxu0 0.0
  %128 = vmatpush.msra.mxu0 %v107
  %129 = vmatmul.f32.gmra.mxu0 %v111
  %v130 = vpop.f32.mrf.mxu0
  %v131 = vadd.f32 0.0, %v130
  %132 = vdwg.mxu0
  %v133 = vmul.f32 %v83, %v131
  %v134 = vadd.f32 %v133, %v58
  %v135 = vmax.f32 %v134, 0.0
  %v136 = vld [vmem:[%s4] sm:$0xff]
  %v137 = vperm.slane %v33, 0
  %v139 = vsel %vm36, %v135, 0
  %141 = vmatpush.msra.mxu0 0.0
  %142 = vmatpush.msra.mxu0 0.0
  %143 = vmatpush.msra.mxu0 0.0
  %144 = vmatpush.msra.mxu0 0.0
  %145 = vmatpush.msra.mxu0 0.0
  %146 = vmatpush.msra.mxu0 0.0
  %147 = vmatpush.msra.mxu0 0.0
  %148 = vmatpush.msra.mxu0 0.0
  %149 = vmatpush.msra.mxu0 0.0
  %150 = vmatpush.msra.mxu0 0.0
  %151 = vmatpush.msra.mxu0 0.0
  %152 = vmatpush.msra.mxu0 0.0
  %153 = vmatpush.msra.mxu0 0.0
  %154 = vmatpush.msra.mxu0 0.0
  %155 = vmatpush.msra.mxu0 0.0
  %156 = vmatpush.msra.mxu0 %v136
  %157 = vmatmul.f32.gmra.mxu0 %v139
  %v158 = vpop.f32.mrf.mxu0
  %v159 = vadd.f32 %v137, %v158
  %160 = vdwg.mxu0
  %v161 = vsel %vm36, %v159, -inf
  %162 = vmax.xlane.f32.xlu0 %v161
  %v163 = vpop.xlane.xlu0 %162
  %v164 = vsub.f32 %v159, %v163
  %v165 = vmul.f32 %v164, 1.442695
  %v166 = vpow.pop %v165
  %v167 = vsel %vm36, %v166, 0.0
  %168 = vadd.xlane.f32.xlu0 %v167
  %v169 = vpop.xlane.xlu0 %168
  %v170 = vrcp.pop %v169
  %v171 = vmul.f32 %v169, %v170
  %v172 = vsub.f32 1.0, %v171
  %v173 = vmul.f32 %v170, %v172
  %v174 = vadd.f32 %v170, %v173
  %vm175 = vweird.f32 %v169
  %vm176 = vweird.f32 %v170
  %vm177 = vmor %vm175, %vm176
  %v178 = vsel %vm177, %v170, %v174
  %v179 = vand.u32 2147483647, %v169
  %vm180 = vcmp.eq.f32.partialorder %v179, 8.507059e+37
  %v181 = vand.u32 %v169, 2147483648
  %v182 = vor.u32 1.1754944e-38, %v181
  %v183 = vsel %vm180, %v182, %v178
  %v184 = vmul.f32 %v166, %v183
  %v185 = vld [vmem:[%s7] sm:$0x3]
  %v187 = vsel %vm36, %v185, 0
  %189 = vmatpush.msra.mxu0 0.0
  %190 = vmatpush.msra.mxu0 0.0
  %191 = vmatpush.msra.mxu0 0.0
  %192 = vmatpush.msra.mxu0 0.0
  %193 = vmatpush.msra.mxu0 0.0
  %194 = vmatpush.msra.mxu0 0.0
  %195 = vmatpush.msra.mxu0 0.0
  %196 = vmatpush.msra.mxu0 0.0
  %197 = vmatpush.msra.mxu0 0.0
  %198 = vmatpush.msra.mxu0 0.0
  %199 = vmatpush.msra.mxu0 0.0
  %200 = vmatpush.msra.mxu0 0.0
  %201 = vmatpush.msra.mxu0 0.0
  %202 = vmatpush.msra.mxu0 0.0
  %203 = vmatpush.msra.mxu0 0.0
  %204 = vmatpush.msra.mxu0 %v184
  %205 = vmatmul.f32.gmra.mxu0 %v187
  %v206 = vpop.f32.mrf.mxu0
  %v207 = vadd.f32 0.0, %v206
  %208 = vdwg.mxu0
  %vm209 = vcmask 58368
  %210 = vst.msk [vmem:[%s8] sm:$0x3] %vm209, %v207
  // Predicated region
  $region34: #{augmented_attention_forward.4} parent=0 // pred_check
    _
  $region35: #{augmented_attention_forward.4} parent=0 // pred_check_branch
    %212 = sbr.rel (0) target = $region37
  $region36: #{augmented_attention_forward.4} parent=0 // pred_region
    _
  $region37: #{augmented_attention_forward.4} parent=0 // pred_fallthru
    _
  // Predicated region
  $region38: #{augmented_attention_forward.4} parent=0 // pred_check
    _
  $region39: #{augmented_attention_forward.4} parent=0 // pred_check_branch
    %214 = sbr.rel (0) target = $region41
  $region40: #{augmented_attention_forward.4} parent=0 // pred_region
    _
  $region41: #{augmented_attention_forward.4} parent=0 // pred_fallthru
    _

// kernel: augmented_attention_forward.3
$region0: #{augmented_attention_forward.3}
  #allocation0 [shape = 'u32[]', space=smem, size = 0x4, offset = 0x4, fixed_abs, tag = 'smem constant byte address 0x4 - core index']
  #allocation1 [shape = 'u32[72,128]{1,0:T(1,128)}', space=vmem, size = 0x9000, scoped, tag = 'internal scratch']
  %s0 = inlined_call_operand.vmem [shape: f32[2,32,32,8], index: 0, kind: input, shape index: {}]
  %s1 = inlined_call_operand.vmem [shape: f32[2,32,32,8], index: 1, kind: input, shape index: {}]
  %s2 = inlined_call_operand.vmem [shape: f32[2,2,2,1,8], index: 2, kind: output, shape index: {0}]
  %s3 = inlined_call_operand.vmem [shape: f32[2,2,2,1,8], index: 3, kind: output, shape index: {1}]
  %4 = xla_tuple %s2, %s3
  %s5 = sld [smem:[#allocation0]]
  $region133: #{augmented_attention_forward.3} parent=0
    _
  %s7 = ssub.s32 1, %s5
  %s8 = scalar_select 0, %s7, %s5
  $region1: #{augmented_attention_forward.3} parent=0
    #allocation2 [shape = 'u8[262144]{0}', space=vmem, size = 0x40000, scoped, tag = 'input window, operand 0']
    #allocation3 [shape = 'u8[262144]{0}', space=vmem, size = 0x40000, scoped, tag = 'input window, operand 1']
    loop: start=0, step=1, limit=10
    $region2: #{augmented_attention_forward.3} parent=1 // loop_pre_header
      _
    $region3: #{augmented_attention_forward.3} parent=1 // loop_header
      %s10 = sphi 0, %s14
      %p11 = scmp.ge.s32.totalorder %s10, 10
      %s17 = sphi 0, %s43
      %s18 = sphi 0, %s39
      %s19 = sphi 0, %s35
      %s20 = sphi 0, %s31
      %s21 = sphi 0, %s17
      %s22 = sphi 0, %s18
      %s23 = sphi 0, %s19
      %s24 = sphi 0, %s20
      %s25 = sphi 0, %s21
      %s26 = sphi 0, %s22
      %s27 = sphi 0, %s23
      %s28 = sphi 0, %s24
      %s52 = sphi 0, %s54
      %s55 = sphi 0, %s52
      %s56 = sphi 0, %s55
      %s72 = sphi 0, %s56
      %s84 = sphi 0, %s86
      %s87 = sphi 0, %s84
      %s88 = sphi 0, %s87
      %s104 = sphi 0, %s88
      %s114 = sphi 0, %s116
      %s117 = sphi 0, %s114
      %s118 = sphi 0, %s117
      %s134 = sphi 0, %s118
      %s144 = sphi 0, %s146
      %s147 = sphi 0, %s144
      %s148 = sphi 0, %s147
      %s164 = sphi 0, %s148
    $region4: #{augmented_attention_forward.3} parent=1 // loop_header_branch
      %13 = sbr.rel (%p11) target = $region8
    $region5: #{augmented_attention_forward.3} parent=1 // loop_body
      %s15 = ssub.s32 %s10, 1
      %s16 = ssub.s32 %s10, 2
      %s29 = sadd.s32 1, %s20
      %p30 = scmp.ge.s32.totalorder %s29, 1
      %s31 = scalar_select %p30, 0, %s29
      %s32 = sadd.s32 1, %s19
      %s33 = scalar_select %p30, %s32, %s19
      %p34 = scmp.ge.s32.totalorder %s33, 2
      %s35 = scalar_select %p34, 0, %s33
      %s36 = sadd.s32 1, %s18
      %s37 = scalar_select %p34, %s36, %s18
      %p38 = scmp.ge.s32.totalorder %s37, 2
      %s39 = scalar_select %p38, 0, %s37
      %s40 = sadd.s32 1, %s17
      %s41 = scalar_select %p38, %s40, %s17
      %p42 = scmp.ge.s32.totalorder %s41, 2
      %s43 = scalar_select %p42, 0, %s41
      %s44 = sadd.s32 %s18, %s20
      %s45 = sadd.s32 %s39, %s31
      %s46 = ssub.s32 %s17, %s43
      %s47 = ssub.s32 %s44, %s45
      %s48 = sor.u32 %s46, %s47
      %s49 = ssub.s32 %s19, %s35
      %s50 = sor.u32 %s48, %s49
      %p51 = scmp.eq.s32.totalorder %s50, 0
      %s53 = sadd.s32 %s52, 1
      %s54 = scalar_select %p51, %s52, %s53
      %p57 = pneg %p51
      %p58 = scmp.eq.s32.totalorder %s10, 7
      %p59 = por %p57, %p58
      %p60 = scmp.ne.s32.totalorder %s52, %s55
      %p61 = scmp.eq.s32.totalorder %s10, 0
      %p62 = por %p60, %p61
      %p63 = scmp.ne.s32.totalorder %s52, %s55
      %p64 = scmp.eq.s32.totalorder %s15, 7
      %p65 = por %p63, %p64
      %p66 = scmp.ne.s32.totalorder %s55, %s56
      %p67 = scmp.eq.s32.totalorder %s15, 0
      %p68 = por %p66, %p67
      %p69 = scmp.ne.s32.totalorder %s55, %s56
      %p70 = scmp.eq.s32.totalorder %s16, 7
      %p71 = por %p69, %p70
      %p73 = scmp.ne.s32.totalorder %s56, %s72
      %p74 = scmp.eq.s32.totalorder %s16, 0
      %p75 = por %p73, %p74
      %s76 = sadd.s32 %s18, %s20
      %s77 = sadd.s32 %s39, %s31
      %s78 = ssub.s32 %s17, %s43
      %s79 = ssub.s32 %s76, %s77
      %s80 = sor.u32 %s78, %s79
      %s81 = ssub.s32 %s19, %s35
      %s82 = sor.u32 %s80, %s81
      %p83 = scmp.eq.s32.totalorder %s82, 0
      %s85 = sadd.s32 %s84, 1
      %s86 = scalar_select %p83, %s84, %s85
      %p89 = pneg %p83
      %p90 = scmp.eq.s32.totalorder %s10, 7
      %p91 = por %p89, %p90
      %p92 = scmp.ne.s32.totalorder %s84, %s87
      %p93 = scmp.eq.s32.totalorder %s10, 0
      %p94 = por %p92, %p93
      %p95 = scmp.ne.s32.totalorder %s84, %s87
      %p96 = scmp.eq.s32.totalorder %s15, 7
      %p97 = por %p95, %p96
      %p98 = scmp.ne.s32.totalorder %s87, %s88
      %p99 = scmp.eq.s32.totalorder %s15, 0
      %p100 = por %p98, %p99
      %p101 = scmp.ne.s32.totalorder %s87, %s88
      %p102 = scmp.eq.s32.totalorder %s16, 7
      %p103 = por %p101, %p102
      %p105 = scmp.ne.s32.totalorder %s88, %s104
      %p106 = scmp.eq.s32.totalorder %s16, 0
      %p107 = por %p105, %p106
      %s108 = ssub.s32 %s17, %s43
      %s109 = ssub.s32 %s18, %s39
      %s110 = sor.u32 %s108, %s109
      %s111 = ssub.s32 %s19, %s35
      %s112 = sor.u32 %s110, %s111
      %p113 = scmp.eq.s32.totalorder %s112, 0
      %s115 = sadd.s32 %s114, 1
      %s116 = scalar_select %p113, %s114, %s115
      %p119 = pneg %p113
      %p120 = scmp.eq.s32.totalorder %s10, 7
      %p121 = por %p119, %p120
      %p122 = scmp.ne.s32.totalorder %s114, %s117
      %p123 = scmp.eq.s32.totalorder %s10, 0
      %p124 = por %p122, %p123
      %p125 = scmp.ne.s32.totalorder %s114, %s117
      %p126 = scmp.eq.s32.totalorder %s15, 7
      %p127 = por %p125, %p126
      %p128 = scmp.ne.s32.totalorder %s117, %s118
      %p129 = scmp.eq.s32.totalorder %s15, 0
      %p130 = por %p128, %p129
      %p131 = scmp.ne.s32.totalorder %s117, %s118
      %p132 = scmp.eq.s32.totalorder %s16, 7
      %p133 = por %p131, %p132
      %p135 = scmp.ne.s32.totalorder %s118, %s134
      %p136 = scmp.eq.s32.totalorder %s16, 0
      %p137 = por %p135, %p136
      %s138 = ssub.s32 %s17, %s43
      %s139 = ssub.s32 %s18, %s39
      %s140 = sor.u32 %s138, %s139
      %s141 = ssub.s32 %s19, %s35
      %s142 = sor.u32 %s140, %s141
      %p143 = scmp.eq.s32.totalorder %s142, 0
      %s145 = sadd.s32 %s144, 1
      %s146 = scalar_select %p143, %s144, %s145
      %p149 = pneg %p143
      %p150 = scmp.eq.s32.totalorder %s10, 7
      %p151 = por %p149, %p150
      %p152 = scmp.ne.s32.totalorder %s144, %s147
      %p153 = scmp.eq.s32.totalorder %s10, 0
      %p154 = por %p152, %p153
      %p155 = scmp.ne.s32.totalorder %s144, %s147
      %p156 = scmp.eq.s32.totalorder %s15, 7
      %p157 = por %p155, %p156
      %p158 = scmp.ne.s32.totalorder %s147, %s148
      %p159 = scmp.eq.s32.totalorder %s15, 0
      %p160 = por %p158, %p159
      %p161 = scmp.ne.s32.totalorder %s147, %s148
      %p162 = scmp.eq.s32.totalorder %s16, 7
      %p163 = por %p161, %p162
      %p165 = scmp.ne.s32.totalorder %s148, %s164
      %p166 = scmp.eq.s32.totalorder %s16, 0
      %p167 = por %p165, %p166
      %p168 = scmp.le.s32.totalorder 1, %s10
      %p169 = scmp.lt.s32.totalorder %s10, 9
      %p170 = pnand %p168, %p169
      %p171 = pneg %p170
      // Predicated region
      $region9: #{augmented_attention_forward.3} parent=5 // pred_check
        _
      $region10: #{augmented_attention_forward.3} parent=5 // pred_check_branch
        %173 = sbr.rel (%p170) target = $region12
      $region11: #{augmented_attention_forward.3} parent=5 // pred_region
        %s174 = ssub.s32 %s10, 1
      $region12: #{augmented_attention_forward.3} parent=5 // pred_fallthru
        _
      %p175 = scmp.lt.s32.totalorder %s10, 8
      // Predicated region
      $region13: #{augmented_attention_forward.3} parent=5 // pred_check
        %p176 = pneg %p175
      $region14: #{augmented_attention_forward.3} parent=5 // pred_check_branch
        %178 = sbr.rel (%p176) target = $region16
      $region15: #{augmented_attention_forward.3} parent=5 // pred_region
        // Predicated region
        $region17: #{augmented_attention_forward.3} parent=15 // pred_check
          %p179 = pneg %p62
        $region18: #{augmented_attention_forward.3} parent=15 // pred_check_branch
          %181 = sbr.rel (%p179) target = $region20
        $region19: #{augmented_attention_forward.3} parent=15 // pred_region
          %s182 = sand.u32 %s52, 1
          %s183 = sand.u32 %s52, 1
          %s184 = smul.addr %s183, 256
          %s185 = scalar_lea.vmem [#allocation2], %s184
          %s186 = sadd.s32 %s18, %s20
          %s187 = smul.u32 16, %s186
          %s188 = smul.u32 2, %s19
          %s189 = smul.addr %s187, 4
          %s190 = sadd.s32 %s188, %s189
          %s191 = smul.addr %s17, 128
          %s192 = sadd.s32 %s190, %s191
          %s193 = smul.addr %s192, 8
          %s194 = scalar_lea.vmem %s0, %s193
          // Predicated region
          $region21: #{augmented_attention_forward.3} parent=19 // pred_check
            _
          $region22: #{augmented_attention_forward.3} parent=19 // pred_check_branch
            %196 = sbr.rel (0) target = $region24
          $region23: #{augmented_attention_forward.3} parent=19 // pred_region
            // Predicated region
            $region25: #{augmented_attention_forward.3} parent=23 // pred_check
              _
            $region26: #{augmented_attention_forward.3} parent=23 // pred_check_branch
              %198 = sbr.rel (0) target = $region28
            $region27: #{augmented_attention_forward.3} parent=23 // pred_region
              // Predicated region
              $region40: #{augmented_attention_forward.3} parent=27 // pred_check
                _
              $region41: #{augmented_attention_forward.3} parent=27 // pred_check_branch
                %276 = sbr.rel (0) target = $region43
              $region42: #{augmented_attention_forward.3} parent=27 // pred_region
                loop: start=0, step=1, limit=1
                $region44: #{augmented_attention_forward.3} parent=42 // loop_pre_header
                  _
                $region45: #{augmented_attention_forward.3} parent=42 // loop_header
                  %s278 = sphi 0, %s282
                  %p279 = scmp.ge.s32.totalorder %s278, 1
                  %s283 = sphi %s194, %s194
                  %s284 = sphi %s185, %s185
                $region46: #{augmented_attention_forward.3} parent=42 // loop_header_branch
                  %281 = sbr.rel (%p279) target = $region50
                $region47: #{augmented_attention_forward.3} parent=42 // loop_body
                  %v285 = vld [vmem:[%s283] sm:$0xff]
                  %286 = vst [vmem:[%s284] sm:$0xff] %v285
                  %v287 = vld [vmem:[%s283 + $0x8] sm:$0xff]
                  %288 = vst [vmem:[%s284 + $0x8] sm:$0xff] %v287
                  %v289 = vld [vmem:[%s283 + $0x20] sm:$0xff]
                  %290 = vst [vmem:[%s284 + $0x10] sm:$0xff] %v289
                  %v291 = vld [vmem:[%s283 + $0x28] sm:$0xff]
                  %292 = vst [vmem:[%s284 + $0x18] sm:$0xff] %v291
                  %v293 = vld [vmem:[%s283 + $0x40] sm:$0xff]
                  %294 = vst [vmem:[%s284 + $0x20] sm:$0xff] %v293
                  %v295 = vld [vmem:[%s283 + $0x48] sm:$0xff]
                  %296 = vst [vmem:[%s284 + $0x28] sm:$0xff] %v295
                  %v297 = vld [vmem:[%s283 + $0x60] sm:$0xff]
                  %298 = vst [vmem:[%s284 + $0x30] sm:$0xff] %v297
                  %v299 = vld [vmem:[%s283 + $0x68] sm:$0xff]
                  %300 = vst [vmem:[%s284 + $0x38] sm:$0xff] %v299
                  %v301 = vld [vmem:[%s283 + $0x80] sm:$0xff]
                  %302 = vst [vmem:[%s284 + $0x40] sm:$0xff] %v301
                  %v303 = vld [vmem:[%s283 + $0x88] sm:$0xff]
                  %304 = vst [vmem:[%s284 + $0x48] sm:$0xff] %v303
                  %v305 = vld [vmem:[%s283 + $0xa0] sm:$0xff]
                  %306 = vst [vmem:[%s284 + $0x50] sm:$0xff] %v305
                  %v307 = vld [vmem:[%s283 + $0xa8] sm:$0xff]
                  %308 = vst [vmem:[%s284 + $0x58] sm:$0xff] %v307
                  %v309 = vld [vmem:[%s283 + $0xc0] sm:$0xff]
                  %310 = vst [vmem:[%s284 + $0x60] sm:$0xff] %v309
                  %v311 = vld [vmem:[%s283 + $0xc8] sm:$0xff]
                  %312 = vst [vmem:[%s284 + $0x68] sm:$0xff] %v311
                  %v313 = vld [vmem:[%s283 + $0xe0] sm:$0xff]
                  %314 = vst [vmem:[%s284 + $0x70] sm:$0xff] %v313
                  %v315 = vld [vmem:[%s283 + $0xe8] sm:$0xff]
                  %316 = vst [vmem:[%s284 + $0x78] sm:$0xff] %v315
                  %v317 = vld [vmem:[%s283 + $0x100] sm:$0xff]
                  %318 = vst [vmem:[%s284 + $0x80] sm:$0xff] %v317
                  %v319 = vld [vmem:[%s283 + $0x108] sm:$0xff]
                  %320 = vst [vmem:[%s284 + $0x88] sm:$0xff] %v319
                  %v321 = vld [vmem:[%s283 + $0x120] sm:$0xff]
                  %322 = vst [vmem:[%s284 + $0x90] sm:$0xff] %v321
                  %v323 = vld [vmem:[%s283 + $0x128] sm:$0xff]
                  %324 = vst [vmem:[%s284 + $0x98] sm:$0xff] %v323
                  %v325 = vld [vmem:[%s283 + $0x140] sm:$0xff]
                  %326 = vst [vmem:[%s284 + $0xa0] sm:$0xff] %v325
                  %v327 = vld [vmem:[%s283 + $0x148] sm:$0xff]
                  %328 = vst [vmem:[%s284 + $0xa8] sm:$0xff] %v327
                  %v329 = vld [vmem:[%s283 + $0x160] sm:$0xff]
                  %330 = vst [vmem:[%s284 + $0xb0] sm:$0xff] %v329
                  %v331 = vld [vmem:[%s283 + $0x168] sm:$0xff]
                  %332 = vst [vmem:[%s284 + $0xb8] sm:$0xff] %v331
                  %v333 = vld [vmem:[%s283 + $0x180] sm:$0xff]
                  %334 = vst [vmem:[%s284 + $0xc0] sm:$0xff] %v333
                  %v335 = vld [vmem:[%s283 + $0x188] sm:$0xff]
                  %336 = vst [vmem:[%s284 + $0xc8] sm:$0xff] %v335
                  %v337 = vld [vmem:[%s283 + $0x1a0] sm:$0xff]
                  %338 = vst [vmem:[%s284 + $0xd0] sm:$0xff] %v337
                  %v339 = vld [vmem:[%s283 + $0x1a8] sm:$0xff]
                  %340 = vst [vmem:[%s284 + $0xd8] sm:$0xff] %v339
                  %v341 = vld [vmem:[%s283 + $0x1c0] sm:$0xff]
                  %342 = vst [vmem:[%s284 + $0xe0] sm:$0xff] %v341
                  %v343 = vld [vmem:[%s283 + $0x1c8] sm:$0xff]
                  %344 = vst [vmem:[%s284 + $0xe8] sm:$0xff] %v343
                  %v345 = vld [vmem:[%s283 + $0x1e0] sm:$0xff]
                  %346 = vst [vmem:[%s284 + $0xf0] sm:$0xff] %v345
                  %v347 = vld [vmem:[%s283 + $0x1e8] sm:$0xff]
                  %348 = vst [vmem:[%s284 + $0xf8] sm:$0xff] %v347
                $region48: #{augmented_attention_forward.3} parent=42 // loop_footer
                  %s282 = sadd.s32 1, %s278
                $region49: #{augmented_attention_forward.3} parent=42 // loop_footer_branch
                  %277 = sbr.rel target = $region45
                $region50: #{augmented_attention_forward.3} parent=42 // loop_exit
                  _
              $region43: #{augmented_attention_forward.3} parent=27 // pred_fallthru
                _
              // Predicated region
              $region51: #{augmented_attention_forward.3} parent=27 // pred_check
                _
              $region52: #{augmented_attention_forward.3} parent=27 // pred_check_branch
                %350 = sbr.rel target = $region54
              $region53: #{augmented_attention_forward.3} parent=27 // pred_region
                _
              $region54: #{augmented_attention_forward.3} parent=27 // pred_fallthru
                _
            $region28: #{augmented_attention_forward.3} parent=23 // pred_fallthru
              _
            // Predicated region
            $region29: #{augmented_attention_forward.3} parent=23 // pred_check
              _
            $region30: #{augmented_attention_forward.3} parent=23 // pred_check_branch
              %200 = sbr.rel target = $region32
            $region31: #{augmented_attention_forward.3} parent=23 // pred_region
              %s202 = ssub.s32 256, 1
              loop: start=0, step=1, limit=1
              $region33: #{augmented_attention_forward.3} parent=31 // loop_pre_header
                _
              $region34: #{augmented_attention_forward.3} parent=31 // loop_header
                %s204 = sphi 0, %s208
                %p205 = scmp.ge.s32.totalorder %s204, 1
                %s209 = sphi %s194, %s194
                %s210 = sphi %s185, %s185
              $region35: #{augmented_attention_forward.3} parent=31 // loop_header_branch
                %207 = sbr.rel (%p205) target = $region39
              $region36: #{augmented_attention_forward.3} parent=31 // loop_body
                %v211 = vld [vmem:[%s209] sm:%s202]
                %212 = vst [vmem:[%s210] sm:%s202] %v211
                %v213 = vld [vmem:[%s209 + $0x8] sm:%s202]
                %214 = vst [vmem:[%s210 + $0x8] sm:%s202] %v213
                %v215 = vld [vmem:[%s209 + $0x20] sm:%s202]
                %216 = vst [vmem:[%s210 + $0x10] sm:%s202] %v215
                %v217 = vld [vmem:[%s209 + $0x28] sm:%s202]
                %218 = vst [vmem:[%s210 + $0x18] sm:%s202] %v217
                %v219 = vld [vmem:[%s209 + $0x40] sm:%s202]
                %220 = vst [vmem:[%s210 + $0x20] sm:%s202] %v219
                %v221 = vld [vmem:[%s209 + $0x48] sm:%s202]
                %222 = vst [vmem:[%s210 + $0x28] sm:%s202] %v221
                %v223 = vld [vmem:[%s209 + $0x60] sm:%s202]
                %224 = vst [vmem:[%s210 + $0x30] sm:%s202] %v223
                %v225 = vld [vmem:[%s209 + $0x68] sm:%s202]
                %226 = vst [vmem:[%s210 + $0x38] sm:%s202] %v225
                %v227 = vld [vmem:[%s209 + $0x80] sm:%s202]
                %228 = vst [vmem:[%s210 + $0x40] sm:%s202] %v227
                %v229 = vld [vmem:[%s209 + $0x88] sm:%s202]
                %230 = vst [vmem:[%s210 + $0x48] sm:%s202] %v229
                %v231 = vld [vmem:[%s209 + $0xa0] sm:%s202]
                %232 = vst [vmem:[%s210 + $0x50] sm:%s202] %v231
                %v233 = vld [vmem:[%s209 + $0xa8] sm:%s202]
                %234 = vst [vmem:[%s210 + $0x58] sm:%s202] %v233
                %v235 = vld [vmem:[%s209 + $0xc0] sm:%s202]
                %236 = vst [vmem:[%s210 + $0x60] sm:%s202] %v235
                %v237 = vld [vmem:[%s209 + $0xc8] sm:%s202]
                %238 = vst [vmem:[%s210 + $0x68] sm:%s202] %v237
                %v239 = vld [vmem:[%s209 + $0xe0] sm:%s202]
                %240 = vst [vmem:[%s210 + $0x70] sm:%s202] %v239
                %v241 = vld [vmem:[%s209 + $0xe8] sm:%s202]
                %242 = vst [vmem:[%s210 + $0x78] sm:%s202] %v241
                %v243 = vld [vmem:[%s209 + $0x100] sm:%s202]
                %244 = vst [vmem:[%s210 + $0x80] sm:%s202] %v243
                %v245 = vld [vmem:[%s209 + $0x108] sm:%s202]
                %246 = vst [vmem:[%s210 + $0x88] sm:%s202] %v245
                %v247 = vld [vmem:[%s209 + $0x120] sm:%s202]
                %248 = vst [vmem:[%s210 + $0x90] sm:%s202] %v247
                %v249 = vld [vmem:[%s209 + $0x128] sm:%s202]
                %250 = vst [vmem:[%s210 + $0x98] sm:%s202] %v249
                %v251 = vld [vmem:[%s209 + $0x140] sm:%s202]
                %252 = vst [vmem:[%s210 + $0xa0] sm:%s202] %v251
                %v253 = vld [vmem:[%s209 + $0x148] sm:%s202]
                %254 = vst [vmem:[%s210 + $0xa8] sm:%s202] %v253
                %v255 = vld [vmem:[%s209 + $0x160] sm:%s202]
                %256 = vst [vmem:[%s210 + $0xb0] sm:%s202] %v255
                %v257 = vld [vmem:[%s209 + $0x168] sm:%s202]
                %258 = vst [vmem:[%s210 + $0xb8] sm:%s202] %v257
                %v259 = vld [vmem:[%s209 + $0x180] sm:%s202]
                %260 = vst [vmem:[%s210 + $0xc0] sm:%s202] %v259
                %v261 = vld [vmem:[%s209 + $0x188] sm:%s202]
                %262 = vst [vmem:[%s210 + $0xc8] sm:%s202] %v261
                %v263 = vld [vmem:[%s209 + $0x1a0] sm:%s202]
                %264 = vst [vmem:[%s210 + $0xd0] sm:%s202] %v263
                %v265 = vld [vmem:[%s209 + $0x1a8] sm:%s202]
                %266 = vst [vmem:[%s210 + $0xd8] sm:%s202] %v265
                %v267 = vld [vmem:[%s209 + $0x1c0] sm:%s202]
                %268 = vst [vmem:[%s210 + $0xe0] sm:%s202] %v267
                %v269 = vld [vmem:[%s209 + $0x1c8] sm:%s202]
                %270 = vst [vmem:[%s210 + $0xe8] sm:%s202] %v269
                %v271 = vld [vmem:[%s209 + $0x1e0] sm:%s202]
                %272 = vst [vmem:[%s210 + $0xf0] sm:%s202] %v271
                %v273 = vld [vmem:[%s209 + $0x1e8] sm:%s202]
                %274 = vst [vmem:[%s210 + $0xf8] sm:%s202] %v273
              $region37: #{augmented_attention_forward.3} parent=31 // loop_footer
                %s208 = sadd.s32 1, %s204
              $region38: #{augmented_attention_forward.3} parent=31 // loop_footer_branch
                %203 = sbr.rel target = $region34
              $region39: #{augmented_attention_forward.3} parent=31 // loop_exit
                _
            $region32: #{augmented_attention_forward.3} parent=23 // pred_fallthru
              _
          $region24: #{augmented_attention_forward.3} parent=19 // pred_fallthru
            _
          %351 = vnop
        $region20: #{augmented_attention_forward.3} parent=15 // pred_fallthru
          _
        // Predicated region
        $region55: #{augmented_attention_forward.3} parent=15 // pred_check
          %p352 = pneg %p94
        $region56: #{augmented_attention_forward.3} parent=15 // pred_check_branch
          %354 = sbr.rel (%p352) target = $region58
        $region57: #{augmented_attention_forward.3} parent=15 // pred_region
          %s355 = sand.u32 %s84, 1
          %s356 = sand.u32 %s84, 1
          %s357 = smul.addr %s356, 256
          %s358 = scalar_lea.vmem [#allocation3], %s357
          %s359 = sadd.s32 %s18, %s20
          %s360 = smul.u32 16, %s359
          %s361 = smul.u32 2, %s19
          %s362 = smul.addr %s360, 4
          %s363 = sadd.s32 %s361, %s362
          %s364 = smul.addr %s17, 128
          %s365 = sadd.s32 %s363, %s364
          %s366 = smul.addr %s365, 8
          %s367 = scalar_lea.vmem %s1, %s366
          // Predicated region
          $region59: #{augmented_attention_forward.3} parent=57 // pred_check
            _
          $region60: #{augmented_attention_forward.3} parent=57 // pred_check_branch
            %369 = sbr.rel (0) target = $region62
          $region61: #{augmented_attention_forward.3} parent=57 // pred_region
            // Predicated region
            $region63: #{augmented_attention_forward.3} parent=61 // pred_check
              _
            $region64: #{augmented_attention_forward.3} parent=61 // pred_check_branch
              %371 = sbr.rel (0) target = $region66
            $region65: #{augmented_attention_forward.3} parent=61 // pred_region
              // Predicated region
              $region78: #{augmented_attention_forward.3} parent=65 // pred_check
                _
              $region79: #{augmented_attention_forward.3} parent=65 // pred_check_branch
                %449 = sbr.rel (0) target = $region81
              $region80: #{augmented_attention_forward.3} parent=65 // pred_region
                loop: start=0, step=1, limit=1
                $region82: #{augmented_attention_forward.3} parent=80 // loop_pre_header
                  _
                $region83: #{augmented_attention_forward.3} parent=80 // loop_header
                  %s451 = sphi 0, %s455
                  %p452 = scmp.ge.s32.totalorder %s451, 1
                  %s456 = sphi %s367, %s367
                  %s457 = sphi %s358, %s358
                $region84: #{augmented_attention_forward.3} parent=80 // loop_header_branch
                  %454 = sbr.rel (%p452) target = $region88
                $region85: #{augmented_attention_forward.3} parent=80 // loop_body
                  %v458 = vld [vmem:[%s456] sm:$0xff]
                  %459 = vst [vmem:[%s457] sm:$0xff] %v458
                  %v460 = vld [vmem:[%s456 + $0x8] sm:$0xff]
                  %461 = vst [vmem:[%s457 + $0x8] sm:$0xff] %v460
                  %v462 = vld [vmem:[%s456 + $0x20] sm:$0xff]
                  %463 = vst [vmem:[%s457 + $0x10] sm:$0xff] %v462
                  %v464 = vld [vmem:[%s456 + $0x28] sm:$0xff]
                  %465 = vst [vmem:[%s457 + $0x18] sm:$0xff] %v464
                  %v466 = vld [vmem:[%s456 + $0x40] sm:$0xff]
                  %467 = vst [vmem:[%s457 + $0x20] sm:$0xff] %v466
                  %v468 = vld [vmem:[%s456 + $0x48] sm:$0xff]
                  %469 = vst [vmem:[%s457 + $0x28] sm:$0xff] %v468
                  %v470 = vld [vmem:[%s456 + $0x60] sm:$0xff]
                  %471 = vst [vmem:[%s457 + $0x30] sm:$0xff] %v470
                  %v472 = vld [vmem:[%s456 + $0x68] sm:$0xff]
                  %473 = vst [vmem:[%s457 + $0x38] sm:$0xff] %v472
                  %v474 = vld [vmem:[%s456 + $0x80] sm:$0xff]
                  %475 = vst [vmem:[%s457 + $0x40] sm:$0xff] %v474
                  %v476 = vld [vmem:[%s456 + $0x88] sm:$0xff]
                  %477 = vst [vmem:[%s457 + $0x48] sm:$0xff] %v476
                  %v478 = vld [vmem:[%s456 + $0xa0] sm:$0xff]
                  %479 = vst [vmem:[%s457 + $0x50] sm:$0xff] %v478
                  %v480 = vld [vmem:[%s456 + $0xa8] sm:$0xff]
                  %481 = vst [vmem:[%s457 + $0x58] sm:$0xff] %v480
                  %v482 = vld [vmem:[%s456 + $0xc0] sm:$0xff]
                  %483 = vst [vmem:[%s457 + $0x60] sm:$0xff] %v482
                  %v484 = vld [vmem:[%s456 + $0xc8] sm:$0xff]
                  %485 = vst [vmem:[%s457 + $0x68] sm:$0xff] %v484
                  %v486 = vld [vmem:[%s456 + $0xe0] sm:$0xff]
                  %487 = vst [vmem:[%s457 + $0x70] sm:$0xff] %v486
                  %v488 = vld [vmem:[%s456 + $0xe8] sm:$0xff]
                  %489 = vst [vmem:[%s457 + $0x78] sm:$0xff] %v488
                  %v490 = vld [vmem:[%s456 + $0x100] sm:$0xff]
                  %491 = vst [vmem:[%s457 + $0x80] sm:$0xff] %v490
                  %v492 = vld [vmem:[%s456 + $0x108] sm:$0xff]
                  %493 = vst [vmem:[%s457 + $0x88] sm:$0xff] %v492
                  %v494 = vld [vmem:[%s456 + $0x120] sm:$0xff]
                  %495 = vst [vmem:[%s457 + $0x90] sm:$0xff] %v494
                  %v496 = vld [vmem:[%s456 + $0x128] sm:$0xff]
                  %497 = vst [vmem:[%s457 + $0x98] sm:$0xff] %v496
                  %v498 = vld [vmem:[%s456 + $0x140] sm:$0xff]
                  %499 = vst [vmem:[%s457 + $0xa0] sm:$0xff] %v498
                  %v500 = vld [vmem:[%s456 + $0x148] sm:$0xff]
                  %501 = vst [vmem:[%s457 + $0xa8] sm:$0xff] %v500
                  %v502 = vld [vmem:[%s456 + $0x160] sm:$0xff]
                  %503 = vst [vmem:[%s457 + $0xb0] sm:$0xff] %v502
                  %v504 = vld [vmem:[%s456 + $0x168] sm:$0xff]
                  %505 = vst [vmem:[%s457 + $0xb8] sm:$0xff] %v504
                  %v506 = vld [vmem:[%s456 + $0x180] sm:$0xff]
                  %507 = vst [vmem:[%s457 + $0xc0] sm:$0xff] %v506
                  %v508 = vld [vmem:[%s456 + $0x188] sm:$0xff]
                  %509 = vst [vmem:[%s457 + $0xc8] sm:$0xff] %v508
                  %v510 = vld [vmem:[%s456 + $0x1a0] sm:$0xff]
                  %511 = vst [vmem:[%s457 + $0xd0] sm:$0xff] %v510
                  %v512 = vld [vmem:[%s456 + $0x1a8] sm:$0xff]
                  %513 = vst [vmem:[%s457 + $0xd8] sm:$0xff] %v512
                  %v514 = vld [vmem:[%s456 + $0x1c0] sm:$0xff]
                  %515 = vst [vmem:[%s457 + $0xe0] sm:$0xff] %v514
                  %v516 = vld [vmem:[%s456 + $0x1c8] sm:$0xff]
                  %517 = vst [vmem:[%s457 + $0xe8] sm:$0xff] %v516
                  %v518 = vld [vmem:[%s456 + $0x1e0] sm:$0xff]
                  %519 = vst [vmem:[%s457 + $0xf0] sm:$0xff] %v518
                  %v520 = vld [vmem:[%s456 + $0x1e8] sm:$0xff]
                  %521 = vst [vmem:[%s457 + $0xf8] sm:$0xff] %v520
                $region86: #{augmented_attention_forward.3} parent=80 // loop_footer
                  %s455 = sadd.s32 1, %s451
                $region87: #{augmented_attention_forward.3} parent=80 // loop_footer_branch
                  %450 = sbr.rel target = $region83
                $region88: #{augmented_attention_forward.3} parent=80 // loop_exit
                  _
              $region81: #{augmented_attention_forward.3} parent=65 // pred_fallthru
                _
              // Predicated region
              $region89: #{augmented_attention_forward.3} parent=65 // pred_check
                _
              $region90: #{augmented_attention_forward.3} parent=65 // pred_check_branch
                %523 = sbr.rel target = $region92
              $region91: #{augmented_attention_forward.3} parent=65 // pred_region
                _
              $region92: #{augmented_attention_forward.3} parent=65 // pred_fallthru
                _
            $region66: #{augmented_attention_forward.3} parent=61 // pred_fallthru
              _
            // Predicated region
            $region67: #{augmented_attention_forward.3} parent=61 // pred_check
              _
            $region68: #{augmented_attention_forward.3} parent=61 // pred_check_branch
              %373 = sbr.rel target = $region70
            $region69: #{augmented_attention_forward.3} parent=61 // pred_region
              %s375 = ssub.s32 256, 1
              loop: start=0, step=1, limit=1
              $region71: #{augmented_attention_forward.3} parent=69 // loop_pre_header
                _
              $region72: #{augmented_attention_forward.3} parent=69 // loop_header
                %s377 = sphi 0, %s381
                %p378 = scmp.ge.s32.totalorder %s377, 1
                %s382 = sphi %s367, %s367
                %s383 = sphi %s358, %s358
              $region73: #{augmented_attention_forward.3} parent=69 // loop_header_branch
                %380 = sbr.rel (%p378) target = $region77
              $region74: #{augmented_attention_forward.3} parent=69 // loop_body
                %v384 = vld [vmem:[%s382] sm:%s375]
                %385 = vst [vmem:[%s383] sm:%s375] %v384
                %v386 = vld [vmem:[%s382 + $0x8] sm:%s375]
                %387 = vst [vmem:[%s383 + $0x8] sm:%s375] %v386
                %v388 = vld [vmem:[%s382 + $0x20] sm:%s375]
                %389 = vst [vmem:[%s383 + $0x10] sm:%s375] %v388
                %v390 = vld [vmem:[%s382 + $0x28] sm:%s375]
                %391 = vst [vmem:[%s383 + $0x18] sm:%s375] %v390
                %v392 = vld [vmem:[%s382 + $0x40] sm:%s375]
                %393 = vst [vmem:[%s383 + $0x20] sm:%s375] %v392
                %v394 = vld [vmem:[%s382 + $0x48] sm:%s375]
                %395 = vst [vmem:[%s383 + $0x28] sm:%s375] %v394
                %v396 = vld [vmem:[%s382 + $0x60] sm:%s375]
                %397 = vst [vmem:[%s383 + $0x30] sm:%s375] %v396
                %v398 = vld [vmem:[%s382 + $0x68] sm:%s375]
                %399 = vst [vmem:[%s383 + $0x38] sm:%s375] %v398
                %v400 = vld [vmem:[%s382 + $0x80] sm:%s375]
                %401 = vst [vmem:[%s383 + $0x40] sm:%s375] %v400
                %v402 = vld [vmem:[%s382 + $0x88] sm:%s375]
                %403 = vst [vmem:[%s383 + $0x48] sm:%s375] %v402
                %v404 = vld [vmem:[%s382 + $0xa0] sm:%s375]
                %405 = vst [vmem:[%s383 + $0x50] sm:%s375] %v404
                %v406 = vld [vmem:[%s382 + $0xa8] sm:%s375]
                %407 = vst [vmem:[%s383 + $0x58] sm:%s375] %v406
                %v408 = vld [vmem:[%s382 + $0xc0] sm:%s375]
                %409 = vst [vmem:[%s383 + $0x60] sm:%s375] %v408
                %v410 = vld [vmem:[%s382 + $0xc8] sm:%s375]
                %411 = vst [vmem:[%s383 + $0x68] sm:%s375] %v410
                %v412 = vld [vmem:[%s382 + $0xe0] sm:%s375]
                %413 = vst [vmem:[%s383 + $0x70] sm:%s375] %v412
                %v414 = vld [vmem:[%s382 + $0xe8] sm:%s375]
                %415 = vst [vmem:[%s383 + $0x78] sm:%s375] %v414
                %v416 = vld [vmem:[%s382 + $0x100] sm:%s375]
                %417 = vst [vmem:[%s383 + $0x80] sm:%s375] %v416
                %v418 = vld [vmem:[%s382 + $0x108] sm:%s375]
                %419 = vst [vmem:[%s383 + $0x88] sm:%s375] %v418
                %v420 = vld [vmem:[%s382 + $0x120] sm:%s375]
                %421 = vst [vmem:[%s383 + $0x90] sm:%s375] %v420
                %v422 = vld [vmem:[%s382 + $0x128] sm:%s375]
                %423 = vst [vmem:[%s383 + $0x98] sm:%s375] %v422
                %v424 = vld [vmem:[%s382 + $0x140] sm:%s375]
                %425 = vst [vmem:[%s383 + $0xa0] sm:%s375] %v424
                %v426 = vld [vmem:[%s382 + $0x148] sm:%s375]
                %427 = vst [vmem:[%s383 + $0xa8] sm:%s375] %v426
                %v428 = vld [vmem:[%s382 + $0x160] sm:%s375]
                %429 = vst [vmem:[%s383 + $0xb0] sm:%s375] %v428
                %v430 = vld [vmem:[%s382 + $0x168] sm:%s375]
                %431 = vst [vmem:[%s383 + $0xb8] sm:%s375] %v430
                %v432 = vld [vmem:[%s382 + $0x180] sm:%s375]
                %433 = vst [vmem:[%s383 + $0xc0] sm:%s375] %v432
                %v434 = vld [vmem:[%s382 + $0x188] sm:%s375]
                %435 = vst [vmem:[%s383 + $0xc8] sm:%s375] %v434
                %v436 = vld [vmem:[%s382 + $0x1a0] sm:%s375]
                %437 = vst [vmem:[%s383 + $0xd0] sm:%s375] %v436
                %v438 = vld [vmem:[%s382 + $0x1a8] sm:%s375]
                %439 = vst [vmem:[%s383 + $0xd8] sm:%s375] %v438
                %v440 = vld [vmem:[%s382 + $0x1c0] sm:%s375]
                %441 = vst [vmem:[%s383 + $0xe0] sm:%s375] %v440
                %v442 = vld [vmem:[%s382 + $0x1c8] sm:%s375]
                %443 = vst [vmem:[%s383 + $0xe8] sm:%s375] %v442
                %v444 = vld [vmem:[%s382 + $0x1e0] sm:%s375]
                %445 = vst [vmem:[%s383 + $0xf0] sm:%s375] %v444
                %v446 = vld [vmem:[%s382 + $0x1e8] sm:%s375]
                %447 = vst [vmem:[%s383 + $0xf8] sm:%s375] %v446
              $region75: #{augmented_attention_forward.3} parent=69 // loop_footer
                %s381 = sadd.s32 1, %s377
              $region76: #{augmented_attention_forward.3} parent=69 // loop_footer_branch
                %376 = sbr.rel target = $region72
              $region77: #{augmented_attention_forward.3} parent=69 // loop_exit
                _
            $region70: #{augmented_attention_forward.3} parent=61 // pred_fallthru
              _
          $region62: #{augmented_attention_forward.3} parent=57 // pred_fallthru
            _
          %524 = vnop
        $region58: #{augmented_attention_forward.3} parent=15 // pred_fallthru
          _
      $region16: #{augmented_attention_forward.3} parent=5 // pred_fallthru
        _
      %p525 = scmp.le.s32.totalorder 1, %s10
      %p526 = scmp.lt.s32.totalorder %s10, 9
      %p527 = pnand %p525, %p526
      %p528 = pneg %p527
      // Predicated region
      $region93: #{augmented_attention_forward.3} parent=5 // pred_check
        _
      $region94: #{augmented_attention_forward.3} parent=5 // pred_check_branch
        %530 = sbr.rel (%p527) target = $region96
      $region95: #{augmented_attention_forward.3} parent=5 // pred_region
        %s531 = ssub.s32 %s10, 1
        %s532 = sand.u32 %s55, 1
        %s533 = sand.u32 %s55, 1
        %s534 = smul.addr %s533, 256
        %s535 = scalar_lea.vmem [#allocation2], %s534
        // Predicated region
        $region97: #{augmented_attention_forward.3} parent=95 // pred_check
          %p536 = pneg %p68
        $region98: #{augmented_attention_forward.3} parent=95 // pred_check_branch
          %538 = sbr.rel (%p536) target = $region100
        $region99: #{augmented_attention_forward.3} parent=95 // pred_region
          _
        $region100: #{augmented_attention_forward.3} parent=95 // pred_fallthru
          _
        %s539 = sand.u32 %s87, 1
        %s540 = sand.u32 %s87, 1
        %s541 = smul.addr %s540, 256
        %s542 = scalar_lea.vmem [#allocation3], %s541
        // Predicated region
        $region101: #{augmented_attention_forward.3} parent=95 // pred_check
          %p543 = pneg %p100
        $region102: #{augmented_attention_forward.3} parent=95 // pred_check_branch
          %545 = sbr.rel (%p543) target = $region104
        $region103: #{augmented_attention_forward.3} parent=95 // pred_region
          _
        $region104: #{augmented_attention_forward.3} parent=95 // pred_fallthru
          _
        %s546 = sand.u32 %s55, 1
        %s547 = sand.u32 %s55, 1
        %s548 = smul.addr %s547, 256
        %s549 = scalar_lea.vmem [#allocation2], %s548
        %p550 = pneg %p68
        %p551 = pneg %p65
        %s552 = sand.u32 %s87, 1
        %s553 = sand.u32 %s87, 1
        %s554 = smul.addr %s553, 256
        %s555 = scalar_lea.vmem [#allocation3], %s554
        %p556 = pneg %p100
        %p557 = pneg %p97
        %p558 = pneg %p130
        %p559 = pneg %p127
        %p560 = scmp.lt.s32.totalorder %s21, 1
        %s561 = scalar_select %p560, %s21, 1
        %p562 = scmp.lt.s32.totalorder %s22, 1
        %s563 = scalar_select %p562, %s22, 1
        %p564 = scmp.lt.s32.totalorder %s23, 1
        %s565 = scalar_select %p564, %s23, 1
        %s566 = smul.addr %s563, 2
        %s567 = sadd.s32 %s565, %s566
        %s568 = smul.addr %s561, 4
        %s569 = sadd.s32 %s567, %s568
        %s570 = scalar_lea.vmem %s2, %s569
        %p571 = pneg %p160
        %p572 = pneg %p157
        %p573 = scmp.lt.s32.totalorder %s21, 1
        %s574 = scalar_select %p573, %s21, 1
        %p575 = scmp.lt.s32.totalorder %s22, 1
        %s576 = scalar_select %p575, %s22, 1
        %p577 = scmp.lt.s32.totalorder %s23, 1
        %s578 = scalar_select %p577, %s23, 1
        %s579 = smul.addr %s576, 2
        %s580 = sadd.s32 %s578, %s579
        %s581 = smul.addr %s574, 4
        %s582 = sadd.s32 %s580, %s581
        %s583 = scalar_lea.vmem %s3, %s582
        %s584 = sadd.s32 %s22, %s24
        %s585 = smul.u32 16, %s584
        %s586 = smul.u32 2, %s23
        %s587 = sadd.s32 %s22, %s24
        %s588 = smul.u32 16, %s587
        %s589 = smul.u32 2, %s23
        %p590 = scmp.lt.s32.totalorder %s21, 1
        %s591 = scalar_select %p590, %s21, 1
        %p592 = scmp.lt.s32.totalorder %s22, 1
        %s593 = scalar_select %p592, %s22, 1
        %p594 = scmp.lt.s32.totalorder %s23, 1
        %s595 = scalar_select %p594, %s23, 1
        %s596 = smul.addr %s593, 2
        %s597 = sadd.s32 %s595, %s596
        %s598 = smul.addr %s591, 4
        %s599 = sadd.s32 %s597, %s598
        %s600 = scalar_lea.vmem %s2, %s599
        %p601 = scmp.lt.s32.totalorder %s21, 1
        %s602 = scalar_select %p601, %s21, 1
        %p603 = scmp.lt.s32.totalorder %s22, 1
        %s604 = scalar_select %p603, %s22, 1
        %p605 = scmp.lt.s32.totalorder %s23, 1
        %s606 = scalar_select %p605, %s23, 1
        %s607 = smul.addr %s604, 2
        %s608 = sadd.s32 %s606, %s607
        %s609 = smul.addr %s602, 4
        %s610 = sadd.s32 %s608, %s609
        %s611 = scalar_lea.vmem %s3, %s610
        %p612 = scmp.eq.s32.totalorder %s24, 0
        // Predicated region
        $region105: #{augmented_attention_forward.3} parent=95 // pred_check
          %p613 = pneg %p612
        $region106: #{augmented_attention_forward.3} parent=95 // pred_check_branch
          %615 = sbr.rel (%p613) target = $region108
        $region107: #{augmented_attention_forward.3} parent=95 // pred_region
          %vm616 = vcmask 57344
          %617 = vst.msk [vmem:[%s600] sm:$0x1] %vm616, 0.0
          %618 = vst.msk [vmem:[%s611] sm:$0x1] %vm616, 0.0
        $region108: #{augmented_attention_forward.3} parent=95 // pred_fallthru
          _
        %v619 = vld [vmem:[%s535] sm:$0xff]
        %v620 = vld [vmem:[%s535 + $0x8] sm:$0xff]
        %v621 = vld [vmem:[%s535 + $0x10] sm:$0xff]
        %v622 = vld [vmem:[%s535 + $0x18] sm:$0xff]
        %v623 = vld [vmem:[%s535 + $0x20] sm:$0xff]
        %v624 = vld [vmem:[%s535 + $0x28] sm:$0xff]
        %v625 = vld [vmem:[%s535 + $0x30] sm:$0xff]
        %v626 = vld [vmem:[%s535 + $0x38] sm:$0xff]
        %v627 = vld [vmem:[%s535 + $0x40] sm:$0xff]
        %v628 = vld [vmem:[%s535 + $0x48] sm:$0xff]
        %v629 = vld [vmem:[%s535 + $0x50] sm:$0xff]
        %v630 = vld [vmem:[%s535 + $0x58] sm:$0xff]
        %v631 = vld [vmem:[%s535 + $0x60] sm:$0xff]
        %v632 = vld [vmem:[%s535 + $0x68] sm:$0xff]
        %v633 = vld [vmem:[%s535 + $0x70] sm:$0xff]
        %v634 = vld [vmem:[%s535 + $0x78] sm:$0xff]
        %v635 = vld [vmem:[%s535 + $0x80] sm:$0xff]
        %v636 = vld [vmem:[%s535 + $0x88] sm:$0xff]
        %v637 = vld [vmem:[%s535 + $0x90] sm:$0xff]
        %v638 = vld [vmem:[%s535 + $0x98] sm:$0xff]
        %v639 = vld [vmem:[%s535 + $0xa0] sm:$0xff]
        %v640 = vld [vmem:[%s535 + $0xa8] sm:$0xff]
        %v641 = vld [vmem:[%s535 + $0xb0] sm:$0xff]
        %v642 = vld [vmem:[%s535 + $0xb8] sm:$0xff]
        %v643 = vld [vmem:[%s535 + $0xc0] sm:$0xff]
        %v644 = vld [vmem:[%s535 + $0xc8] sm:$0xff]
        %v645 = vld [vmem:[%s535 + $0xd0] sm:$0xff]
        %v646 = vld [vmem:[%s535 + $0xd8] sm:$0xff]
        %v647 = vld [vmem:[%s535 + $0xe0] sm:$0xff]
        %v648 = vld [vmem:[%s535 + $0xe8] sm:$0xff]
        %v649 = vld [vmem:[%s535 + $0xf0] sm:$0xff]
        %v650 = vld [vmem:[%s535 + $0xf8] sm:$0xff]
        %vm651 = vcmask 64512
        %v652 = vsel %vm651, %v619, 0.0
        %v653 = vsel %vm651, %v620, 0.0
        %v654 = vadd.f32 %v652, %v653
        %v655 = vsel %vm651, %v621, 0.0
        %v656 = vadd.f32 %v654, %v655
        %v657 = vsel %vm651, %v622, 0.0
        %v658 = vadd.f32 %v656, %v657
        %v659 = vsel %vm651, %v623, 0.0
        %v660 = vadd.f32 %v658, %v659
        %v661 = vsel %vm651, %v624, 0.0
        %v662 = vadd.f32 %v660, %v661
        %v663 = vsel %vm651, %v625, 0.0
        %v664 = vadd.f32 %v662, %v663
        %v665 = vsel %vm651, %v626, 0.0
        %v666 = vadd.f32 %v664, %v665
        %v667 = vsel %vm651, %v627, 0.0
        %v668 = vadd.f32 %v666, %v667
        %v669 = vsel %vm651, %v628, 0.0
        %v670 = vadd.f32 %v668, %v669
        %v671 = vsel %vm651, %v629, 0.0
        %v672 = vadd.f32 %v670, %v671
        %v673 = vsel %vm651, %v630, 0.0
        %v674 = vadd.f32 %v672, %v673
        %v675 = vsel %vm651, %v631, 0.0
        %v676 = vadd.f32 %v674, %v675
        %v677 = vsel %vm651, %v632, 0.0
        %v678 = vadd.f32 %v676, %v677
        %v679 = vsel %vm651, %v633, 0.0
        %v680 = vadd.f32 %v678, %v679
        %v681 = vsel %vm651, %v634, 0.0
        %v682 = vadd.f32 %v680, %v681
        %v683 = vsel %vm651, %v635, 0.0
        %v684 = vadd.f32 %v682, %v683
        %v685 = vsel %vm651, %v636, 0.0
        %v686 = vadd.f32 %v684, %v685
        %v687 = vsel %vm651, %v637, 0.0
        %v688 = vadd.f32 %v686, %v687
        %v689 = vsel %vm651, %v638, 0.0
        %v690 = vadd.f32 %v688, %v689
        %v691 = vsel %vm651, %v639, 0.0
        %v692 = vadd.f32 %v690, %v691
        %v693 = vsel %vm651, %v640, 0.0
        %v694 = vadd.f32 %v692, %v693
        %v695 = vsel %vm651, %v641, 0.0
        %v696 = vadd.f32 %v694, %v695
        %v697 = vsel %vm651, %v642, 0.0
        %v698 = vadd.f32 %v696, %v697
        %v699 = vsel %vm651, %v643, 0.0
        %v700 = vadd.f32 %v698, %v699
        %v701 = vsel %vm651, %v644, 0.0
        %v702 = vadd.f32 %v700, %v701
        %v703 = vsel %vm651, %v645, 0.0
        %v704 = vadd.f32 %v702, %v703
        %v705 = vsel %vm651, %v646, 0.0
        %v706 = vadd.f32 %v704, %v705
        %v707 = vsel %vm651, %v647, 0.0
        %v708 = vadd.f32 %v706, %v707
        %v709 = vsel %vm651, %v648, 0.0
        %v710 = vadd.f32 %v708, %v709
        %v711 = vsel %vm651, %v649, 0.0
        %v712 = vadd.f32 %v710, %v711
        %v713 = vsel %vm651, %v650, 0.0
        %v714 = vadd.f32 %v712, %v713
        %v715 = vrot.slane %v714, 4
        %v716 = vadd.f32 %v714, %v715
        %v717 = vrot.slane %v716, 2
        %v718 = vadd.f32 %v716, %v717
        %v719 = vrot.slane %v718, 1
        %v720 = vadd.f32 %v718, %v719
        %v721 = vld [vmem:[%s542] sm:$0xff]
        %v722 = vld [vmem:[%s542 + $0x8] sm:$0xff]
        %v723 = vld [vmem:[%s542 + $0x10] sm:$0xff]
        %v724 = vld [vmem:[%s542 + $0x18] sm:$0xff]
        %v725 = vld [vmem:[%s542 + $0x20] sm:$0xff]
        %v726 = vld [vmem:[%s542 + $0x28] sm:$0xff]
        %v727 = vld [vmem:[%s542 + $0x30] sm:$0xff]
        %v728 = vld [vmem:[%s542 + $0x38] sm:$0xff]
        %v729 = vld [vmem:[%s542 + $0x40] sm:$0xff]
        %v730 = vld [vmem:[%s542 + $0x48] sm:$0xff]
        %v731 = vld [vmem:[%s542 + $0x50] sm:$0xff]
        %v732 = vld [vmem:[%s542 + $0x58] sm:$0xff]
        %v733 = vld [vmem:[%s542 + $0x60] sm:$0xff]
        %v734 = vld [vmem:[%s542 + $0x68] sm:$0xff]
        %v735 = vld [vmem:[%s542 + $0x70] sm:$0xff]
        %v736 = vld [vmem:[%s542 + $0x78] sm:$0xff]
        %v737 = vld [vmem:[%s542 + $0x80] sm:$0xff]
        %v738 = vld [vmem:[%s542 + $0x88] sm:$0xff]
        %v739 = vld [vmem:[%s542 + $0x90] sm:$0xff]
        %v740 = vld [vmem:[%s542 + $0x98] sm:$0xff]
        %v741 = vld [vmem:[%s542 + $0xa0] sm:$0xff]
        %v742 = vld [vmem:[%s542 + $0xa8] sm:$0xff]
        %v743 = vld [vmem:[%s542 + $0xb0] sm:$0xff]
        %v744 = vld [vmem:[%s542 + $0xb8] sm:$0xff]
        %v745 = vld [vmem:[%s542 + $0xc0] sm:$0xff]
        %v746 = vld [vmem:[%s542 + $0xc8] sm:$0xff]
        %v747 = vld [vmem:[%s542 + $0xd0] sm:$0xff]
        %v748 = vld [vmem:[%s542 + $0xd8] sm:$0xff]
        %v749 = vld [vmem:[%s542 + $0xe0] sm:$0xff]
        %v750 = vld [vmem:[%s542 + $0xe8] sm:$0xff]
        %v751 = vld [vmem:[%s542 + $0xf0] sm:$0xff]
        %v752 = vld [vmem:[%s542 + $0xf8] sm:$0xff]
        %v753 = vsel %vm651, %v721, 0.0
        %v754 = vsel %vm651, %v722, 0.0
        %v755 = vadd.f32 %v753, %v754
        %v756 = vsel %vm651, %v723, 0.0
        %v757 = vadd.f32 %v755, %v756
        %v758 = vsel %vm651, %v724, 0.0
        %v759 = vadd.f32 %v757, %v758
        %v760 = vsel %vm651, %v725, 0.0
        %v761 = vadd.f32 %v759, %v760
        %v762 = vsel %vm651, %v726, 0.0
        %v763 = vadd.f32 %v761, %v762
        %v764 = vsel %vm651, %v727, 0.0
        %v765 = vadd.f32 %v763, %v764
        %v766 = vsel %vm651, %v728, 0.0
        %v767 = vadd.f32 %v765, %v766
        %v768 = vsel %vm651, %v729, 0.0
        %v769 = vadd.f32 %v767, %v768
        %v770 = vsel %vm651, %v730, 0.0
        %v771 = vadd.f32 %v769, %v770
        %v772 = vsel %vm651, %v731, 0.0
        %v773 = vadd.f32 %v771, %v772
        %v774 = vsel %vm651, %v732, 0.0
        %v775 = vadd.f32 %v773, %v774
        %v776 = vsel %vm651, %v733, 0.0
        %v777 = vadd.f32 %v775, %v776
        %v778 = vsel %vm651, %v734, 0.0
        %v779 = vadd.f32 %v777, %v778
        %v780 = vsel %vm651, %v735, 0.0
        %v781 = vadd.f32 %v779, %v780
        %v782 = vsel %vm651, %v736, 0.0
        %v783 = vadd.f32 %v781, %v782
        %v784 = vsel %vm651, %v737, 0.0
        %v785 = vadd.f32 %v783, %v784
        %v786 = vsel %vm651, %v738, 0.0
        %v787 = vadd.f32 %v785, %v786
        %v788 = vsel %vm651, %v739, 0.0
        %v789 = vadd.f32 %v787, %v788
        %v790 = vsel %vm651, %v740, 0.0
        %v791 = vadd.f32 %v789, %v790
        %v792 = vsel %vm651, %v741, 0.0
        %v793 = vadd.f32 %v791, %v792
        %v794 = vsel %vm651, %v742, 0.0
        %v795 = vadd.f32 %v793, %v794
        %v796 = vsel %vm651, %v743, 0.0
        %v797 = vadd.f32 %v795, %v796
        %v798 = vsel %vm651, %v744, 0.0
        %v799 = vadd.f32 %v797, %v798
        %v800 = vsel %vm651, %v745, 0.0
        %v801 = vadd.f32 %v799, %v800
        %v802 = vsel %vm651, %v746, 0.0
        %v803 = vadd.f32 %v801, %v802
        %v804 = vsel %vm651, %v747, 0.0
        %v805 = vadd.f32 %v803, %v804
        %v806 = vsel %vm651, %v748, 0.0
        %v807 = vadd.f32 %v805, %v806
        %v808 = vsel %vm651, %v749, 0.0
        %v809 = vadd.f32 %v807, %v808
        %v810 = vsel %vm651, %v750, 0.0
        %v811 = vadd.f32 %v809, %v810
        %v812 = vsel %vm651, %v751, 0.0
        %v813 = vadd.f32 %v811, %v812
        %v814 = vsel %vm651, %v752, 0.0
        %v815 = vadd.f32 %v813, %v814
        %v816 = vrot.slane %v815, 4
        %v817 = vadd.f32 %v815, %v816
        %v818 = vrot.slane %v817, 2
        %v819 = vadd.f32 %v817, %v818
        %v820 = vrot.slane %v819, 1
        %v821 = vadd.f32 %v819, %v820
        %v822 = vld [vmem:[%s600] sm:$0x1]
        %v823 = vadd.f32 %v822, %v720
        %vm824 = vcmask 57344
        %825 = vst.msk [vmem:[%s600] sm:$0x1] %vm824, %v823
        %v826 = vld [vmem:[%s611] sm:$0x1]
        %v827 = vadd.f32 %v826, %v821
        %828 = vst.msk [vmem:[%s611] sm:$0x1] %vm824, %v827
        // Predicated region
        $region109: #{augmented_attention_forward.3} parent=95 // pred_check
          %p829 = pneg %p612
        $region110: #{augmented_attention_forward.3} parent=95 // pred_check_branch
          %831 = sbr.rel (%p829) target = $region112
        $region111: #{augmented_attention_forward.3} parent=95 // pred_region
          %v832 = vld [vmem:[%s600] sm:$0x1]
          %v833 = vmul.f32 %v832, 0.00390625
          %834 = vst.msk [vmem:[%s600] sm:$0x1] %vm824, %v833
          %v835 = vld [vmem:[%s611] sm:$0x1]
          %v836 = vmul.f32 %v835, 0.00390625
          %837 = vst.msk [vmem:[%s611] sm:$0x1] %vm824, %v836
        $region112: #{augmented_attention_forward.3} parent=95 // pred_fallthru
          _
        %p838 = scmp.lt.s32.totalorder %s21, 1
        %s839 = scalar_select %p838, %s21, 1
        %p840 = scmp.lt.s32.totalorder %s22, 1
        %s841 = scalar_select %p840, %s22, 1
        %p842 = scmp.lt.s32.totalorder %s23, 1
        %s843 = scalar_select %p842, %s23, 1
        %s844 = smul.addr %s841, 2
        %s845 = sadd.s32 %s843, %s844
        %s846 = smul.addr %s839, 4
        %s847 = sadd.s32 %s845, %s846
        %s848 = scalar_lea.vmem %s2, %s847
        %p849 = scmp.lt.s32.totalorder %s21, 1
        %s850 = scalar_select %p849, %s21, 1
        %p851 = scmp.lt.s32.totalorder %s22, 1
        %s852 = scalar_select %p851, %s22, 1
        %p853 = scmp.lt.s32.totalorder %s23, 1
        %s854 = scalar_select %p853, %s23, 1
        %s855 = smul.addr %s852, 2
        %s856 = sadd.s32 %s854, %s855
        %s857 = smul.addr %s850, 4
        %s858 = sadd.s32 %s856, %s857
        %s859 = scalar_lea.vmem %s3, %s858
        // Predicated region
        $region113: #{augmented_attention_forward.3} parent=95 // pred_check
          %p860 = pneg %p127
        $region114: #{augmented_attention_forward.3} parent=95 // pred_check_branch
          %862 = sbr.rel (%p860) target = $region116
        $region115: #{augmented_attention_forward.3} parent=95 // pred_region
          _
        $region116: #{augmented_attention_forward.3} parent=95 // pred_fallthru
          _
        // Predicated region
        $region117: #{augmented_attention_forward.3} parent=95 // pred_check
          %p863 = pneg %p157
        $region118: #{augmented_attention_forward.3} parent=95 // pred_check_branch
          %865 = sbr.rel (%p863) target = $region120
        $region119: #{augmented_attention_forward.3} parent=95 // pred_region
          _
        $region120: #{augmented_attention_forward.3} parent=95 // pred_fallthru
          _
      $region96: #{augmented_attention_forward.3} parent=5 // pred_fallthru
        _
      %p866 = scmp.le.s32.totalorder 2, %s10
      // Predicated region
      $region121: #{augmented_attention_forward.3} parent=5 // pred_check
        %p867 = pneg %p866
      $region122: #{augmented_attention_forward.3} parent=5 // pred_check_branch
        %869 = sbr.rel (%p867) target = $region124
      $region123: #{augmented_attention_forward.3} parent=5 // pred_region
        %s870 = ssub.s32 %s10, 2
        // Predicated region
        $region125: #{augmented_attention_forward.3} parent=123 // pred_check
          %p871 = pneg %p133
        $region126: #{augmented_attention_forward.3} parent=123 // pred_check_branch
          %873 = sbr.rel (%p871) target = $region128
        $region127: #{augmented_attention_forward.3} parent=123 // pred_region
          %p874 = scmp.lt.s32.totalorder %s25, 1
          %s875 = scalar_select %p874, %s25, 1
          %p876 = scmp.lt.s32.totalorder %s26, 1
          %s877 = scalar_select %p876, %s26, 1
          %p878 = scmp.lt.s32.totalorder %s27, 1
          %s879 = scalar_select %p878, %s27, 1
          %s880 = smul.addr %s877, 2
          %s881 = sadd.s32 %s879, %s880
          %s882 = smul.addr %s875, 4
          %s883 = sadd.s32 %s881, %s882
          %s884 = scalar_lea.vmem %s2, %s883
        $region128: #{augmented_attention_forward.3} parent=123 // pred_fallthru
          _
        // Predicated region
        $region129: #{augmented_attention_forward.3} parent=123 // pred_check
          %p885 = pneg %p163
        $region130: #{augmented_attention_forward.3} parent=123 // pred_check_branch
          %887 = sbr.rel (%p885) target = $region132
        $region131: #{augmented_attention_forward.3} parent=123 // pred_region
          %p888 = scmp.lt.s32.totalorder %s25, 1
          %s889 = scalar_select %p888, %s25, 1
          %p890 = scmp.lt.s32.totalorder %s26, 1
          %s891 = scalar_select %p890, %s26, 1
          %p892 = scmp.lt.s32.totalorder %s27, 1
          %s893 = scalar_select %p892, %s27, 1
          %s894 = smul.addr %s891, 2
          %s895 = sadd.s32 %s893, %s894
          %s896 = smul.addr %s889, 4
          %s897 = sadd.s32 %s895, %s896
          %s898 = scalar_lea.vmem %s3, %s897
        $region132: #{augmented_attention_forward.3} parent=123 // pred_fallthru
          _
      $region124: #{augmented_attention_forward.3} parent=5 // pred_fallthru
        _
    $region6: #{augmented_attention_forward.3} parent=1 // loop_footer
      %s14 = sadd.s32 1, %s10
    $region7: #{augmented_attention_forward.3} parent=1 // loop_footer_branch
      %9 = sbr.rel target = $region3
    $region8: #{augmented_attention_forward.3} parent=1 // loop_exit
      _

// kernel: augmented_attention_forward.5
$region0: #{augmented_attention_forward.5}
  #allocation0 [shape = 'u32[]', space=smem, size = 0x4, offset = 0x4, fixed_abs, tag = 'smem constant byte address 0x4 - core index']
  #allocation1 [shape = 'u32[72,128]{1,0:T(1,128)}', space=vmem, size = 0x9000, scoped, tag = 'internal scratch']
  %s0 = inlined_call_operand.vmem [shape: f32[2,1024,8], index: 0, kind: input, shape index: {}]
  %s1 = inlined_call_operand.vmem [shape: f32[2,1024,8], index: 1, kind: input, shape index: {}]
  %s2 = inlined_call_operand.vmem [shape: f32[2,1,8], index: 2, kind: input, shape index: {}]
  %s3 = inlined_call_operand.vmem [shape: bf16[8,8], index: 3, kind: input, shape index: {}]
  %s4 = inlined_call_operand.vmem [shape: bf16[8,8], index: 4, kind: input, shape index: {}]
  %s5 = inlined_call_operand.vmem [shape: f32[4,8], index: 5, kind: input, shape index: {}]
  %s6 = inlined_call_operand.vmem [shape: f32[2,1024,8], index: 6, kind: output, shape index: {}]
  %s7 = sld [smem:[#allocation0]]
  $region57: #{augmented_attention_forward.5} parent=0
    _
  %s9 = ssub.s32 1, %s7
  %s10 = scalar_select 0, %s9, %s7
  loop: start=0, step=1, limit=6
  $region2: #{augmented_attention_forward.5} parent=0 // loop_pre_header
    _
  $region3: #{augmented_attention_forward.5} parent=0 // loop_header
    %s12 = sphi 0, %s16
    %p13 = scmp.ge.s32.totalorder %s12, 6
    %s19 = sphi 0, %s31
    %s20 = sphi 0, %s27
    %s21 = sphi 0, %s19
    %s22 = sphi 0, %s20
    %s23 = sphi 0, %s21
    %s24 = sphi 0, %s22
    %s36 = sphi 0, %s38
    %s39 = sphi 0, %s36
    %s40 = sphi 0, %s39
    %s56 = sphi 0, %s40
    %s64 = sphi 0, %s66
    %s67 = sphi 0, %s64
    %s68 = sphi 0, %s67
    %s84 = sphi 0, %s68
    %s90 = sphi 0, %s92
    %s93 = sphi 0, %s90
    %s94 = sphi 0, %s93
    %s110 = sphi 0, %s94
    %s114 = sphi 0, %s114
    %s116 = sphi 0, %s114
    %s117 = sphi 0, %s116
    %s131 = sphi 0, %s117
    %s135 = sphi 0, %s135
    %s137 = sphi 0, %s135
    %s138 = sphi 0, %s137
    %s152 = sphi 0, %s138
    %s156 = sphi 0, %s156
    %s158 = sphi 0, %s156
    %s159 = sphi 0, %s158
    %s173 = sphi 0, %s159
    %s181 = sphi 0, %s183
    %s184 = sphi 0, %s181
    %s185 = sphi 0, %s184
    %s201 = sphi 0, %s185
  $region4: #{augmented_attention_forward.5} parent=0 // loop_header_branch
    %15 = sbr.rel (%p13) target = $region8
  $region5: #{augmented_attention_forward.5} parent=0 // loop_body
    %s17 = ssub.s32 %s12, 1
    %s18 = ssub.s32 %s12, 2
    %s25 = sadd.s32 1, %s20
    %p26 = scmp.ge.s32.totalorder %s25, 2
    %s27 = scalar_select %p26, 0, %s25
    %s28 = sadd.s32 1, %s19
    %s29 = scalar_select %p26, %s28, %s19
    %p30 = scmp.ge.s32.totalorder %s29, 2
    %s31 = scalar_select %p30, 0, %s29
    %s32 = ssub.s32 %s19, %s31
    %s33 = ssub.s32 %s20, %s27
    %s34 = sor.u32 %s32, %s33
    %p35 = scmp.eq.s32.totalorder %s34, 0
    %s37 = sadd.s32 %s36, 1
    %s38 = scalar_select %p35, %s36, %s37
    %p41 = pneg %p35
    %p42 = scmp.eq.s32.totalorder %s12, 3
    %p43 = por %p41, %p42
    %p44 = scmp.ne.s32.totalorder %s36, %s39
    %p45 = scmp.eq.s32.totalorder %s12, 0
    %p46 = por %p44, %p45
    %p47 = scmp.ne.s32.totalorder %s36, %s39
    %p48 = scmp.eq.s32.totalorder %s17, 3
    %p49 = por %p47, %p48
    %p50 = scmp.ne.s32.totalorder %s39, %s40
    %p51 = scmp.eq.s32.totalorder %s17, 0
    %p52 = por %p50, %p51
    %p53 = scmp.ne.s32.totalorder %s39, %s40
    %p54 = scmp.eq.s32.totalorder %s18, 3
    %p55 = por %p53, %p54
    %p57 = scmp.ne.s32.totalorder %s40, %s56
    %p58 = scmp.eq.s32.totalorder %s18, 0
    %p59 = por %p57, %p58
    %s60 = ssub.s32 %s19, %s31
    %s61 = ssub.s32 %s20, %s27
    %s62 = sor.u32 %s60, %s61
    %p63 = scmp.eq.s32.totalorder %s62, 0
    %s65 = sadd.s32 %s64, 1
    %s66 = scalar_select %p63, %s64, %s65
    %p69 = pneg %p63
    %p70 = scmp.eq.s32.totalorder %s12, 3
    %p71 = por %p69, %p70
    %p72 = scmp.ne.s32.totalorder %s64, %s67
    %p73 = scmp.eq.s32.totalorder %s12, 0
    %p74 = por %p72, %p73
    %p75 = scmp.ne.s32.totalorder %s64, %s67
    %p76 = scmp.eq.s32.totalorder %s17, 3
    %p77 = por %p75, %p76
    %p78 = scmp.ne.s32.totalorder %s67, %s68
    %p79 = scmp.eq.s32.totalorder %s17, 0
    %p80 = por %p78, %p79
    %p81 = scmp.ne.s32.totalorder %s67, %s68
    %p82 = scmp.eq.s32.totalorder %s18, 3
    %p83 = por %p81, %p82
    %p85 = scmp.ne.s32.totalorder %s68, %s84
    %p86 = scmp.eq.s32.totalorder %s18, 0
    %p87 = por %p85, %p86
    %s88 = ssub.s32 %s19, %s31
    %p89 = scmp.eq.s32.totalorder %s88, 0
    %s91 = sadd.s32 %s90, 1
    %s92 = scalar_select %p89, %s90, %s91
    %p95 = pneg %p89
    %p96 = scmp.eq.s32.totalorder %s12, 3
    %p97 = por %p95, %p96
    %p98 = scmp.ne.s32.totalorder %s90, %s93
    %p99 = scmp.eq.s32.totalorder %s12, 0
    %p100 = por %p98, %p99
    %p101 = scmp.ne.s32.totalorder %s90, %s93
    %p102 = scmp.eq.s32.totalorder %s17, 3
    %p103 = por %p101, %p102
    %p104 = scmp.ne.s32.totalorder %s93, %s94
    %p105 = scmp.eq.s32.totalorder %s17, 0
    %p106 = por %p104, %p105
    %p107 = scmp.ne.s32.totalorder %s93, %s94
    %p108 = scmp.eq.s32.totalorder %s18, 3
    %p109 = por %p107, %p108
    %p111 = scmp.ne.s32.totalorder %s94, %s110
    %p112 = scmp.eq.s32.totalorder %s18, 0
    %p113 = por %p111, %p112
    %s115 = sadd.s32 %s114, 1
    %p118 = scmp.eq.s32.totalorder %s12, 3
    %p119 = scmp.ne.s32.totalorder %s114, %s116
    %p120 = scmp.eq.s32.totalorder %s12, 0
    %p121 = por %p119, %p120
    %p122 = scmp.ne.s32.totalorder %s114, %s116
    %p123 = scmp.eq.s32.totalorder %s17, 3
    %p124 = por %p122, %p123
    %p125 = scmp.ne.s32.totalorder %s116, %s117
    %p126 = scmp.eq.s32.totalorder %s17, 0
    %p127 = por %p125, %p126
    %p128 = scmp.ne.s32.totalorder %s116, %s117
    %p129 = scmp.eq.s32.totalorder %s18, 3
    %p130 = por %p128, %p129
    %p132 = scmp.ne.s32.totalorder %s117, %s131
    %p133 = scmp.eq.s32.totalorder %s18, 0
    %p134 = por %p132, %p133
    %s136 = sadd.s32 %s135, 1
    %p139 = scmp.eq.s32.totalorder %s12, 3
    %p140 = scmp.ne.s32.totalorder %s135, %s137
    %p141 = scmp.eq.s32.totalorder %s12, 0
    %p142 = por %p140, %p141
    %p143 = scmp.ne.s32.totalorder %s135, %s137
    %p144 = scmp.eq.s32.totalorder %s17, 3
    %p145 = por %p143, %p144
    %p146 = scmp.ne.s32.totalorder %s137, %s138
    %p147 = scmp.eq.s32.totalorder %s17, 0
    %p148 = por %p146, %p147
    %p149 = scmp.ne.s32.totalorder %s137, %s138
    %p150 = scmp.eq.s32.totalorder %s18, 3
    %p151 = por %p149, %p150
    %p153 = scmp.ne.s32.totalorder %s138, %s152
    %p154 = scmp.eq.s32.totalorder %s18, 0
    %p155 = por %p153, %p154
    %s157 = sadd.s32 %s156, 1
    %p160 = scmp.eq.s32.totalorder %s12, 3
    %p161 = scmp.ne.s32.totalorder %s156, %s158
    %p162 = scmp.eq.s32.totalorder %s12, 0
    %p163 = por %p161, %p162
    %p164 = scmp.ne.s32.totalorder %s156, %s158
    %p165 = scmp.eq.s32.totalorder %s17, 3
    %p166 = por %p164, %p165
    %p167 = scmp.ne.s32.totalorder %s158, %s159
    %p168 = scmp.eq.s32.totalorder %s17, 0
    %p169 = por %p167, %p168
    %p170 = scmp.ne.s32.totalorder %s158, %s159
    %p171 = scmp.eq.s32.totalorder %s18, 3
    %p172 = por %p170, %p171
    %p174 = scmp.ne.s32.totalorder %s159, %s173
    %p175 = scmp.eq.s32.totalorder %s18, 0
    %p176 = por %p174, %p175
    %s177 = ssub.s32 %s19, %s31
    %s178 = ssub.s32 %s20, %s27
    %s179 = sor.u32 %s177, %s178
    %p180 = scmp.eq.s32.totalorder %s179, 0
    %s182 = sadd.s32 %s181, 1
    %s183 = scalar_select %p180, %s181, %s182
    %p186 = pneg %p180
    %p187 = scmp.eq.s32.totalorder %s12, 3
    %p188 = por %p186, %p187
    %p189 = scmp.ne.s32.totalorder %s181, %s184
    %p190 = scmp.eq.s32.totalorder %s12, 0
    %p191 = por %p189, %p190
    %p192 = scmp.ne.s32.totalorder %s181, %s184
    %p193 = scmp.eq.s32.totalorder %s17, 3
    %p194 = por %p192, %p193
    %p195 = scmp.ne.s32.totalorder %s184, %s185
    %p196 = scmp.eq.s32.totalorder %s17, 0
    %p197 = por %p195, %p196
    %p198 = scmp.ne.s32.totalorder %s184, %s185
    %p199 = scmp.eq.s32.totalorder %s18, 3
    %p200 = por %p198, %p199
    %p202 = scmp.ne.s32.totalorder %s185, %s201
    %p203 = scmp.eq.s32.totalorder %s18, 0
    %p204 = por %p202, %p203
    %p205 = scmp.le.s32.totalorder 1, %s12
    %p206 = scmp.lt.s32.totalorder %s12, 5
    %p207 = pnand %p205, %p206
    %p208 = pneg %p207
    // Predicated region
    $region9: #{augmented_attention_forward.5} parent=5 // pred_check
      _
    $region10: #{augmented_attention_forward.5} parent=5 // pred_check_branch
      %210 = sbr.rel (%p207) target = $region12
    $region11: #{augmented_attention_forward.5} parent=5 // pred_region
      %s211 = ssub.s32 %s12, 1
      // Predicated region
      $region13: #{augmented_attention_forward.5} parent=11 // pred_check
        %p212 = pneg %p127
      $region14: #{augmented_attention_forward.5} parent=11 // pred_check_branch
        %214 = sbr.rel (%p212) target = $region16
      $region15: #{augmented_attention_forward.5} parent=11 // pred_region
        _
      $region16: #{augmented_attention_forward.5} parent=11 // pred_fallthru
        _
      // Predicated region
      $region17: #{augmented_attention_forward.5} parent=11 // pred_check
        %p215 = pneg %p148
      $region18: #{augmented_attention_forward.5} parent=11 // pred_check_branch
        %217 = sbr.rel (%p215) target = $region20
      $region19: #{augmented_attention_forward.5} parent=11 // pred_region
        _
      $region20: #{augmented_attention_forward.5} parent=11 // pred_fallthru
        _
      // Predicated region
      $region21: #{augmented_attention_forward.5} parent=11 // pred_check
        %p218 = pneg %p169
      $region22: #{augmented_attention_forward.5} parent=11 // pred_check_branch
        %220 = sbr.rel (%p218) target = $region24
      $region23: #{augmented_attention_forward.5} parent=11 // pred_region
        _
      $region24: #{augmented_attention_forward.5} parent=11 // pred_fallthru
        _
    $region12: #{augmented_attention_forward.5} parent=5 // pred_fallthru
      _
    %p221 = scmp.lt.s32.totalorder %s12, 4
    // Predicated region
    $region25: #{augmented_attention_forward.5} parent=5 // pred_check
      %p222 = pneg %p221
    $region26: #{augmented_attention_forward.5} parent=5 // pred_check_branch
      %224 = sbr.rel (%p222) target = $region28
    $region27: #{augmented_attention_forward.5} parent=5 // pred_region
      // Predicated region
      $region29: #{augmented_attention_forward.5} parent=27 // pred_check
        %p225 = pneg %p46
      $region30: #{augmented_attention_forward.5} parent=27 // pred_check_branch
        %227 = sbr.rel (%p225) target = $region32
      $region31: #{augmented_attention_forward.5} parent=27 // pred_region
        %s228 = smul.u32 64, %s20
        %p229 = scmp.lt.s32.totalorder %s19, 1
        %s230 = scalar_select %p229, %s19, 1
        %p231 = scmp.lt.s32.totalorder %s228, 127
        %s232 = scalar_select %p231, %s228, 127
        %s233 = smul.addr %s230, 128
        %s234 = sadd.s32 %s232, %s233
        %s235 = smul.addr %s234, 8
        %s236 = scalar_lea.vmem %s0, %s235
        %s237 = smul.u32 64, %s20
      $region32: #{augmented_attention_forward.5} parent=27 // pred_fallthru
        _
      // Predicated region
      $region33: #{augmented_attention_forward.5} parent=27 // pred_check
        %p238 = pneg %p74
      $region34: #{augmented_attention_forward.5} parent=27 // pred_check_branch
        %240 = sbr.rel (%p238) target = $region36
      $region35: #{augmented_attention_forward.5} parent=27 // pred_region
        %s241 = smul.u32 64, %s20
        %p242 = scmp.lt.s32.totalorder %s19, 1
        %s243 = scalar_select %p242, %s19, 1
        %p244 = scmp.lt.s32.totalorder %s241, 127
        %s245 = scalar_select %p244, %s241, 127
        %s246 = smul.addr %s243, 128
        %s247 = sadd.s32 %s245, %s246
        %s248 = smul.addr %s247, 8
        %s249 = scalar_lea.vmem %s1, %s248
        %s250 = smul.u32 64, %s20
      $region36: #{augmented_attention_forward.5} parent=27 // pred_fallthru
        _
      // Predicated region
      $region37: #{augmented_attention_forward.5} parent=27 // pred_check
        %p251 = pneg %p100
      $region38: #{augmented_attention_forward.5} parent=27 // pred_check_branch
        %253 = sbr.rel (%p251) target = $region40
      $region39: #{augmented_attention_forward.5} parent=27 // pred_region
        %p254 = scmp.lt.s32.totalorder %s19, 1
        %s255 = scalar_select %p254, %s19, 1
        %s256 = scalar_lea.vmem %s2, %s255
      $region40: #{augmented_attention_forward.5} parent=27 // pred_fallthru
        _
    $region28: #{augmented_attention_forward.5} parent=5 // pred_fallthru
      _
    %p257 = scmp.le.s32.totalorder 1, %s12
    %p258 = scmp.lt.s32.totalorder %s12, 5
    %p259 = pnand %p257, %p258
    %p260 = pneg %p259
    // Predicated region
    $region41: #{augmented_attention_forward.5} parent=5 // pred_check
      _
    $region42: #{augmented_attention_forward.5} parent=5 // pred_check_branch
      %262 = sbr.rel (%p259) target = $region44
    $region43: #{augmented_attention_forward.5} parent=5 // pred_region
      %s263 = ssub.s32 %s12, 1
      %s264 = smul.u32 64, %s22
      %p265 = scmp.lt.s32.totalorder %s21, 1
      %s266 = scalar_select %p265, %s21, 1
      %p267 = scmp.lt.s32.totalorder %s264, 127
      %s268 = scalar_select %p267, %s264, 127
      %s269 = smul.addr %s266, 128
      %s270 = sadd.s32 %s268, %s269
      %s271 = smul.addr %s270, 8
      %s272 = scalar_lea.vmem %s0, %s271
      %p273 = pneg %p52
      %p274 = pneg %p49
      %s275 = smul.u32 64, %s22
      %p276 = scmp.lt.s32.totalorder %s21, 1
      %s277 = scalar_select %p276, %s21, 1
      %p278 = scmp.lt.s32.totalorder %s275, 127
      %s279 = scalar_select %p278, %s275, 127
      %s280 = smul.addr %s277, 128
      %s281 = sadd.s32 %s279, %s280
      %s282 = smul.addr %s281, 8
      %s283 = scalar_lea.vmem %s1, %s282
      %p284 = pneg %p80
      %p285 = pneg %p77
      %p286 = scmp.lt.s32.totalorder %s21, 1
      %s287 = scalar_select %p286, %s21, 1
      %s288 = scalar_lea.vmem %s2, %s287
      %p289 = pneg %p106
      %p290 = pneg %p103
      %p291 = pneg %p127
      %p292 = pneg %p124
      %p293 = pneg %p148
      %p294 = pneg %p145
      %p295 = pneg %p169
      %p296 = pneg %p166
      %p297 = pneg %p197
      %p298 = pneg %p194
      %s299 = smul.u32 64, %s22
      %p300 = scmp.lt.s32.totalorder %s21, 1
      %s301 = scalar_select %p300, %s21, 1
      %p302 = scmp.lt.s32.totalorder %s299, 127
      %s303 = scalar_select %p302, %s299, 127
      %s304 = smul.addr %s301, 128
      %s305 = sadd.s32 %s303, %s304
      %s306 = smul.addr %s305, 8
      %s307 = scalar_lea.vmem %s6, %s306
      %s308 = smul.u32 64, %s22
      %p309 = scmp.lt.s32.totalorder %s21, 1
      %s310 = scalar_select %p309, %s21, 1
      %p311 = scmp.lt.s32.totalorder %s308, 127
      %s312 = scalar_select %p311, %s308, 127
      %s313 = smul.addr %s310, 128
      %s314 = sadd.s32 %s312, %s313
      %s315 = smul.addr %s314, 8
      %s316 = scalar_lea.vmem %s0, %s315
      %s317 = smul.u32 64, %s22
      %s318 = smul.u32 64, %s22
      %p319 = scmp.lt.s32.totalorder %s21, 1
      %s320 = scalar_select %p319, %s21, 1
      %p321 = scmp.lt.s32.totalorder %s318, 127
      %s322 = scalar_select %p321, %s318, 127
      %s323 = smul.addr %s320, 128
      %s324 = sadd.s32 %s322, %s323
      %s325 = smul.addr %s324, 8
      %s326 = scalar_lea.vmem %s1, %s325
      %s327 = smul.u32 64, %s22
      %p328 = scmp.lt.s32.totalorder %s21, 1
      %s329 = scalar_select %p328, %s21, 1
      %s330 = scalar_lea.vmem %s2, %s329
      %s331 = smul.u32 64, %s22
      %p332 = scmp.lt.s32.totalorder %s21, 1
      %s333 = scalar_select %p332, %s21, 1
      %p334 = scmp.lt.s32.totalorder %s331, 127
      %s335 = scalar_select %p334, %s331, 127
      %s336 = smul.addr %s333, 128
      %s337 = sadd.s32 %s335, %s336
      %s338 = smul.addr %s337, 8
      %s339 = scalar_lea.vmem %s6, %s338
      %s340 = smul.u32 64, %s22
      %v342 = vld [vmem:[%s316] sm:$0xff]
      %v343 = vld [vmem:[%s316 + $0x8] sm:$0xff]
      %v344 = vld [vmem:[%s316 + $0x10] sm:$0xff]
      %v345 = vld [vmem:[%s316 + $0x18] sm:$0xff]
      %v346 = vld [vmem:[%s316 + $0x20] sm:$0xff]
      %v347 = vld [vmem:[%s316 + $0x28] sm:$0xff]
      %v348 = vld [vmem:[%s316 + $0x30] sm:$0xff]
      %v349 = vld [vmem:[%s316 + $0x38] sm:$0xff]
      %v350 = vld [vmem:[%s316 + $0x40] sm:$0xff]
      %v351 = vld [vmem:[%s316 + $0x48] sm:$0xff]
      %v352 = vld [vmem:[%s316 + $0x50] sm:$0xff]
      %v353 = vld [vmem:[%s316 + $0x58] sm:$0xff]
      %v354 = vld [vmem:[%s316 + $0x60] sm:$0xff]
      %v355 = vld [vmem:[%s316 + $0x68] sm:$0xff]
      %v356 = vld [vmem:[%s316 + $0x70] sm:$0xff]
      %v357 = vld [vmem:[%s316 + $0x78] sm:$0xff]
      %v358 = vld [vmem:[%s316 + $0x80] sm:$0xff]
      %v359 = vld [vmem:[%s316 + $0x88] sm:$0xff]
      %v360 = vld [vmem:[%s316 + $0x90] sm:$0xff]
      %v361 = vld [vmem:[%s316 + $0x98] sm:$0xff]
      %v362 = vld [vmem:[%s316 + $0xa0] sm:$0xff]
      %v363 = vld [vmem:[%s316 + $0xa8] sm:$0xff]
      %v364 = vld [vmem:[%s316 + $0xb0] sm:$0xff]
      %v365 = vld [vmem:[%s316 + $0xb8] sm:$0xff]
      %v366 = vld [vmem:[%s316 + $0xc0] sm:$0xff]
      %v367 = vld [vmem:[%s316 + $0xc8] sm:$0xff]
      %v368 = vld [vmem:[%s316 + $0xd0] sm:$0xff]
      %v369 = vld [vmem:[%s316 + $0xd8] sm:$0xff]
      %v370 = vld [vmem:[%s316 + $0xe0] sm:$0xff]
      %v371 = vld [vmem:[%s316 + $0xe8] sm:$0xff]
      %v372 = vld [vmem:[%s316 + $0xf0] sm:$0xff]
      %v373 = vld [vmem:[%s316 + $0xf8] sm:$0xff]
      %v374 = vld [vmem:[%s316 + $0x100] sm:$0xff]
      %v375 = vld [vmem:[%s316 + $0x108] sm:$0xff]
      %v376 = vld [vmem:[%s316 + $0x110] sm:$0xff]
      %v377 = vld [vmem:[%s316 + $0x118] sm:$0xff]
      %v378 = vld [vmem:[%s316 + $0x120] sm:$0xff]
      %v379 = vld [vmem:[%s316 + $0x128] sm:$0xff]
      %v380 = vld [vmem:[%s316 + $0x130] sm:$0xff]
      %v381 = vld [vmem:[%s316 + $0x138] sm:$0xff]
      %v382 = vld [vmem:[%s316 + $0x140] sm:$0xff]
      %v383 = vld [vmem:[%s316 + $0x148] sm:$0xff]
      %v384 = vld [vmem:[%s316 + $0x150] sm:$0xff]
      %v385 = vld [vmem:[%s316 + $0x158] sm:$0xff]
      %v386 = vld [vmem:[%s316 + $0x160] sm:$0xff]
      %v387 = vld [vmem:[%s316 + $0x168] sm:$0xff]
      %v388 = vld [vmem:[%s316 + $0x170] sm:$0xff]
      %v389 = vld [vmem:[%s316 + $0x178] sm:$0xff]
      %v390 = vld [vmem:[%s316 + $0x180] sm:$0xff]
      %v391 = vld [vmem:[%s316 + $0x188] sm:$0xff]
      %v392 = vld [vmem:[%s316 + $0x190] sm:$0xff]
      %v393 = vld [vmem:[%s316 + $0x198] sm:$0xff]
      %v394 = vld [vmem:[%s316 + $0x1a0] sm:$0xff]
      %v395 = vld [vmem:[%s316 + $0x1a8] sm:$0xff]
      %v396 = vld [vmem:[%s316 + $0x1b0] sm:$0xff]
      %v397 = vld [vmem:[%s316 + $0x1b8] sm:$0xff]
      %v398 = vld [vmem:[%s316 + $0x1c0] sm:$0xff]
      %v399 = vld [vmem:[%s316 + $0x1c8] sm:$0xff]
      %v400 = vld [vmem:[%s316 + $0x1d0] sm:$0xff]
      %v401 = vld [vmem:[%s316 + $0x1d8] sm:$0xff]
      %v402 = vld [vmem:[%s316 + $0x1e0] sm:$0xff]
      %v403 = vld [vmem:[%s316 + $0x1e8] sm:$0xff]
      %v404 = vld [vmem:[%s316 + $0x1f0] sm:$0xff]
      %v405 = vld [vmem:[%s316 + $0x1f8] sm:$0xff]
      %v406 = vld [vmem:[%s326] sm:$0xff]
      %v407 = vld [vmem:[%s326 + $0x8] sm:$0xff]
      %v408 = vld [vmem:[%s326 + $0x10] sm:$0xff]
      %v409 = vld [vmem:[%s326 + $0x18] sm:$0xff]
      %v410 = vld [vmem:[%s326 + $0x20] sm:$0xff]
      %v411 = vld [vmem:[%s326 + $0x28] sm:$0xff]
      %v412 = vld [vmem:[%s326 + $0x30] sm:$0xff]
      %v413 = vld [vmem:[%s326 + $0x38] sm:$0xff]
      %v414 = vld [vmem:[%s326 + $0x40] sm:$0xff]
      %v415 = vld [vmem:[%s326 + $0x48] sm:$0xff]
      %v416 = vld [vmem:[%s326 + $0x50] sm:$0xff]
      %v417 = vld [vmem:[%s326 + $0x58] sm:$0xff]
      %v418 = vld [vmem:[%s326 + $0x60] sm:$0xff]
      %v419 = vld [vmem:[%s326 + $0x68] sm:$0xff]
      %v420 = vld [vmem:[%s326 + $0x70] sm:$0xff]
      %v421 = vld [vmem:[%s326 + $0x78] sm:$0xff]
      %v422 = vld [vmem:[%s326 + $0x80] sm:$0xff]
      %v423 = vld [vmem:[%s326 + $0x88] sm:$0xff]
      %v424 = vld [vmem:[%s326 + $0x90] sm:$0xff]
      %v425 = vld [vmem:[%s326 + $0x98] sm:$0xff]
      %v426 = vld [vmem:[%s326 + $0xa0] sm:$0xff]
      %v427 = vld [vmem:[%s326 + $0xa8] sm:$0xff]
      %v428 = vld [vmem:[%s326 + $0xb0] sm:$0xff]
      %v429 = vld [vmem:[%s326 + $0xb8] sm:$0xff]
      %v430 = vld [vmem:[%s326 + $0xc0] sm:$0xff]
      %v431 = vld [vmem:[%s326 + $0xc8] sm:$0xff]
      %v432 = vld [vmem:[%s326 + $0xd0] sm:$0xff]
      %v433 = vld [vmem:[%s326 + $0xd8] sm:$0xff]
      %v434 = vld [vmem:[%s326 + $0xe0] sm:$0xff]
      %v435 = vld [vmem:[%s326 + $0xe8] sm:$0xff]
      %v436 = vld [vmem:[%s326 + $0xf0] sm:$0xff]
      %v437 = vld [vmem:[%s326 + $0xf8] sm:$0xff]
      %v438 = vld [vmem:[%s326 + $0x100] sm:$0xff]
      %v439 = vld [vmem:[%s326 + $0x108] sm:$0xff]
      %v440 = vld [vmem:[%s326 + $0x110] sm:$0xff]
      %v441 = vld [vmem:[%s326 + $0x118] sm:$0xff]
      %v442 = vld [vmem:[%s326 + $0x120] sm:$0xff]
      %v443 = vld [vmem:[%s326 + $0x128] sm:$0xff]
      %v444 = vld [vmem:[%s326 + $0x130] sm:$0xff]
      %v445 = vld [vmem:[%s326 + $0x138] sm:$0xff]
      %v446 = vld [vmem:[%s326 + $0x140] sm:$0xff]
      %v447 = vld [vmem:[%s326 + $0x148] sm:$0xff]
      %v448 = vld [vmem:[%s326 + $0x150] sm:$0xff]
      %v449 = vld [vmem:[%s326 + $0x158] sm:$0xff]
      %v450 = vld [vmem:[%s326 + $0x160] sm:$0xff]
      %v451 = vld [vmem:[%s326 + $0x168] sm:$0xff]
      %v452 = vld [vmem:[%s326 + $0x170] sm:$0xff]
      %v453 = vld [vmem:[%s326 + $0x178] sm:$0xff]
      %v454 = vld [vmem:[%s326 + $0x180] sm:$0xff]
      %v455 = vld [vmem:[%s326 + $0x188] sm:$0xff]
      %v456 = vld [vmem:[%s326 + $0x190] sm:$0xff]
      %v457 = vld [vmem:[%s326 + $0x198] sm:$0xff]
      %v458 = vld [vmem:[%s326 + $0x1a0] sm:$0xff]
      %v459 = vld [vmem:[%s326 + $0x1a8] sm:$0xff]
      %v460 = vld [vmem:[%s326 + $0x1b0] sm:$0xff]
      %v461 = vld [vmem:[%s326 + $0x1b8] sm:$0xff]
      %v462 = vld [vmem:[%s326 + $0x1c0] sm:$0xff]
      %v463 = vld [vmem:[%s326 + $0x1c8] sm:$0xff]
      %v464 = vld [vmem:[%s326 + $0x1d0] sm:$0xff]
      %v465 = vld [vmem:[%s326 + $0x1d8] sm:$0xff]
      %v466 = vld [vmem:[%s326 + $0x1e0] sm:$0xff]
      %v467 = vld [vmem:[%s326 + $0x1e8] sm:$0xff]
      %v468 = vld [vmem:[%s326 + $0x1f0] sm:$0xff]
      %v469 = vld [vmem:[%s326 + $0x1f8] sm:$0xff]
      %v470 = vld [vmem:[%s330] sm:$0x1]
      %v471 = vld [vmem:[%s5] sm:$0x1]
      %v472 = vld [vmem:[%s5 + $0x1] sm:$0x1]
      %v473 = vld [vmem:[%s5 + $0x2] sm:$0x1]
      %v474 = vld [vmem:[%s5 + $0x3] sm:$0x1]
      %v476 = vperm.slane %v470, 0
      %v478 = vmul.f32 %v406, %v476
      %v479 = vmul.f32 %v407, %v476
      %v480 = vmul.f32 %v408, %v476
      %v481 = vmul.f32 %v409, %v476
      %v482 = vmul.f32 %v410, %v476
      %v483 = vmul.f32 %v411, %v476
      %v484 = vmul.f32 %v412, %v476
      %v485 = vmul.f32 %v413, %v476
      %v486 = vmul.f32 %v414, %v476
      %v487 = vmul.f32 %v415, %v476
      %v488 = vmul.f32 %v416, %v476
      %v489 = vmul.f32 %v417, %v476
      %v490 = vmul.f32 %v418, %v476
      %v491 = vmul.f32 %v419, %v476
      %v492 = vmul.f32 %v420, %v476
      %v493 = vmul.f32 %v421, %v476
      %v494 = vmul.f32 %v422, %v476
      %v495 = vmul.f32 %v423, %v476
      %v496 = vmul.f32 %v424, %v476
      %v497 = vmul.f32 %v425, %v476
      %v498 = vmul.f32 %v426, %v476
      %v499 = vmul.f32 %v427, %v476
      %v500 = vmul.f32 %v428, %v476
      %v501 = vmul.f32 %v429, %v476
      %v502 = vmul.f32 %v430, %v476
      %v503 = vmul.f32 %v431, %v476
      %v504 = vmul.f32 %v432, %v476
      %v505 = vmul.f32 %v433, %v476
      %v506 = vmul.f32 %v434, %v476
      %v507 = vmul.f32 %v435, %v476
      %v508 = vmul.f32 %v436, %v476
      %v509 = vmul.f32 %v437, %v476
      %v510 = vmul.f32 %v438, %v476
      %v511 = vmul.f32 %v439, %v476
      %v512 = vmul.f32 %v440, %v476
      %v513 = vmul.f32 %v441, %v476
      %v514 = vmul.f32 %v442, %v476
      %v515 = vmul.f32 %v443, %v476
      %v516 = vmul.f32 %v444, %v476
      %v517 = vmul.f32 %v445, %v476
      %v518 = vmul.f32 %v446, %v476
      %v519 = vmul.f32 %v447, %v476
      %v520 = vmul.f32 %v448, %v476
      %v521 = vmul.f32 %v449, %v476
      %v522 = vmul.f32 %v450, %v476
      %v523 = vmul.f32 %v451, %v476
      %v524 = vmul.f32 %v452, %v476
      %v525 = vmul.f32 %v453, %v476
      %v526 = vmul.f32 %v454, %v476
      %v527 = vmul.f32 %v455, %v476
      %v528 = vmul.f32 %v456, %v476
      %v529 = vmul.f32 %v457, %v476
      %v530 = vmul.f32 %v458, %v476
      %v531 = vmul.f32 %v459, %v476
      %v532 = vmul.f32 %v460, %v476
      %v533 = vmul.f32 %v461, %v476
      %v534 = vmul.f32 %v462, %v476
      %v535 = vmul.f32 %v463, %v476
      %v536 = vmul.f32 %v464, %v476
      %v537 = vmul.f32 %v465, %v476
      %v538 = vmul.f32 %v466, %v476
      %v539 = vmul.f32 %v467, %v476
      %v540 = vmul.f32 %v468, %v476
      %v541 = vmul.f32 %v469, %v476
      %v542 = vpack.c.bf16 %v343, %v342
      %v543 = vpack.c.bf16 %v345, %v344
      %v544 = vpack.c.bf16 %v347, %v346
      %v545 = vpack.c.bf16 %v349, %v348
      %v546 = vpack.c.bf16 %v351, %v350
      %v547 = vpack.c.bf16 %v353, %v352
      %v548 = vpack.c.bf16 %v355, %v354
      %v549 = vpack.c.bf16 %v357, %v356
      %v550 = vpack.c.bf16 %v359, %v358
      %v551 = vpack.c.bf16 %v361, %v360
      %v552 = vpack.c.bf16 %v363, %v362
      %v553 = vpack.c.bf16 %v365, %v364
      %v554 = vpack.c.bf16 %v367, %v366
      %v555 = vpack.c.bf16 %v369, %v368
      %v556 = vpack.c.bf16 %v371, %v370
      %v557 = vpack.c.bf16 %v373, %v372
      %v558 = vpack.c.bf16 %v375, %v374
      %v559 = vpack.c.bf16 %v377, %v376
      %v560 = vpack.c.bf16 %v379, %v378
      %v561 = vpack.c.bf16 %v381, %v380
      %v562 = vpack.c.bf16 %v383, %v382
      %v563 = vpack.c.bf16 %v385, %v384
      %v564 = vpack.c.bf16 %v387, %v386
      %v565 = vpack.c.bf16 %v389, %v388
      %v566 = vpack.c.bf16 %v391, %v390
      %v567 = vpack.c.bf16 %v393, %v392
      %v568 = vpack.c.bf16 %v395, %v394
      %v569 = vpack.c.bf16 %v397, %v396
      %v570 = vpack.c.bf16 %v399, %v398
      %v571 = vpack.c.bf16 %v401, %v400
      %v572 = vpack.c.bf16 %v403, %v402
      %v573 = vpack.c.bf16 %v405, %v404
      %v574 = vld [vmem:[%s3] sm:$0xf]
      %v575 = vperm.slane %v471, 0
      %vm576 = vcmask 64512
      %v578 = vsel %vm576, %v542, 0
      %v581 = vsel %vm576, %v543, 0
      %v584 = vsel %vm576, %v544, 0
      %v587 = vsel %vm576, %v545, 0
      %v590 = vsel %vm576, %v546, 0
      %v593 = vsel %vm576, %v547, 0
      %v596 = vsel %vm576, %v548, 0
      %v599 = vsel %vm576, %v549, 0
      %v602 = vsel %vm576, %v550, 0
      %v605 = vsel %vm576, %v551, 0
      %v608 = vsel %vm576, %v552, 0
      %v611 = vsel %vm576, %v553, 0
      %v614 = vsel %vm576, %v554, 0
      %v617 = vsel %vm576, %v555, 0
      %v620 = vsel %vm576, %v556, 0
      %v623 = vsel %vm576, %v557, 0
      %v626 = vsel %vm576, %v558, 0
      %v629 = vsel %vm576, %v559, 0
      %v632 = vsel %vm576, %v560, 0
      %v635 = vsel %vm576, %v561, 0
      %v638 = vsel %vm576, %v562, 0
      %v641 = vsel %vm576, %v563, 0
      %v644 = vsel %vm576, %v564, 0
      %v647 = vsel %vm576, %v565, 0
      %v650 = vsel %vm576, %v566, 0
      %v653 = vsel %vm576, %v567, 0
      %v656 = vsel %vm576, %v568, 0
      %v659 = vsel %vm576, %v569, 0
      %v662 = vsel %vm576, %v570, 0
      %v665 = vsel %vm576, %v571, 0
      %v668 = vsel %vm576, %v572, 0
      %v671 = vsel %vm576, %v573, 0
      %vm673 = vcmask 1043456
      %v675 = vsel %vm673, %v574, 0
      %677 = vmatpush.bf16.msra.mxu0 0
      %678 = vmatpush.bf16.msra.mxu0 0
      %679 = vmatpush.bf16.msra.mxu0 0
      %680 = vmatpush.bf16.msra.mxu0 0
      %681 = vmatpush.bf16.msra.mxu0 0
      %682 = vmatpush.bf16.msra.mxu0 0
      %683 = vmatpush.bf16.msra.mxu0 0
      %684 = vmatpush.bf16.msra.mxu0 %v675
      %685 = vmatmul.bf16.gmra.mxu0 %v578
      %v686 = vpop.f32.mrf.mxu0
      %v687 = vadd.f32 %v575, %v686
      %v688 = vpop.f32.mrf.mxu0
      %v689 = vadd.f32 %v575, %v688
      %690 = vmatmul.bf16.gmra.mxu0 %v581
      %v691 = vpop.f32.mrf.mxu0
      %v692 = vadd.f32 %v575, %v691
      %v693 = vpop.f32.mrf.mxu0
      %v694 = vadd.f32 %v575, %v693
      %695 = vmatmul.bf16.gmra.mxu0 %v584
      %v696 = vpop.f32.mrf.mxu0
      %v697 = vadd.f32 %v575, %v696
      %v698 = vpop.f32.mrf.mxu0
      %v699 = vadd.f32 %v575, %v698
      %700 = vmatmul.bf16.gmra.mxu0 %v587
      %v701 = vpop.f32.mrf.mxu0
      %v702 = vadd.f32 %v575, %v701
      %v703 = vpop.f32.mrf.mxu0
      %v704 = vadd.f32 %v575, %v703
      %705 = vmatmul.bf16.gmra.mxu0 %v590
      %v706 = vpop.f32.mrf.mxu0
      %v707 = vadd.f32 %v575, %v706
      %v708 = vpop.f32.mrf.mxu0
      %v709 = vadd.f32 %v575, %v708
      %710 = vmatmul.bf16.gmra.mxu0 %v593
      %v711 = vpop.f32.mrf.mxu0
      %v712 = vadd.f32 %v575, %v711
      %v713 = vpop.f32.mrf.mxu0
      %v714 = vadd.f32 %v575, %v713
      %715 = vmatmul.bf16.gmra.mxu0 %v596
      %v716 = vpop.f32.mrf.mxu0
      %v717 = vadd.f32 %v575, %v716
      %v718 = vpop.f32.mrf.mxu0
      %v719 = vadd.f32 %v575, %v718
      %720 = vmatmul.bf16.gmra.mxu0 %v599
      %v721 = vpop.f32.mrf.mxu0
      %v722 = vadd.f32 %v575, %v721
      %v723 = vpop.f32.mrf.mxu0
      %v724 = vadd.f32 %v575, %v723
      %725 = vmatmul.bf16.gmra.mxu0 %v602
      %v726 = vpop.f32.mrf.mxu0
      %v727 = vadd.f32 %v575, %v726
      %v728 = vpop.f32.mrf.mxu0
      %v729 = vadd.f32 %v575, %v728
      %730 = vmatmul.bf16.gmra.mxu0 %v605
      %v731 = vpop.f32.mrf.mxu0
      %v732 = vadd.f32 %v575, %v731
      %v733 = vpop.f32.mrf.mxu0
      %v734 = vadd.f32 %v575, %v733
      %735 = vmatmul.bf16.gmra.mxu0 %v608
      %v736 = vpop.f32.mrf.mxu0
      %v737 = vadd.f32 %v575, %v736
      %v738 = vpop.f32.mrf.mxu0
      %v739 = vadd.f32 %v575, %v738
      %740 = vmatmul.bf16.gmra.mxu0 %v611
      %v741 = vpop.f32.mrf.mxu0
      %v742 = vadd.f32 %v575, %v741
      %v743 = vpop.f32.mrf.mxu0
      %v744 = vadd.f32 %v575, %v743
      %745 = vmatmul.bf16.gmra.mxu0 %v614
      %v746 = vpop.f32.mrf.mxu0
      %v747 = vadd.f32 %v575, %v746
      %v748 = vpop.f32.mrf.mxu0
      %v749 = vadd.f32 %v575, %v748
      %750 = vmatmul.bf16.gmra.mxu0 %v617
      %v751 = vpop.f32.mrf.mxu0
      %v752 = vadd.f32 %v575, %v751
      %v753 = vpop.f32.mrf.mxu0
      %v754 = vadd.f32 %v575, %v753
      %755 = vmatmul.bf16.gmra.mxu0 %v620
      %v756 = vpop.f32.mrf.mxu0
      %v757 = vadd.f32 %v575, %v756
      %v758 = vpop.f32.mrf.mxu0
      %v759 = vadd.f32 %v575, %v758
      %760 = vmatmul.bf16.gmra.mxu0 %v623
      %v761 = vpop.f32.mrf.mxu0
      %v762 = vadd.f32 %v575, %v761
      %v763 = vpop.f32.mrf.mxu0
      %v764 = vadd.f32 %v575, %v763
      %765 = vmatmul.bf16.gmra.mxu0 %v626
      %v766 = vpop.f32.mrf.mxu0
      %v767 = vadd.f32 %v575, %v766
      %v768 = vpop.f32.mrf.mxu0
      %v769 = vadd.f32 %v575, %v768
      %770 = vmatmul.bf16.gmra.mxu0 %v629
      %v771 = vpop.f32.mrf.mxu0
      %v772 = vadd.f32 %v575, %v771
      %v773 = vpop.f32.mrf.mxu0
      %v774 = vadd.f32 %v575, %v773
      %775 = vmatmul.bf16.gmra.mxu0 %v632
      %v776 = vpop.f32.mrf.mxu0
      %v777 = vadd.f32 %v575, %v776
      %v778 = vpop.f32.mrf.mxu0
      %v779 = vadd.f32 %v575, %v778
      %780 = vmatmul.bf16.gmra.mxu0 %v635
      %v781 = vpop.f32.mrf.mxu0
      %v782 = vadd.f32 %v575, %v781
      %v783 = vpop.f32.mrf.mxu0
      %v784 = vadd.f32 %v575, %v783
      %785 = vmatmul.bf16.gmra.mxu0 %v638
      %v786 = vpop.f32.mrf.mxu0
      %v787 = vadd.f32 %v575, %v786
      %v788 = vpop.f32.mrf.mxu0
      %v789 = vadd.f32 %v575, %v788
      %790 = vmatmul.bf16.gmra.mxu0 %v641
      %v791 = vpop.f32.mrf.mxu0
      %v792 = vadd.f32 %v575, %v791
      %v793 = vpop.f32.mrf.mxu0
      %v794 = vadd.f32 %v575, %v793
      %795 = vmatmul.bf16.gmra.mxu0 %v644
      %v796 = vpop.f32.mrf.mxu0
      %v797 = vadd.f32 %v575, %v796
      %v798 = vpop.f32.mrf.mxu0
      %v799 = vadd.f32 %v575, %v798
      %800 = vmatmul.bf16.gmra.mxu0 %v647
      %v801 = vpop.f32.mrf.mxu0
      %v802 = vadd.f32 %v575, %v801
      %v803 = vpop.f32.mrf.mxu0
      %v804 = vadd.f32 %v575, %v803
      %805 = vmatmul.bf16.gmra.mxu0 %v650
      %v806 = vpop.f32.mrf.mxu0
      %v807 = vadd.f32 %v575, %v806
      %v808 = vpop.f32.mrf.mxu0
      %v809 = vadd.f32 %v575, %v808
      %810 = vmatmul.bf16.gmra.mxu0 %v653
      %v811 = vpop.f32.mrf.mxu0
      %v812 = vadd.f32 %v575, %v811
      %v813 = vpop.f32.mrf.mxu0
      %v814 = vadd.f32 %v575, %v813
      %815 = vmatmul.bf16.gmra.mxu0 %v656
      %v816 = vpop.f32.mrf.mxu0
      %v817 = vadd.f32 %v575, %v816
      %v818 = vpop.f32.mrf.mxu0
      %v819 = vadd.f32 %v575, %v818
      %820 = vmatmul.bf16.gmra.mxu0 %v659
      %v821 = vpop.f32.mrf.mxu0
      %v822 = vadd.f32 %v575, %v821
      %v823 = vpop.f32.mrf.mxu0
      %v824 = vadd.f32 %v575, %v823
      %825 = vmatmul.bf16.gmra.mxu0 %v662
      %v826 = vpop.f32.mrf.mxu0
      %v827 = vadd.f32 %v575, %v826
      %v828 = vpop.f32.mrf.mxu0
      %v829 = vadd.f32 %v575, %v828
      %830 = vmatmul.bf16.gmra.mxu0 %v665
      %v831 = vpop.f32.mrf.mxu0
      %v832 = vadd.f32 %v575, %v831
      %v833 = vpop.f32.mrf.mxu0
      %v834 = vadd.f32 %v575, %v833
      %835 = vmatmul.bf16.gmra.mxu0 %v668
      %v836 = vpop.f32.mrf.mxu0
      %v837 = vadd.f32 %v575, %v836
      %v838 = vpop.f32.mrf.mxu0
      %v839 = vadd.f32 %v575, %v838
      %840 = vmatmul.bf16.gmra.mxu0 %v671
      %v841 = vpop.f32.mrf.mxu0
      %v842 = vadd.f32 %v575, %v841
      %v843 = vpop.f32.mrf.mxu0
      %v844 = vadd.f32 %v575, %v843
      %845 = vdwg.mxu0
      %v846 = vpack.c.bf16 %v479, %v478
      %v847 = vpack.c.bf16 %v481, %v480
      %v848 = vpack.c.bf16 %v483, %v482
      %v849 = vpack.c.bf16 %v485, %v484
      %v850 = vpack.c.bf16 %v487, %v486
      %v851 = vpack.c.bf16 %v489, %v488
      %v852 = vpack.c.bf16 %v491, %v490
      %v853 = vpack.c.bf16 %v493, %v492
      %v854 = vpack.c.bf16 %v495, %v494
      %v855 = vpack.c.bf16 %v497, %v496
      %v856 = vpack.c.bf16 %v499, %v498
      %v857 = vpack.c.bf16 %v501, %v500
      %v858 = vpack.c.bf16 %v503, %v502
      %v859 = vpack.c.bf16 %v505, %v504
      %v860 = vpack.c.bf16 %v507, %v506
      %v861 = vpack.c.bf16 %v509, %v508
      %v862 = vpack.c.bf16 %v511, %v510
      %v863 = vpack.c.bf16 %v513, %v512
      %v864 = vpack.c.bf16 %v515, %v514
      %v865 = vpack.c.bf16 %v517, %v516
      %v866 = vpack.c.bf16 %v519, %v518
      %v867 = vpack.c.bf16 %v521, %v520
      %v868 = vpack.c.bf16 %v523, %v522
      %v869 = vpack.c.bf16 %v525, %v524
      %v870 = vpack.c.bf16 %v527, %v526
      %v871 = vpack.c.bf16 %v529, %v528
      %v872 = vpack.c.bf16 %v531, %v530
      %v873 = vpack.c.bf16 %v533, %v532
      %v874 = vpack.c.bf16 %v535, %v534
      %v875 = vpack.c.bf16 %v537, %v536
      %v876 = vpack.c.bf16 %v539, %v538
      %v877 = vpack.c.bf16 %v541, %v540
      %v878 = vld [vmem:[%s4] sm:$0xf]
      %v879 = vperm.slane %v472, 0
      %v881 = vsel %vm576, %v846, 0
      %v884 = vsel %vm576, %v847, 0
      %v887 = vsel %vm576, %v848, 0
      %v890 = vsel %vm576, %v849, 0
      %v893 = vsel %vm576, %v850, 0
      %v896 = vsel %vm576, %v851, 0
      %v899 = vsel %vm576, %v852, 0
      %v902 = vsel %vm576, %v853, 0
      %v905 = vsel %vm576, %v854, 0
      %v908 = vsel %vm576, %v855, 0
      %v911 = vsel %vm576, %v856, 0
      %v914 = vsel %vm576, %v857, 0
      %v917 = vsel %vm576, %v858, 0
      %v920 = vsel %vm576, %v859, 0
      %v923 = vsel %vm576, %v860, 0
      %v926 = vsel %vm576, %v861, 0
      %v929 = vsel %vm576, %v862, 0
      %v932 = vsel %vm576, %v863, 0
      %v935 = vsel %vm576, %v864, 0
      %v938 = vsel %vm576, %v865, 0
      %v941 = vsel %vm576, %v866, 0
      %v944 = vsel %vm576, %v867, 0
      %v947 = vsel %vm576, %v868, 0
      %v950 = vsel %vm576, %v869, 0
      %v953 = vsel %vm576, %v870, 0
      %v956 = vsel %vm576, %v871, 0
      %v959 = vsel %vm576, %v872, 0
      %v962 = vsel %vm576, %v873, 0
      %v965 = vsel %vm576, %v874, 0
      %v968 = vsel %vm576, %v875, 0
      %v971 = vsel %vm576, %v876, 0
      %v974 = vsel %vm576, %v877, 0
      %v977 = vsel %vm673, %v878, 0
      %979 = vmatpush.bf16.msra.mxu0 0
      %980 = vmatpush.bf16.msra.mxu0 0
      %981 = vmatpush.bf16.msra.mxu0 0
      %982 = vmatpush.bf16.msra.mxu0 0
      %983 = vmatpush.bf16.msra.mxu0 0
      %984 = vmatpush.bf16.msra.mxu0 0
      %985 = vmatpush.bf16.msra.mxu0 0
      %986 = vmatpush.bf16.msra.mxu0 %v977
      %987 = vmatmul.bf16.gmra.mxu0 %v881
      %v988 = vpop.f32.mrf.mxu0
      %v989 = vadd.f32 %v879, %v988
      %v990 = vpop.f32.mrf.mxu0
      %v991 = vadd.f32 %v879, %v990
      %992 = vmatmul.bf16.gmra.mxu0 %v884
      %v993 = vpop.f32.mrf.mxu0
      %v994 = vadd.f32 %v879, %v993
      %v995 = vpop.f32.mrf.mxu0
      %v996 = vadd.f32 %v879, %v995
      %997 = vmatmul.bf16.gmra.mxu0 %v887
      %v998 = vpop.f32.mrf.mxu0
      %v999 = vadd.f32 %v879, %v998
      %v1000 = vpop.f32.mrf.mxu0
      %v1001 = vadd.f32 %v879, %v1000
      %1002 = vmatmul.bf16.gmra.mxu0 %v890
      %v1003 = vpop.f32.mrf.mxu0
      %v1004 = vadd.f32 %v879, %v1003
      %v1005 = vpop.f32.mrf.mxu0
      %v1006 = vadd.f32 %v879, %v1005
      %1007 = vmatmul.bf16.gmra.mxu0 %v893
      %v1008 = vpop.f32.mrf.mxu0
      %v1009 = vadd.f32 %v879, %v1008
      %v1010 = vpop.f32.mrf.mxu0
      %v1011 = vadd.f32 %v879, %v1010
      %1012 = vmatmul.bf16.gmra.mxu0 %v896
      %v1013 = vpop.f32.mrf.mxu0
      %v1014 = vadd.f32 %v879, %v1013
      %v1015 = vpop.f32.mrf.mxu0
      %v1016 = vadd.f32 %v879, %v1015
      %1017 = vmatmul.bf16.gmra.mxu0 %v899
      %v1018 = vpop.f32.mrf.mxu0
      %v1019 = vadd.f32 %v879, %v1018
      %v1020 = vpop.f32.mrf.mxu0
      %v1021 = vadd.f32 %v879, %v1020
      %1022 = vmatmul.bf16.gmra.mxu0 %v902
      %v1023 = vpop.f32.mrf.mxu0
      %v1024 = vadd.f32 %v879, %v1023
      %v1025 = vpop.f32.mrf.mxu0
      %v1026 = vadd.f32 %v879, %v1025
      %1027 = vmatmul.bf16.gmra.mxu0 %v905
      %v1028 = vpop.f32.mrf.mxu0
      %v1029 = vadd.f32 %v879, %v1028
      %v1030 = vpop.f32.mrf.mxu0
      %v1031 = vadd.f32 %v879, %v1030
      %1032 = vmatmul.bf16.gmra.mxu0 %v908
      %v1033 = vpop.f32.mrf.mxu0
      %v1034 = vadd.f32 %v879, %v1033
      %v1035 = vpop.f32.mrf.mxu0
      %v1036 = vadd.f32 %v879, %v1035
      %1037 = vmatmul.bf16.gmra.mxu0 %v911
      %v1038 = vpop.f32.mrf.mxu0
      %v1039 = vadd.f32 %v879, %v1038
      %v1040 = vpop.f32.mrf.mxu0
      %v1041 = vadd.f32 %v879, %v1040
      %1042 = vmatmul.bf16.gmra.mxu0 %v914
      %v1043 = vpop.f32.mrf.mxu0
      %v1044 = vadd.f32 %v879, %v1043
      %v1045 = vpop.f32.mrf.mxu0
      %v1046 = vadd.f32 %v879, %v1045
      %1047 = vmatmul.bf16.gmra.mxu0 %v917
      %v1048 = vpop.f32.mrf.mxu0
      %v1049 = vadd.f32 %v879, %v1048
      %v1050 = vpop.f32.mrf.mxu0
      %v1051 = vadd.f32 %v879, %v1050
      %1052 = vmatmul.bf16.gmra.mxu0 %v920
      %v1053 = vpop.f32.mrf.mxu0
      %v1054 = vadd.f32 %v879, %v1053
      %v1055 = vpop.f32.mrf.mxu0
      %v1056 = vadd.f32 %v879, %v1055
      %1057 = vmatmul.bf16.gmra.mxu0 %v923
      %v1058 = vpop.f32.mrf.mxu0
      %v1059 = vadd.f32 %v879, %v1058
      %v1060 = vpop.f32.mrf.mxu0
      %v1061 = vadd.f32 %v879, %v1060
      %1062 = vmatmul.bf16.gmra.mxu0 %v926
      %v1063 = vpop.f32.mrf.mxu0
      %v1064 = vadd.f32 %v879, %v1063
      %v1065 = vpop.f32.mrf.mxu0
      %v1066 = vadd.f32 %v879, %v1065
      %1067 = vmatmul.bf16.gmra.mxu0 %v929
      %v1068 = vpop.f32.mrf.mxu0
      %v1069 = vadd.f32 %v879, %v1068
      %v1070 = vpop.f32.mrf.mxu0
      %v1071 = vadd.f32 %v879, %v1070
      %1072 = vmatmul.bf16.gmra.mxu0 %v932
      %v1073 = vpop.f32.mrf.mxu0
      %v1074 = vadd.f32 %v879, %v1073
      %v1075 = vpop.f32.mrf.mxu0
      %v1076 = vadd.f32 %v879, %v1075
      %1077 = vmatmul.bf16.gmra.mxu0 %v935
      %v1078 = vpop.f32.mrf.mxu0
      %v1079 = vadd.f32 %v879, %v1078
      %v1080 = vpop.f32.mrf.mxu0
      %v1081 = vadd.f32 %v879, %v1080
      %1082 = vmatmul.bf16.gmra.mxu0 %v938
      %v1083 = vpop.f32.mrf.mxu0
      %v1084 = vadd.f32 %v879, %v1083
      %v1085 = vpop.f32.mrf.mxu0
      %v1086 = vadd.f32 %v879, %v1085
      %1087 = vmatmul.bf16.gmra.mxu0 %v941
      %v1088 = vpop.f32.mrf.mxu0
      %v1089 = vadd.f32 %v879, %v1088
      %v1090 = vpop.f32.mrf.mxu0
      %v1091 = vadd.f32 %v879, %v1090
      %1092 = vmatmul.bf16.gmra.mxu0 %v944
      %v1093 = vpop.f32.mrf.mxu0
      %v1094 = vadd.f32 %v879, %v1093
      %v1095 = vpop.f32.mrf.mxu0
      %v1096 = vadd.f32 %v879, %v1095
      %1097 = vmatmul.bf16.gmra.mxu0 %v947
      %v1098 = vpop.f32.mrf.mxu0
      %v1099 = vadd.f32 %v879, %v1098
      %v1100 = vpop.f32.mrf.mxu0
      %v1101 = vadd.f32 %v879, %v1100
      %1102 = vmatmul.bf16.gmra.mxu0 %v950
      %v1103 = vpop.f32.mrf.mxu0
      %v1104 = vadd.f32 %v879, %v1103
      %v1105 = vpop.f32.mrf.mxu0
      %v1106 = vadd.f32 %v879, %v1105
      %1107 = vmatmul.bf16.gmra.mxu0 %v953
      %v1108 = vpop.f32.mrf.mxu0
      %v1109 = vadd.f32 %v879, %v1108
      %v1110 = vpop.f32.mrf.mxu0
      %v1111 = vadd.f32 %v879, %v1110
      %1112 = vmatmul.bf16.gmra.mxu0 %v956
      %v1113 = vpop.f32.mrf.mxu0
      %v1114 = vadd.f32 %v879, %v1113
      %v1115 = vpop.f32.mrf.mxu0
      %v1116 = vadd.f32 %v879, %v1115
      %1117 = vmatmul.bf16.gmra.mxu0 %v959
      %v1118 = vpop.f32.mrf.mxu0
      %v1119 = vadd.f32 %v879, %v1118
      %v1120 = vpop.f32.mrf.mxu0
      %v1121 = vadd.f32 %v879, %v1120
      %1122 = vmatmul.bf16.gmra.mxu0 %v962
      %v1123 = vpop.f32.mrf.mxu0
      %v1124 = vadd.f32 %v879, %v1123
      %v1125 = vpop.f32.mrf.mxu0
      %v1126 = vadd.f32 %v879, %v1125
      %1127 = vmatmul.bf16.gmra.mxu0 %v965
      %v1128 = vpop.f32.mrf.mxu0
      %v1129 = vadd.f32 %v879, %v1128
      %v1130 = vpop.f32.mrf.mxu0
      %v1131 = vadd.f32 %v879, %v1130
      %1132 = vmatmul.bf16.gmra.mxu0 %v968
      %v1133 = vpop.f32.mrf.mxu0
      %v1134 = vadd.f32 %v879, %v1133
      %v1135 = vpop.f32.mrf.mxu0
      %v1136 = vadd.f32 %v879, %v1135
      %1137 = vmatmul.bf16.gmra.mxu0 %v971
      %v1138 = vpop.f32.mrf.mxu0
      %v1139 = vadd.f32 %v879, %v1138
      %v1140 = vpop.f32.mrf.mxu0
      %v1141 = vadd.f32 %v879, %v1140
      %1142 = vmatmul.bf16.gmra.mxu0 %v974
      %v1143 = vpop.f32.mrf.mxu0
      %v1144 = vadd.f32 %v879, %v1143
      %v1145 = vpop.f32.mrf.mxu0
      %v1146 = vadd.f32 %v879, %v1145
      %1147 = vdwg.mxu0
      %v1148 = vadd.f32 %v687, %v989
      %v1149 = vadd.f32 %v689, %v991
      %v1150 = vadd.f32 %v692, %v994
      %v1151 = vadd.f32 %v694, %v996
      %v1152 = vadd.f32 %v697, %v999
      %v1153 = vadd.f32 %v699, %v1001
      %v1154 = vadd.f32 %v702, %v1004
      %v1155 = vadd.f32 %v704, %v1006
      %v1156 = vadd.f32 %v707, %v1009
      %v1157 = vadd.f32 %v709, %v1011
      %v1158 = vadd.f32 %v712, %v1014
      %v1159 = vadd.f32 %v714, %v1016
      %v1160 = vadd.f32 %v717, %v1019
      %v1161 = vadd.f32 %v719, %v1021
      %v1162 = vadd.f32 %v722, %v1024
      %v1163 = vadd.f32 %v724, %v1026
      %v1164 = vadd.f32 %v727, %v1029
      %v1165 = vadd.f32 %v729, %v1031
      %v1166 = vadd.f32 %v732, %v1034
      %v1167 = vadd.f32 %v734, %v1036
      %v1168 = vadd.f32 %v737, %v1039
      %v1169 = vadd.f32 %v739, %v1041
      %v1170 = vadd.f32 %v742, %v1044
      %v1171 = vadd.f32 %v744, %v1046
      %v1172 = vadd.f32 %v747, %v1049
      %v1173 = vadd.f32 %v749, %v1051
      %v1174 = vadd.f32 %v752, %v1054
      %v1175 = vadd.f32 %v754, %v1056
      %v1176 = vadd.f32 %v757, %v1059
      %v1177 = vadd.f32 %v759, %v1061
      %v1178 = vadd.f32 %v762, %v1064
      %v1179 = vadd.f32 %v764, %v1066
      %v1180 = vadd.f32 %v767, %v1069
      %v1181 = vadd.f32 %v769, %v1071
      %v1182 = vadd.f32 %v772, %v1074
      %v1183 = vadd.f32 %v774, %v1076
      %v1184 = vadd.f32 %v777, %v1079
      %v1185 = vadd.f32 %v779, %v1081
      %v1186 = vadd.f32 %v782, %v1084
      %v1187 = vadd.f32 %v784, %v1086
      %v1188 = vadd.f32 %v787, %v1089
      %v1189 = vadd.f32 %v789, %v1091
      %v1190 = vadd.f32 %v792, %v1094
      %v1191 = vadd.f32 %v794, %v1096
      %v1192 = vadd.f32 %v797, %v1099
      %v1193 = vadd.f32 %v799, %v1101
      %v1194 = vadd.f32 %v802, %v1104
      %v1195 = vadd.f32 %v804, %v1106
      %v1196 = vadd.f32 %v807, %v1109
      %v1197 = vadd.f32 %v809, %v1111
      %v1198 = vadd.f32 %v812, %v1114
      %v1199 = vadd.f32 %v814, %v1116
      %v1200 = vadd.f32 %v817, %v1119
      %v1201 = vadd.f32 %v819, %v1121
      %v1202 = vadd.f32 %v822, %v1124
      %v1203 = vadd.f32 %v824, %v1126
      %v1204 = vadd.f32 %v827, %v1129
      %v1205 = vadd.f32 %v829, %v1131
      %v1206 = vadd.f32 %v832, %v1134
      %v1207 = vadd.f32 %v834, %v1136
      %v1208 = vadd.f32 %v837, %v1139
      %v1209 = vadd.f32 %v839, %v1141
      %v1210 = vadd.f32 %v842, %v1144
      %v1211 = vadd.f32 %v844, %v1146
      %v1212 = vmax.f32 %v1148, 0.0
      %v1213 = vmax.f32 %v1149, 0.0
      %v1214 = vmax.f32 %v1150, 0.0
      %v1215 = vmax.f32 %v1151, 0.0
      %v1216 = vmax.f32 %v1152, 0.0
      %v1217 = vmax.f32 %v1153, 0.0
      %v1218 = vmax.f32 %v1154, 0.0
      %v1219 = vmax.f32 %v1155, 0.0
      %v1220 = vmax.f32 %v1156, 0.0
      %v1221 = vmax.f32 %v1157, 0.0
      %v1222 = vmax.f32 %v1158, 0.0
      %v1223 = vmax.f32 %v1159, 0.0
      %v1224 = vmax.f32 %v1160, 0.0
      %v1225 = vmax.f32 %v1161, 0.0
      %v1226 = vmax.f32 %v1162, 0.0
      %v1227 = vmax.f32 %v1163, 0.0
      %v1228 = vmax.f32 %v1164, 0.0
      %v1229 = vmax.f32 %v1165, 0.0
      %v1230 = vmax.f32 %v1166, 0.0
      %v1231 = vmax.f32 %v1167, 0.0
      %v1232 = vmax.f32 %v1168, 0.0
      %v1233 = vmax.f32 %v1169, 0.0
      %v1234 = vmax.f32 %v1170, 0.0
      %v1235 = vmax.f32 %v1171, 0.0
      %v1236 = vmax.f32 %v1172, 0.0
      %v1237 = vmax.f32 %v1173, 0.0
      %v1238 = vmax.f32 %v1174, 0.0
      %v1239 = vmax.f32 %v1175, 0.0
      %v1240 = vmax.f32 %v1176, 0.0
      %v1241 = vmax.f32 %v1177, 0.0
      %v1242 = vmax.f32 %v1178, 0.0
      %v1243 = vmax.f32 %v1179, 0.0
      %v1244 = vmax.f32 %v1180, 0.0
      %v1245 = vmax.f32 %v1181, 0.0
      %v1246 = vmax.f32 %v1182, 0.0
      %v1247 = vmax.f32 %v1183, 0.0
      %v1248 = vmax.f32 %v1184, 0.0
      %v1249 = vmax.f32 %v1185, 0.0
      %v1250 = vmax.f32 %v1186, 0.0
      %v1251 = vmax.f32 %v1187, 0.0
      %v1252 = vmax.f32 %v1188, 0.0
      %v1253 = vmax.f32 %v1189, 0.0
      %v1254 = vmax.f32 %v1190, 0.0
      %v1255 = vmax.f32 %v1191, 0.0
      %v1256 = vmax.f32 %v1192, 0.0
      %v1257 = vmax.f32 %v1193, 0.0
      %v1258 = vmax.f32 %v1194, 0.0
      %v1259 = vmax.f32 %v1195, 0.0
      %v1260 = vmax.f32 %v1196, 0.0
      %v1261 = vmax.f32 %v1197, 0.0
      %v1262 = vmax.f32 %v1198, 0.0
      %v1263 = vmax.f32 %v1199, 0.0
      %v1264 = vmax.f32 %v1200, 0.0
      %v1265 = vmax.f32 %v1201, 0.0
      %v1266 = vmax.f32 %v1202, 0.0
      %v1267 = vmax.f32 %v1203, 0.0
      %v1268 = vmax.f32 %v1204, 0.0
      %v1269 = vmax.f32 %v1205, 0.0
      %v1270 = vmax.f32 %v1206, 0.0
      %v1271 = vmax.f32 %v1207, 0.0
      %v1272 = vmax.f32 %v1208, 0.0
      %v1273 = vmax.f32 %v1209, 0.0
      %v1274 = vmax.f32 %v1210, 0.0
      %v1275 = vmax.f32 %v1211, 0.0
      %v1276 = vperm.slane %v473, 0
      %v1277 = vmul.f32 %v1212, %v1276
      %v1278 = vmul.f32 %v1213, %v1276
      %v1279 = vmul.f32 %v1214, %v1276
      %v1280 = vmul.f32 %v1215, %v1276
      %v1281 = vmul.f32 %v1216, %v1276
      %v1282 = vmul.f32 %v1217, %v1276
      %v1283 = vmul.f32 %v1218, %v1276
      %v1284 = vmul.f32 %v1219, %v1276
      %v1285 = vmul.f32 %v1220, %v1276
      %v1286 = vmul.f32 %v1221, %v1276
      %v1287 = vmul.f32 %v1222, %v1276
      %v1288 = vmul.f32 %v1223, %v1276
      %v1289 = vmul.f32 %v1224, %v1276
      %v1290 = vmul.f32 %v1225, %v1276
      %v1291 = vmul.f32 %v1226, %v1276
      %v1292 = vmul.f32 %v1227, %v1276
      %v1293 = vmul.f32 %v1228, %v1276
      %v1294 = vmul.f32 %v1229, %v1276
      %v1295 = vmul.f32 %v1230, %v1276
      %v1296 = vmul.f32 %v1231, %v1276
      %v1297 = vmul.f32 %v1232, %v1276
      %v1298 = vmul.f32 %v1233, %v1276
      %v1299 = vmul.f32 %v1234, %v1276
      %v1300 = vmul.f32 %v1235, %v1276
      %v1301 = vmul.f32 %v1236, %v1276
      %v1302 = vmul.f32 %v1237, %v1276
      %v1303 = vmul.f32 %v1238, %v1276
      %v1304 = vmul.f32 %v1239, %v1276
      %v1305 = vmul.f32 %v1240, %v1276
      %v1306 = vmul.f32 %v1241, %v1276
      %v1307 = vmul.f32 %v1242, %v1276
      %v1308 = vmul.f32 %v1243, %v1276
      %v1309 = vmul.f32 %v1244, %v1276
      %v1310 = vmul.f32 %v1245, %v1276
      %v1311 = vmul.f32 %v1246, %v1276
      %v1312 = vmul.f32 %v1247, %v1276
      %v1313 = vmul.f32 %v1248, %v1276
      %v1314 = vmul.f32 %v1249, %v1276
      %v1315 = vmul.f32 %v1250, %v1276
      %v1316 = vmul.f32 %v1251, %v1276
      %v1317 = vmul.f32 %v1252, %v1276
      %v1318 = vmul.f32 %v1253, %v1276
      %v1319 = vmul.f32 %v1254, %v1276
      %v1320 = vmul.f32 %v1255, %v1276
      %v1321 = vmul.f32 %v1256, %v1276
      %v1322 = vmul.f32 %v1257, %v1276
      %v1323 = vmul.f32 %v1258, %v1276
      %v1324 = vmul.f32 %v1259, %v1276
      %v1325 = vmul.f32 %v1260, %v1276
      %v1326 = vmul.f32 %v1261, %v1276
      %v1327 = vmul.f32 %v1262, %v1276
      %v1328 = vmul.f32 %v1263, %v1276
      %v1329 = vmul.f32 %v1264, %v1276
      %v1330 = vmul.f32 %v1265, %v1276
      %v1331 = vmul.f32 %v1266, %v1276
      %v1332 = vmul.f32 %v1267, %v1276
      %v1333 = vmul.f32 %v1268, %v1276
      %v1334 = vmul.f32 %v1269, %v1276
      %v1335 = vmul.f32 %v1270, %v1276
      %v1336 = vmul.f32 %v1271, %v1276
      %v1337 = vmul.f32 %v1272, %v1276
      %v1338 = vmul.f32 %v1273, %v1276
      %v1339 = vmul.f32 %v1274, %v1276
      %v1340 = vmul.f32 %v1275, %v1276
      %v1341 = vsel %vm576, %v1277, 0.0
      %1342 = vadd.xlane.f32.xlu0 %v1341
      %v1343 = vpop.xlane.xlu0 %1342
      %v1344 = vsel %vm576, %v1278, 0.0
      %1345 = vadd.xlane.f32.xlu0 %v1344
      %v1346 = vpop.xlane.xlu0 %1345
      %v1347 = vsel %vm576, %v1279, 0.0
      %1348 = vadd.xlane.f32.xlu0 %v1347
      %v1349 = vpop.xlane.xlu0 %1348
      %v1350 = vsel %vm576, %v1280, 0.0
      %1351 = vadd.xlane.f32.xlu0 %v1350
      %v1352 = vpop.xlane.xlu0 %1351
      %v1353 = vsel %vm576, %v1281, 0.0
      %1354 = vadd.xlane.f32.xlu0 %v1353
      %v1355 = vpop.xlane.xlu0 %1354
      %v1356 = vsel %vm576, %v1282, 0.0
      %1357 = vadd.xlane.f32.xlu0 %v1356
      %v1358 = vpop.xlane.xlu0 %1357
      %v1359 = vsel %vm576, %v1283, 0.0
      %1360 = vadd.xlane.f32.xlu0 %v1359
      %v1361 = vpop.xlane.xlu0 %1360
      %v1362 = vsel %vm576, %v1284, 0.0
      %1363 = vadd.xlane.f32.xlu0 %v1362
      %v1364 = vpop.xlane.xlu0 %1363
      %v1365 = vsel %vm576, %v1285, 0.0
      %1366 = vadd.xlane.f32.xlu0 %v1365
      %v1367 = vpop.xlane.xlu0 %1366
      %v1368 = vsel %vm576, %v1286, 0.0
      %1369 = vadd.xlane.f32.xlu0 %v1368
      %v1370 = vpop.xlane.xlu0 %1369
      %v1371 = vsel %vm576, %v1287, 0.0
      %1372 = vadd.xlane.f32.xlu0 %v1371
      %v1373 = vpop.xlane.xlu0 %1372
      %v1374 = vsel %vm576, %v1288, 0.0
      %1375 = vadd.xlane.f32.xlu0 %v1374
      %v1376 = vpop.xlane.xlu0 %1375
      %v1377 = vsel %vm576, %v1289, 0.0
      %1378 = vadd.xlane.f32.xlu0 %v1377
      %v1379 = vpop.xlane.xlu0 %1378
      %v1380 = vsel %vm576, %v1290, 0.0
      %1381 = vadd.xlane.f32.xlu0 %v1380
      %v1382 = vpop.xlane.xlu0 %1381
      %v1383 = vsel %vm576, %v1291, 0.0
      %1384 = vadd.xlane.f32.xlu0 %v1383
      %v1385 = vpop.xlane.xlu0 %1384
      %v1386 = vsel %vm576, %v1292, 0.0
      %1387 = vadd.xlane.f32.xlu0 %v1386
      %v1388 = vpop.xlane.xlu0 %1387
      %v1389 = vsel %vm576, %v1293, 0.0
      %1390 = vadd.xlane.f32.xlu0 %v1389
      %v1391 = vpop.xlane.xlu0 %1390
      %v1392 = vsel %vm576, %v1294, 0.0
      %1393 = vadd.xlane.f32.xlu0 %v1392
      %v1394 = vpop.xlane.xlu0 %1393
      %v1395 = vsel %vm576, %v1295, 0.0
      %1396 = vadd.xlane.f32.xlu0 %v1395
      %v1397 = vpop.xlane.xlu0 %1396
      %v1398 = vsel %vm576, %v1296, 0.0
      %1399 = vadd.xlane.f32.xlu0 %v1398
      %v1400 = vpop.xlane.xlu0 %1399
      %v1401 = vsel %vm576, %v1297, 0.0
      %1402 = vadd.xlane.f32.xlu0 %v1401
      %v1403 = vpop.xlane.xlu0 %1402
      %v1404 = vsel %vm576, %v1298, 0.0
      %1405 = vadd.xlane.f32.xlu0 %v1404
      %v1406 = vpop.xlane.xlu0 %1405
      %v1407 = vsel %vm576, %v1299, 0.0
      %1408 = vadd.xlane.f32.xlu0 %v1407
      %v1409 = vpop.xlane.xlu0 %1408
      %v1410 = vsel %vm576, %v1300, 0.0
      %1411 = vadd.xlane.f32.xlu0 %v1410
      %v1412 = vpop.xlane.xlu0 %1411
      %v1413 = vsel %vm576, %v1301, 0.0
      %1414 = vadd.xlane.f32.xlu0 %v1413
      %v1415 = vpop.xlane.xlu0 %1414
      %v1416 = vsel %vm576, %v1302, 0.0
      %1417 = vadd.xlane.f32.xlu0 %v1416
      %v1418 = vpop.xlane.xlu0 %1417
      %v1419 = vsel %vm576, %v1303, 0.0
      %1420 = vadd.xlane.f32.xlu0 %v1419
      %v1421 = vpop.xlane.xlu0 %1420
      %v1422 = vsel %vm576, %v1304, 0.0
      %1423 = vadd.xlane.f32.xlu0 %v1422
      %v1424 = vpop.xlane.xlu0 %1423
      %v1425 = vsel %vm576, %v1305, 0.0
      %1426 = vadd.xlane.f32.xlu0 %v1425
      %v1427 = vpop.xlane.xlu0 %1426
      %v1428 = vsel %vm576, %v1306, 0.0
      %1429 = vadd.xlane.f32.xlu0 %v1428
      %v1430 = vpop.xlane.xlu0 %1429
      %v1431 = vsel %vm576, %v1307, 0.0
      %1432 = vadd.xlane.f32.xlu0 %v1431
      %v1433 = vpop.xlane.xlu0 %1432
      %v1434 = vsel %vm576, %v1308, 0.0
      %1435 = vadd.xlane.f32.xlu0 %v1434
      %v1436 = vpop.xlane.xlu0 %1435
      %v1437 = vsel %vm576, %v1309, 0.0
      %1438 = vadd.xlane.f32.xlu0 %v1437
      %v1439 = vpop.xlane.xlu0 %1438
      %v1440 = vsel %vm576, %v1310, 0.0
      %1441 = vadd.xlane.f32.xlu0 %v1440
      %v1442 = vpop.xlane.xlu0 %1441
      %v1443 = vsel %vm576, %v1311, 0.0
      %1444 = vadd.xlane.f32.xlu0 %v1443
      %v1445 = vpop.xlane.xlu0 %1444
      %v1446 = vsel %vm576, %v1312, 0.0
      %1447 = vadd.xlane.f32.xlu0 %v1446
      %v1448 = vpop.xlane.xlu0 %1447
      %v1449 = vsel %vm576, %v1313, 0.0
      %1450 = vadd.xlane.f32.xlu0 %v1449
      %v1451 = vpop.xlane.xlu0 %1450
      %v1452 = vsel %vm576, %v1314, 0.0
      %1453 = vadd.xlane.f32.xlu0 %v1452
      %v1454 = vpop.xlane.xlu0 %1453
      %v1455 = vsel %vm576, %v1315, 0.0
      %1456 = vadd.xlane.f32.xlu0 %v1455
      %v1457 = vpop.xlane.xlu0 %1456
      %v1458 = vsel %vm576, %v1316, 0.0
      %1459 = vadd.xlane.f32.xlu0 %v1458
      %v1460 = vpop.xlane.xlu0 %1459
      %v1461 = vsel %vm576, %v1317, 0.0
      %1462 = vadd.xlane.f32.xlu0 %v1461
      %v1463 = vpop.xlane.xlu0 %1462
      %v1464 = vsel %vm576, %v1318, 0.0
      %1465 = vadd.xlane.f32.xlu0 %v1464
      %v1466 = vpop.xlane.xlu0 %1465
      %v1467 = vsel %vm576, %v1319, 0.0
      %1468 = vadd.xlane.f32.xlu0 %v1467
      %v1469 = vpop.xlane.xlu0 %1468
      %v1470 = vsel %vm576, %v1320, 0.0
      %1471 = vadd.xlane.f32.xlu0 %v1470
      %v1472 = vpop.xlane.xlu0 %1471
      %v1473 = vsel %vm576, %v1321, 0.0
      %1474 = vadd.xlane.f32.xlu0 %v1473
      %v1475 = vpop.xlane.xlu0 %1474
      %v1476 = vsel %vm576, %v1322, 0.0
      %1477 = vadd.xlane.f32.xlu0 %v1476
      %v1478 = vpop.xlane.xlu0 %1477
      %v1479 = vsel %vm576, %v1323, 0.0
      %1480 = vadd.xlane.f32.xlu0 %v1479
      %v1481 = vpop.xlane.xlu0 %1480
      %v1482 = vsel %vm576, %v1324, 0.0
      %1483 = vadd.xlane.f32.xlu0 %v1482
      %v1484 = vpop.xlane.xlu0 %1483
      %v1485 = vsel %vm576, %v1325, 0.0
      %1486 = vadd.xlane.f32.xlu0 %v1485
      %v1487 = vpop.xlane.xlu0 %1486
      %v1488 = vsel %vm576, %v1326, 0.0
      %1489 = vadd.xlane.f32.xlu0 %v1488
      %v1490 = vpop.xlane.xlu0 %1489
      %v1491 = vsel %vm576, %v1327, 0.0
      %1492 = vadd.xlane.f32.xlu0 %v1491
      %v1493 = vpop.xlane.xlu0 %1492
      %v1494 = vsel %vm576, %v1328, 0.0
      %1495 = vadd.xlane.f32.xlu0 %v1494
      %v1496 = vpop.xlane.xlu0 %1495
      %v1497 = vsel %vm576, %v1329, 0.0
      %1498 = vadd.xlane.f32.xlu0 %v1497
      %v1499 = vpop.xlane.xlu0 %1498
      %v1500 = vsel %vm576, %v1330, 0.0
      %1501 = vadd.xlane.f32.xlu0 %v1500
      %v1502 = vpop.xlane.xlu0 %1501
      %v1503 = vsel %vm576, %v1331, 0.0
      %1504 = vadd.xlane.f32.xlu0 %v1503
      %v1505 = vpop.xlane.xlu0 %1504
      %v1506 = vsel %vm576, %v1332, 0.0
      %1507 = vadd.xlane.f32.xlu0 %v1506
      %v1508 = vpop.xlane.xlu0 %1507
      %v1509 = vsel %vm576, %v1333, 0.0
      %1510 = vadd.xlane.f32.xlu0 %v1509
      %v1511 = vpop.xlane.xlu0 %1510
      %v1512 = vsel %vm576, %v1334, 0.0
      %1513 = vadd.xlane.f32.xlu0 %v1512
      %v1514 = vpop.xlane.xlu0 %1513
      %v1515 = vsel %vm576, %v1335, 0.0
      %1516 = vadd.xlane.f32.xlu0 %v1515
      %v1517 = vpop.xlane.xlu0 %1516
      %v1518 = vsel %vm576, %v1336, 0.0
      %1519 = vadd.xlane.f32.xlu0 %v1518
      %v1520 = vpop.xlane.xlu0 %1519
      %v1521 = vsel %vm576, %v1337, 0.0
      %1522 = vadd.xlane.f32.xlu0 %v1521
      %v1523 = vpop.xlane.xlu0 %1522
      %v1524 = vsel %vm576, %v1338, 0.0
      %1525 = vadd.xlane.f32.xlu0 %v1524
      %v1526 = vpop.xlane.xlu0 %1525
      %v1527 = vsel %vm576, %v1339, 0.0
      %1528 = vadd.xlane.f32.xlu0 %v1527
      %v1529 = vpop.xlane.xlu0 %1528
      %v1530 = vsel %vm576, %v1340, 0.0
      %1531 = vadd.xlane.f32.xlu0 %v1530
      %v1532 = vpop.xlane.xlu0 %1531
      %v1533 = vperm.slane %v474, 0
      %v1534 = vadd.f32 %v1343, %v1533
      %v1535 = vadd.f32 %v1346, %v1533
      %v1536 = vadd.f32 %v1349, %v1533
      %v1537 = vadd.f32 %v1352, %v1533
      %v1538 = vadd.f32 %v1355, %v1533
      %v1539 = vadd.f32 %v1358, %v1533
      %v1540 = vadd.f32 %v1361, %v1533
      %v1541 = vadd.f32 %v1364, %v1533
      %v1542 = vadd.f32 %v1367, %v1533
      %v1543 = vadd.f32 %v1370, %v1533
      %v1544 = vadd.f32 %v1373, %v1533
      %v1545 = vadd.f32 %v1376, %v1533
      %v1546 = vadd.f32 %v1379, %v1533
      %v1547 = vadd.f32 %v1382, %v1533
      %v1548 = vadd.f32 %v1385, %v1533
      %v1549 = vadd.f32 %v1388, %v1533
      %v1550 = vadd.f32 %v1391, %v1533
      %v1551 = vadd.f32 %v1394, %v1533
      %v1552 = vadd.f32 %v1397, %v1533
      %v1553 = vadd.f32 %v1400, %v1533
      %v1554 = vadd.f32 %v1403, %v1533
      %v1555 = vadd.f32 %v1406, %v1533
      %v1556 = vadd.f32 %v1409, %v1533
      %v1557 = vadd.f32 %v1412, %v1533
      %v1558 = vadd.f32 %v1415, %v1533
      %v1559 = vadd.f32 %v1418, %v1533
      %v1560 = vadd.f32 %v1421, %v1533
      %v1561 = vadd.f32 %v1424, %v1533
      %v1562 = vadd.f32 %v1427, %v1533
      %v1563 = vadd.f32 %v1430, %v1533
      %v1564 = vadd.f32 %v1433, %v1533
      %v1565 = vadd.f32 %v1436, %v1533
      %v1566 = vadd.f32 %v1439, %v1533
      %v1567 = vadd.f32 %v1442, %v1533
      %v1568 = vadd.f32 %v1445, %v1533
      %v1569 = vadd.f32 %v1448, %v1533
      %v1570 = vadd.f32 %v1451, %v1533
      %v1571 = vadd.f32 %v1454, %v1533
      %v1572 = vadd.f32 %v1457, %v1533
      %v1573 = vadd.f32 %v1460, %v1533
      %v1574 = vadd.f32 %v1463, %v1533
      %v1575 = vadd.f32 %v1466, %v1533
      %v1576 = vadd.f32 %v1469, %v1533
      %v1577 = vadd.f32 %v1472, %v1533
      %v1578 = vadd.f32 %v1475, %v1533
      %v1579 = vadd.f32 %v1478, %v1533
      %v1580 = vadd.f32 %v1481, %v1533
      %v1581 = vadd.f32 %v1484, %v1533
      %v1582 = vadd.f32 %v1487, %v1533
      %v1583 = vadd.f32 %v1490, %v1533
      %v1584 = vadd.f32 %v1493, %v1533
      %v1585 = vadd.f32 %v1496, %v1533
      %v1586 = vadd.f32 %v1499, %v1533
      %v1587 = vadd.f32 %v1502, %v1533
      %v1588 = vadd.f32 %v1505, %v1533
      %v1589 = vadd.f32 %v1508, %v1533
      %v1590 = vadd.f32 %v1511, %v1533
      %v1591 = vadd.f32 %v1514, %v1533
      %v1592 = vadd.f32 %v1517, %v1533
      %v1593 = vadd.f32 %v1520, %v1533
      %v1594 = vadd.f32 %v1523, %v1533
      %v1595 = vadd.f32 %v1526, %v1533
      %v1596 = vadd.f32 %v1529, %v1533
      %v1597 = vadd.f32 %v1532, %v1533
      %v1598 = vsub.f32 0.0, %v1534
      %v1599 = vsub.f32 0.0, %v1535
      %v1600 = vsub.f32 0.0, %v1536
      %v1601 = vsub.f32 0.0, %v1537
      %v1602 = vsub.f32 0.0, %v1538
      %v1603 = vsub.f32 0.0, %v1539
      %v1604 = vsub.f32 0.0, %v1540
      %v1605 = vsub.f32 0.0, %v1541
      %v1606 = vsub.f32 0.0, %v1542
      %v1607 = vsub.f32 0.0, %v1543
      %v1608 = vsub.f32 0.0, %v1544
      %v1609 = vsub.f32 0.0, %v1545
      %v1610 = vsub.f32 0.0, %v1546
      %v1611 = vsub.f32 0.0, %v1547
      %v1612 = vsub.f32 0.0, %v1548
      %v1613 = vsub.f32 0.0, %v1549
      %v1614 = vsub.f32 0.0, %v1550
      %v1615 = vsub.f32 0.0, %v1551
      %v1616 = vsub.f32 0.0, %v1552
      %v1617 = vsub.f32 0.0, %v1553
      %v1618 = vsub.f32 0.0, %v1554
      %v1619 = vsub.f32 0.0, %v1555
      %v1620 = vsub.f32 0.0, %v1556
      %v1621 = vsub.f32 0.0, %v1557
      %v1622 = vsub.f32 0.0, %v1558
      %v1623 = vsub.f32 0.0, %v1559
      %v1624 = vsub.f32 0.0, %v1560
      %v1625 = vsub.f32 0.0, %v1561
      %v1626 = vsub.f32 0.0, %v1562
      %v1627 = vsub.f32 0.0, %v1563
      %v1628 = vsub.f32 0.0, %v1564
      %v1629 = vsub.f32 0.0, %v1565
      %v1630 = vsub.f32 0.0, %v1566
      %v1631 = vsub.f32 0.0, %v1567
      %v1632 = vsub.f32 0.0, %v1568
      %v1633 = vsub.f32 0.0, %v1569
      %v1634 = vsub.f32 0.0, %v1570
      %v1635 = vsub.f32 0.0, %v1571
      %v1636 = vsub.f32 0.0, %v1572
      %v1637 = vsub.f32 0.0, %v1573
      %v1638 = vsub.f32 0.0, %v1574
      %v1639 = vsub.f32 0.0, %v1575
      %v1640 = vsub.f32 0.0, %v1576
      %v1641 = vsub.f32 0.0, %v1577
      %v1642 = vsub.f32 0.0, %v1578
      %v1643 = vsub.f32 0.0, %v1579
      %v1644 = vsub.f32 0.0, %v1580
      %v1645 = vsub.f32 0.0, %v1581
      %v1646 = vsub.f32 0.0, %v1582
      %v1647 = vsub.f32 0.0, %v1583
      %v1648 = vsub.f32 0.0, %v1584
      %v1649 = vsub.f32 0.0, %v1585
      %v1650 = vsub.f32 0.0, %v1586
      %v1651 = vsub.f32 0.0, %v1587
      %v1652 = vsub.f32 0.0, %v1588
      %v1653 = vsub.f32 0.0, %v1589
      %v1654 = vsub.f32 0.0, %v1590
      %v1655 = vsub.f32 0.0, %v1591
      %v1656 = vsub.f32 0.0, %v1592
      %v1657 = vsub.f32 0.0, %v1593
      %v1658 = vsub.f32 0.0, %v1594
      %v1659 = vsub.f32 0.0, %v1595
      %v1660 = vsub.f32 0.0, %v1596
      %v1661 = vsub.f32 0.0, %v1597
      %v1662 = vmul.f32 %v1598, 1.442695
      %v1663 = vpow.pop %v1662
      %v1664 = vmul.f32 %v1599, 1.442695
      %v1665 = vpow.pop %v1664
      %v1666 = vmul.f32 %v1600, 1.442695
      %v1667 = vpow.pop %v1666
      %v1668 = vmul.f32 %v1601, 1.442695
      %v1669 = vpow.pop %v1668
      %v1670 = vmul.f32 %v1602, 1.442695
      %v1671 = vpow.pop %v1670
      %v1672 = vmul.f32 %v1603, 1.442695
      %v1673 = vpow.pop %v1672
      %v1674 = vmul.f32 %v1604, 1.442695
      %v1675 = vpow.pop %v1674
      %v1676 = vmul.f32 %v1605, 1.442695
      %v1677 = vpow.pop %v1676
      %v1678 = vmul.f32 %v1606, 1.442695
      %v1679 = vpow.pop %v1678
      %v1680 = vmul.f32 %v1607, 1.442695
      %v1681 = vpow.pop %v1680
      %v1682 = vmul.f32 %v1608, 1.442695
      %v1683 = vpow.pop %v1682
      %v1684 = vmul.f32 %v1609, 1.442695
      %v1685 = vpow.pop %v1684
      %v1686 = vmul.f32 %v1610, 1.442695
      %v1687 = vpow.pop %v1686
      %v1688 = vmul.f32 %v1611, 1.442695
      %v1689 = vpow.pop %v1688
      %v1690 = vmul.f32 %v1612, 1.442695
      %v1691 = vpow.pop %v1690
      %v1692 = vmul.f32 %v1613, 1.442695
      %v1693 = vpow.pop %v1692
      %v1694 = vmul.f32 %v1614, 1.442695
      %v1695 = vpow.pop %v1694
      %v1696 = vmul.f32 %v1615, 1.442695
      %v1697 = vpow.pop %v1696
      %v1698 = vmul.f32 %v1616, 1.442695
      %v1699 = vpow.pop %v1698
      %v1700 = vmul.f32 %v1617, 1.442695
      %v1701 = vpow.pop %v1700
      %v1702 = vmul.f32 %v1618, 1.442695
      %v1703 = vpow.pop %v1702
      %v1704 = vmul.f32 %v1619, 1.442695
      %v1705 = vpow.pop %v1704
      %v1706 = vmul.f32 %v1620, 1.442695
      %v1707 = vpow.pop %v1706
      %v1708 = vmul.f32 %v1621, 1.442695
      %v1709 = vpow.pop %v1708
      %v1710 = vmul.f32 %v1622, 1.442695
      %v1711 = vpow.pop %v1710
      %v1712 = vmul.f32 %v1623, 1.442695
      %v1713 = vpow.pop %v1712
      %v1714 = vmul.f32 %v1624, 1.442695
      %v1715 = vpow.pop %v1714
      %v1716 = vmul.f32 %v1625, 1.442695
      %v1717 = vpow.pop %v1716
      %v1718 = vmul.f32 %v1626, 1.442695
      %v1719 = vpow.pop %v1718
      %v1720 = vmul.f32 %v1627, 1.442695
      %v1721 = vpow.pop %v1720
      %v1722 = vmul.f32 %v1628, 1.442695
      %v1723 = vpow.pop %v1722
      %v1724 = vmul.f32 %v1629, 1.442695
      %v1725 = vpow.pop %v1724
      %v1726 = vmul.f32 %v1630, 1.442695
      %v1727 = vpow.pop %v1726
      %v1728 = vmul.f32 %v1631, 1.442695
      %v1729 = vpow.pop %v1728
      %v1730 = vmul.f32 %v1632, 1.442695
      %v1731 = vpow.pop %v1730
      %v1732 = vmul.f32 %v1633, 1.442695
      %v1733 = vpow.pop %v1732
      %v1734 = vmul.f32 %v1634, 1.442695
      %v1735 = vpow.pop %v1734
      %v1736 = vmul.f32 %v1635, 1.442695
      %v1737 = vpow.pop %v1736
      %v1738 = vmul.f32 %v1636, 1.442695
      %v1739 = vpow.pop %v1738
      %v1740 = vmul.f32 %v1637, 1.442695
      %v1741 = vpow.pop %v1740
      %v1742 = vmul.f32 %v1638, 1.442695
      %v1743 = vpow.pop %v1742
      %v1744 = vmul.f32 %v1639, 1.442695
      %v1745 = vpow.pop %v1744
      %v1746 = vmul.f32 %v1640, 1.442695
      %v1747 = vpow.pop %v1746
      %v1748 = vmul.f32 %v1641, 1.442695
      %v1749 = vpow.pop %v1748
      %v1750 = vmul.f32 %v1642, 1.442695
      %v1751 = vpow.pop %v1750
      %v1752 = vmul.f32 %v1643, 1.442695
      %v1753 = vpow.pop %v1752
      %v1754 = vmul.f32 %v1644, 1.442695
      %v1755 = vpow.pop %v1754
      %v1756 = vmul.f32 %v1645, 1.442695
      %v1757 = vpow.pop %v1756
      %v1758 = vmul.f32 %v1646, 1.442695
      %v1759 = vpow.pop %v1758
      %v1760 = vmul.f32 %v1647, 1.442695
      %v1761 = vpow.pop %v1760
      %v1762 = vmul.f32 %v1648, 1.442695
      %v1763 = vpow.pop %v1762
      %v1764 = vmul.f32 %v1649, 1.442695
      %v1765 = vpow.pop %v1764
      %v1766 = vmul.f32 %v1650, 1.442695
      %v1767 = vpow.pop %v1766
      %v1768 = vmul.f32 %v1651, 1.442695
      %v1769 = vpow.pop %v1768
      %v1770 = vmul.f32 %v1652, 1.442695
      %v1771 = vpow.pop %v1770
      %v1772 = vmul.f32 %v1653, 1.442695
      %v1773 = vpow.pop %v1772
      %v1774 = vmul.f32 %v1654, 1.442695
      %v1775 = vpow.pop %v1774
      %v1776 = vmul.f32 %v1655, 1.442695
      %v1777 = vpow.pop %v1776
      %v1778 = vmul.f32 %v1656, 1.442695
      %v1779 = vpow.pop %v1778
      %v1780 = vmul.f32 %v1657, 1.442695
      %v1781 = vpow.pop %v1780
      %v1782 = vmul.f32 %v1658, 1.442695
      %v1783 = vpow.pop %v1782
      %v1784 = vmul.f32 %v1659, 1.442695
      %v1785 = vpow.pop %v1784
      %v1786 = vmul.f32 %v1660, 1.442695
      %v1787 = vpow.pop %v1786
      %v1788 = vmul.f32 %v1661, 1.442695
      %v1789 = vpow.pop %v1788
      %v1790 = vadd.f32 %v1663, 1.0
      %v1791 = vadd.f32 %v1665, 1.0
      %v1792 = vadd.f32 %v1667, 1.0
      %v1793 = vadd.f32 %v1669, 1.0
      %v1794 = vadd.f32 %v1671, 1.0
      %v1795 = vadd.f32 %v1673, 1.0
      %v1796 = vadd.f32 %v1675, 1.0
      %v1797 = vadd.f32 %v1677, 1.0
      %v1798 = vadd.f32 %v1679, 1.0
      %v1799 = vadd.f32 %v1681, 1.0
      %v1800 = vadd.f32 %v1683, 1.0
      %v1801 = vadd.f32 %v1685, 1.0
      %v1802 = vadd.f32 %v1687, 1.0
      %v1803 = vadd.f32 %v1689, 1.0
      %v1804 = vadd.f32 %v1691, 1.0
      %v1805 = vadd.f32 %v1693, 1.0
      %v1806 = vadd.f32 %v1695, 1.0
      %v1807 = vadd.f32 %v1697, 1.0
      %v1808 = vadd.f32 %v1699, 1.0
      %v1809 = vadd.f32 %v1701, 1.0
      %v1810 = vadd.f32 %v1703, 1.0
      %v1811 = vadd.f32 %v1705, 1.0
      %v1812 = vadd.f32 %v1707, 1.0
      %v1813 = vadd.f32 %v1709, 1.0
      %v1814 = vadd.f32 %v1711, 1.0
      %v1815 = vadd.f32 %v1713, 1.0
      %v1816 = vadd.f32 %v1715, 1.0
      %v1817 = vadd.f32 %v1717, 1.0
      %v1818 = vadd.f32 %v1719, 1.0
      %v1819 = vadd.f32 %v1721, 1.0
      %v1820 = vadd.f32 %v1723, 1.0
      %v1821 = vadd.f32 %v1725, 1.0
      %v1822 = vadd.f32 %v1727, 1.0
      %v1823 = vadd.f32 %v1729, 1.0
      %v1824 = vadd.f32 %v1731, 1.0
      %v1825 = vadd.f32 %v1733, 1.0
      %v1826 = vadd.f32 %v1735, 1.0
      %v1827 = vadd.f32 %v1737, 1.0
      %v1828 = vadd.f32 %v1739, 1.0
      %v1829 = vadd.f32 %v1741, 1.0
      %v1830 = vadd.f32 %v1743, 1.0
      %v1831 = vadd.f32 %v1745, 1.0
      %v1832 = vadd.f32 %v1747, 1.0
      %v1833 = vadd.f32 %v1749, 1.0
      %v1834 = vadd.f32 %v1751, 1.0
      %v1835 = vadd.f32 %v1753, 1.0
      %v1836 = vadd.f32 %v1755, 1.0
      %v1837 = vadd.f32 %v1757, 1.0
      %v1838 = vadd.f32 %v1759, 1.0
      %v1839 = vadd.f32 %v1761, 1.0
      %v1840 = vadd.f32 %v1763, 1.0
      %v1841 = vadd.f32 %v1765, 1.0
      %v1842 = vadd.f32 %v1767, 1.0
      %v1843 = vadd.f32 %v1769, 1.0
      %v1844 = vadd.f32 %v1771, 1.0
      %v1845 = vadd.f32 %v1773, 1.0
      %v1846 = vadd.f32 %v1775, 1.0
      %v1847 = vadd.f32 %v1777, 1.0
      %v1848 = vadd.f32 %v1779, 1.0
      %v1849 = vadd.f32 %v1781, 1.0
      %v1850 = vadd.f32 %v1783, 1.0
      %v1851 = vadd.f32 %v1785, 1.0
      %v1852 = vadd.f32 %v1787, 1.0
      %v1853 = vadd.f32 %v1789, 1.0
      %v1854 = vrcp.pop %v1790
      %v1855 = vmul.f32 %v1790, %v1854
      %v1856 = vsub.f32 1.0, %v1855
      %v1857 = vmul.f32 %v1854, %v1856
      %v1858 = vadd.f32 %v1854, %v1857
      %vm1859 = vweird.f32 %v1790
      %vm1860 = vweird.f32 %v1854
      %vm1861 = vmor %vm1859, %vm1860
      %v1862 = vsel %vm1861, %v1854, %v1858
      %v1863 = vand.u32 2147483647, %v1790
      %vm1864 = vcmp.eq.f32.partialorder %v1863, 8.507059e+37
      %v1865 = vand.u32 %v1790, 2147483648
      %v1866 = vor.u32 1.1754944e-38, %v1865
      %v1867 = vsel %vm1864, %v1866, %v1862
      %v1868 = vmul.f32 1.0, %v1867
      %v1869 = vrcp.pop %v1791
      %v1870 = vmul.f32 %v1791, %v1869
      %v1871 = vsub.f32 1.0, %v1870
      %v1872 = vmul.f32 %v1869, %v1871
      %v1873 = vadd.f32 %v1869, %v1872
      %vm1874 = vweird.f32 %v1791
      %vm1875 = vweird.f32 %v1869
      %vm1876 = vmor %vm1874, %vm1875
      %v1877 = vsel %vm1876, %v1869, %v1873
      %v1878 = vand.u32 2147483647, %v1791
      %vm1879 = vcmp.eq.f32.partialorder %v1878, 8.507059e+37
      %v1880 = vand.u32 %v1791, 2147483648
      %v1881 = vor.u32 1.1754944e-38, %v1880
      %v1882 = vsel %vm1879, %v1881, %v1877
      %v1883 = vmul.f32 1.0, %v1882
      %v1884 = vrcp.pop %v1792
      %v1885 = vmul.f32 %v1792, %v1884
      %v1886 = vsub.f32 1.0, %v1885
      %v1887 = vmul.f32 %v1884, %v1886
      %v1888 = vadd.f32 %v1884, %v1887
      %vm1889 = vweird.f32 %v1792
      %vm1890 = vweird.f32 %v1884
      %vm1891 = vmor %vm1889, %vm1890
      %v1892 = vsel %vm1891, %v1884, %v1888
      %v1893 = vand.u32 2147483647, %v1792
      %vm1894 = vcmp.eq.f32.partialorder %v1893, 8.507059e+37
      %v1895 = vand.u32 %v1792, 2147483648
      %v1896 = vor.u32 1.1754944e-38, %v1895
      %v1897 = vsel %vm1894, %v1896, %v1892
      %v1898 = vmul.f32 1.0, %v1897
      %v1899 = vrcp.pop %v1793
      %v1900 = vmul.f32 %v1793, %v1899
      %v1901 = vsub.f32 1.0, %v1900
      %v1902 = vmul.f32 %v1899, %v1901
      %v1903 = vadd.f32 %v1899, %v1902
      %vm1904 = vweird.f32 %v1793
      %vm1905 = vweird.f32 %v1899
      %vm1906 = vmor %vm1904, %vm1905
      %v1907 = vsel %vm1906, %v1899, %v1903
      %v1908 = vand.u32 2147483647, %v1793
      %vm1909 = vcmp.eq.f32.partialorder %v1908, 8.507059e+37
      %v1910 = vand.u32 %v1793, 2147483648
      %v1911 = vor.u32 1.1754944e-38, %v1910
      %v1912 = vsel %vm1909, %v1911, %v1907
      %v1913 = vmul.f32 1.0, %v1912
      %v1914 = vrcp.pop %v1794
      %v1915 = vmul.f32 %v1794, %v1914
      %v1916 = vsub.f32 1.0, %v1915
      %v1917 = vmul.f32 %v1914, %v1916
      %v1918 = vadd.f32 %v1914, %v1917
      %vm1919 = vweird.f32 %v1794
      %vm1920 = vweird.f32 %v1914
      %vm1921 = vmor %vm1919, %vm1920
      %v1922 = vsel %vm1921, %v1914, %v1918
      %v1923 = vand.u32 2147483647, %v1794
      %vm1924 = vcmp.eq.f32.partialorder %v1923, 8.507059e+37
      %v1925 = vand.u32 %v1794, 2147483648
      %v1926 = vor.u32 1.1754944e-38, %v1925
      %v1927 = vsel %vm1924, %v1926, %v1922
      %v1928 = vmul.f32 1.0, %v1927
      %v1929 = vrcp.pop %v1795
      %v1930 = vmul.f32 %v1795, %v1929
      %v1931 = vsub.f32 1.0, %v1930
      %v1932 = vmul.f32 %v1929, %v1931
      %v1933 = vadd.f32 %v1929, %v1932
      %vm1934 = vweird.f32 %v1795
      %vm1935 = vweird.f32 %v1929
      %vm1936 = vmor %vm1934, %vm1935
      %v1937 = vsel %vm1936, %v1929, %v1933
      %v1938 = vand.u32 2147483647, %v1795
      %vm1939 = vcmp.eq.f32.partialorder %v1938, 8.507059e+37
      %v1940 = vand.u32 %v1795, 2147483648
      %v1941 = vor.u32 1.1754944e-38, %v1940
      %v1942 = vsel %vm1939, %v1941, %v1937
      %v1943 = vmul.f32 1.0, %v1942
      %v1944 = vrcp.pop %v1796
      %v1945 = vmul.f32 %v1796, %v1944
      %v1946 = vsub.f32 1.0, %v1945
      %v1947 = vmul.f32 %v1944, %v1946
      %v1948 = vadd.f32 %v1944, %v1947
      %vm1949 = vweird.f32 %v1796
      %vm1950 = vweird.f32 %v1944
      %vm1951 = vmor %vm1949, %vm1950
      %v1952 = vsel %vm1951, %v1944, %v1948
      %v1953 = vand.u32 2147483647, %v1796
      %vm1954 = vcmp.eq.f32.partialorder %v1953, 8.507059e+37
      %v1955 = vand.u32 %v1796, 2147483648
      %v1956 = vor.u32 1.1754944e-38, %v1955
      %v1957 = vsel %vm1954, %v1956, %v1952
      %v1958 = vmul.f32 1.0, %v1957
      %v1959 = vrcp.pop %v1797
      %v1960 = vmul.f32 %v1797, %v1959
      %v1961 = vsub.f32 1.0, %v1960
      %v1962 = vmul.f32 %v1959, %v1961
      %v1963 = vadd.f32 %v1959, %v1962
      %vm1964 = vweird.f32 %v1797
      %vm1965 = vweird.f32 %v1959
      %vm1966 = vmor %vm1964, %vm1965
      %v1967 = vsel %vm1966, %v1959, %v1963
      %v1968 = vand.u32 2147483647, %v1797
      %vm1969 = vcmp.eq.f32.partialorder %v1968, 8.507059e+37
      %v1970 = vand.u32 %v1797, 2147483648
      %v1971 = vor.u32 1.1754944e-38, %v1970
      %v1972 = vsel %vm1969, %v1971, %v1967
      %v1973 = vmul.f32 1.0, %v1972
      %v1974 = vrcp.pop %v1798
      %v1975 = vmul.f32 %v1798, %v1974
      %v1976 = vsub.f32 1.0, %v1975
      %v1977 = vmul.f32 %v1974, %v1976
      %v1978 = vadd.f32 %v1974, %v1977
      %vm1979 = vweird.f32 %v1798
      %vm1980 = vweird.f32 %v1974
      %vm1981 = vmor %vm1979, %vm1980
      %v1982 = vsel %vm1981, %v1974, %v1978
      %v1983 = vand.u32 2147483647, %v1798
      %vm1984 = vcmp.eq.f32.partialorder %v1983, 8.507059e+37
      %v1985 = vand.u32 %v1798, 2147483648
      %v1986 = vor.u32 1.1754944e-38, %v1985
      %v1987 = vsel %vm1984, %v1986, %v1982
      %v1988 = vmul.f32 1.0, %v1987
      %v1989 = vrcp.pop %v1799
      %v1990 = vmul.f32 %v1799, %v1989
      %v1991 = vsub.f32 1.0, %v1990
      %v1992 = vmul.f32 %v1989, %v1991
      %v1993 = vadd.f32 %v1989, %v1992
      %vm1994 = vweird.f32 %v1799
      %vm1995 = vweird.f32 %v1989
      %vm1996 = vmor %vm1994, %vm1995
      %v1997 = vsel %vm1996, %v1989, %v1993
      %v1998 = vand.u32 2147483647, %v1799
      %vm1999 = vcmp.eq.f32.partialorder %v1998, 8.507059e+37
      %v2000 = vand.u32 %v1799, 2147483648
      %v2001 = vor.u32 1.1754944e-38, %v2000
      %v2002 = vsel %vm1999, %v2001, %v1997
      %v2003 = vmul.f32 1.0, %v2002
      %v2004 = vrcp.pop %v1800
      %v2005 = vmul.f32 %v1800, %v2004
      %v2006 = vsub.f32 1.0, %v2005
      %v2007 = vmul.f32 %v2004, %v2006
      %v2008 = vadd.f32 %v2004, %v2007
      %vm2009 = vweird.f32 %v1800
      %vm2010 = vweird.f32 %v2004
      %vm2011 = vmor %vm2009, %vm2010
      %v2012 = vsel %vm2011, %v2004, %v2008
      %v2013 = vand.u32 2147483647, %v1800
      %vm2014 = vcmp.eq.f32.partialorder %v2013, 8.507059e+37
      %v2015 = vand.u32 %v1800, 2147483648
      %v2016 = vor.u32 1.1754944e-38, %v2015
      %v2017 = vsel %vm2014, %v2016, %v2012
      %v2018 = vmul.f32 1.0, %v2017
      %v2019 = vrcp.pop %v1801
      %v2020 = vmul.f32 %v1801, %v2019
      %v2021 = vsub.f32 1.0, %v2020
      %v2022 = vmul.f32 %v2019, %v2021
      %v2023 = vadd.f32 %v2019, %v2022
      %vm2024 = vweird.f32 %v1801
      %vm2025 = vweird.f32 %v2019
      %vm2026 = vmor %vm2024, %vm2025
      %v2027 = vsel %vm2026, %v2019, %v2023
      %v2028 = vand.u32 2147483647, %v1801
      %vm2029 = vcmp.eq.f32.partialorder %v2028, 8.507059e+37
      %v2030 = vand.u32 %v1801, 2147483648
      %v2031 = vor.u32 1.1754944e-38, %v2030
      %v2032 = vsel %vm2029, %v2031, %v2027
      %v2033 = vmul.f32 1.0, %v2032
      %v2034 = vrcp.pop %v1802
      %v2035 = vmul.f32 %v1802, %v2034
      %v2036 = vsub.f32 1.0, %v2035
      %v2037 = vmul.f32 %v2034, %v2036
      %v2038 = vadd.f32 %v2034, %v2037
      %vm2039 = vweird.f32 %v1802
      %vm2040 = vweird.f32 %v2034
      %vm2041 = vmor %vm2039, %vm2040
      %v2042 = vsel %vm2041, %v2034, %v2038
      %v2043 = vand.u32 2147483647, %v1802
      %vm2044 = vcmp.eq.f32.partialorder %v2043, 8.507059e+37
      %v2045 = vand.u32 %v1802, 2147483648
      %v2046 = vor.u32 1.1754944e-38, %v2045
      %v2047 = vsel %vm2044, %v2046, %v2042
      %v2048 = vmul.f32 1.0, %v2047
      %v2049 = vrcp.pop %v1803
      %v2050 = vmul.f32 %v1803, %v2049
      %v2051 = vsub.f32 1.0, %v2050
      %v2052 = vmul.f32 %v2049, %v2051
      %v2053 = vadd.f32 %v2049, %v2052
      %vm2054 = vweird.f32 %v1803
      %vm2055 = vweird.f32 %v2049
      %vm2056 = vmor %vm2054, %vm2055
      %v2057 = vsel %vm2056, %v2049, %v2053
      %v2058 = vand.u32 2147483647, %v1803
      %vm2059 = vcmp.eq.f32.partialorder %v2058, 8.507059e+37
      %v2060 = vand.u32 %v1803, 2147483648
      %v2061 = vor.u32 1.1754944e-38, %v2060
      %v2062 = vsel %vm2059, %v2061, %v2057
      %v2063 = vmul.f32 1.0, %v2062
      %v2064 = vrcp.pop %v1804
      %v2065 = vmul.f32 %v1804, %v2064
      %v2066 = vsub.f32 1.0, %v2065
      %v2067 = vmul.f32 %v2064, %v2066
      %v2068 = vadd.f32 %v2064, %v2067
      %vm2069 = vweird.f32 %v1804
      %vm2070 = vweird.f32 %v2064
      %vm2071 = vmor %vm2069, %vm2070
      %v2072 = vsel %vm2071, %v2064, %v2068
      %v2073 = vand.u32 2147483647, %v1804
      %vm2074 = vcmp.eq.f32.partialorder %v2073, 8.507059e+37
      %v2075 = vand.u32 %v1804, 2147483648
      %v2076 = vor.u32 1.1754944e-38, %v2075
      %v2077 = vsel %vm2074, %v2076, %v2072
      %v2078 = vmul.f32 1.0, %v2077
      %v2079 = vrcp.pop %v1805
      %v2080 = vmul.f32 %v1805, %v2079
      %v2081 = vsub.f32 1.0, %v2080
      %v2082 = vmul.f32 %v2079, %v2081
      %v2083 = vadd.f32 %v2079, %v2082
      %vm2084 = vweird.f32 %v1805
      %vm2085 = vweird.f32 %v2079
      %vm2086 = vmor %vm2084, %vm2085
      %v2087 = vsel %vm2086, %v2079, %v2083
      %v2088 = vand.u32 2147483647, %v1805
      %vm2089 = vcmp.eq.f32.partialorder %v2088, 8.507059e+37
      %v2090 = vand.u32 %v1805, 2147483648
      %v2091 = vor.u32 1.1754944e-38, %v2090
      %v2092 = vsel %vm2089, %v2091, %v2087
      %v2093 = vmul.f32 1.0, %v2092
      %v2094 = vrcp.pop %v1806
      %v2095 = vmul.f32 %v1806, %v2094
      %v2096 = vsub.f32 1.0, %v2095
      %v2097 = vmul.f32 %v2094, %v2096
      %v2098 = vadd.f32 %v2094, %v2097
      %vm2099 = vweird.f32 %v1806
      %vm2100 = vweird.f32 %v2094
      %vm2101 = vmor %vm2099, %vm2100
      %v2102 = vsel %vm2101, %v2094, %v2098
      %v2103 = vand.u32 2147483647, %v1806
      %vm2104 = vcmp.eq.f32.partialorder %v2103, 8.507059e+37
      %v2105 = vand.u32 %v1806, 2147483648
      %v2106 = vor.u32 1.1754944e-38, %v2105
      %v2107 = vsel %vm2104, %v2106, %v2102
      %v2108 = vmul.f32 1.0, %v2107
      %v2109 = vrcp.pop %v1807
      %v2110 = vmul.f32 %v1807, %v2109
      %v2111 = vsub.f32 1.0, %v2110
      %v2112 = vmul.f32 %v2109, %v2111
      %v2113 = vadd.f32 %v2109, %v2112
      %vm2114 = vweird.f32 %v1807
      %vm2115 = vweird.f32 %v2109
      %vm2116 = vmor %vm2114, %vm2115
      %v2117 = vsel %vm2116, %v2109, %v2113
      %v2118 = vand.u32 2147483647, %v1807
      %vm2119 = vcmp.eq.f32.partialorder %v2118, 8.507059e+37
      %v2120 = vand.u32 %v1807, 2147483648
      %v2121 = vor.u32 1.1754944e-38, %v2120
      %v2122 = vsel %vm2119, %v2121, %v2117
      %v2123 = vmul.f32 1.0, %v2122
      %v2124 = vrcp.pop %v1808
      %v2125 = vmul.f32 %v1808, %v2124
      %v2126 = vsub.f32 1.0, %v2125
      %v2127 = vmul.f32 %v2124, %v2126
      %v2128 = vadd.f32 %v2124, %v2127
      %vm2129 = vweird.f32 %v1808
      %vm2130 = vweird.f32 %v2124
      %vm2131 = vmor %vm2129, %vm2130
      %v2132 = vsel %vm2131, %v2124, %v2128
      %v2133 = vand.u32 2147483647, %v1808
      %vm2134 = vcmp.eq.f32.partialorder %v2133, 8.507059e+37
      %v2135 = vand.u32 %v1808, 2147483648
      %v2136 = vor.u32 1.1754944e-38, %v2135
      %v2137 = vsel %vm2134, %v2136, %v2132
      %v2138 = vmul.f32 1.0, %v2137
      %v2139 = vrcp.pop %v1809
      %v2140 = vmul.f32 %v1809, %v2139
      %v2141 = vsub.f32 1.0, %v2140
      %v2142 = vmul.f32 %v2139, %v2141
      %v2143 = vadd.f32 %v2139, %v2142
      %vm2144 = vweird.f32 %v1809
      %vm2145 = vweird.f32 %v2139
      %vm2146 = vmor %vm2144, %vm2145
      %v2147 = vsel %vm2146, %v2139, %v2143
      %v2148 = vand.u32 2147483647, %v1809
      %vm2149 = vcmp.eq.f32.partialorder %v2148, 8.507059e+37
      %v2150 = vand.u32 %v1809, 2147483648
      %v2151 = vor.u32 1.1754944e-38, %v2150
      %v2152 = vsel %vm2149, %v2151, %v2147
      %v2153 = vmul.f32 1.0, %v2152
      %v2154 = vrcp.pop %v1810
      %v2155 = vmul.f32 %v1810, %v2154
      %v2156 = vsub.f32 1.0, %v2155
      %v2157 = vmul.f32 %v2154, %v2156
      %v2158 = vadd.f32 %v2154, %v2157
      %vm2159 = vweird.f32 %v1810
      %vm2160 = vweird.f32 %v2154
      %vm2161 = vmor %vm2159, %vm2160
      %v2162 = vsel %vm2161, %v2154, %v2158
      %v2163 = vand.u32 2147483647, %v1810
      %vm2164 = vcmp.eq.f32.partialorder %v2163, 8.507059e+37
      %v2165 = vand.u32 %v1810, 2147483648
      %v2166 = vor.u32 1.1754944e-38, %v2165
      %v2167 = vsel %vm2164, %v2166, %v2162
      %v2168 = vmul.f32 1.0, %v2167
      %v2169 = vrcp.pop %v1811
      %v2170 = vmul.f32 %v1811, %v2169
      %v2171 = vsub.f32 1.0, %v2170
      %v2172 = vmul.f32 %v2169, %v2171
      %v2173 = vadd.f32 %v2169, %v2172
      %vm2174 = vweird.f32 %v1811
      %vm2175 = vweird.f32 %v2169
      %vm2176 = vmor %vm2174, %vm2175
      %v2177 = vsel %vm2176, %v2169, %v2173
      %v2178 = vand.u32 2147483647, %v1811
      %vm2179 = vcmp.eq.f32.partialorder %v2178, 8.507059e+37
      %v2180 = vand.u32 %v1811, 2147483648
      %v2181 = vor.u32 1.1754944e-38, %v2180
      %v2182 = vsel %vm2179, %v2181, %v2177
      %v2183 = vmul.f32 1.0, %v2182
      %v2184 = vrcp.pop %v1812
      %v2185 = vmul.f32 %v1812, %v2184
      %v2186 = vsub.f32 1.0, %v2185
      %v2187 = vmul.f32 %v2184, %v2186
      %v2188 = vadd.f32 %v2184, %v2187
      %vm2189 = vweird.f32 %v1812
      %vm2190 = vweird.f32 %v2184
      %vm2191 = vmor %vm2189, %vm2190
      %v2192 = vsel %vm2191, %v2184, %v2188
      %v2193 = vand.u32 2147483647, %v1812
      %vm2194 = vcmp.eq.f32.partialorder %v2193, 8.507059e+37
      %v2195 = vand.u32 %v1812, 2147483648
      %v2196 = vor.u32 1.1754944e-38, %v2195
      %v2197 = vsel %vm2194, %v2196, %v2192
      %v2198 = vmul.f32 1.0, %v2197
      %v2199 = vrcp.pop %v1813
      %v2200 = vmul.f32 %v1813, %v2199
      %v2201 = vsub.f32 1.0, %v2200
      %v2202 = vmul.f32 %v2199, %v2201
      %v2203 = vadd.f32 %v2199, %v2202
      %vm2204 = vweird.f32 %v1813
      %vm2205 = vweird.f32 %v2199
      %vm2206 = vmor %vm2204, %vm2205
      %v2207 = vsel %vm2206, %v2199, %v2203
      %v2208 = vand.u32 2147483647, %v1813
      %vm2209 = vcmp.eq.f32.partialorder %v2208, 8.507059e+37
      %v2210 = vand.u32 %v1813, 2147483648
      %v2211 = vor.u32 1.1754944e-38, %v2210
      %v2212 = vsel %vm2209, %v2211, %v2207
      %v2213 = vmul.f32 1.0, %v2212
      %v2214 = vrcp.pop %v1814
      %v2215 = vmul.f32 %v1814, %v2214
      %v2216 = vsub.f32 1.0, %v2215
      %v2217 = vmul.f32 %v2214, %v2216
      %v2218 = vadd.f32 %v2214, %v2217
      %vm2219 = vweird.f32 %v1814
      %vm2220 = vweird.f32 %v2214
      %vm2221 = vmor %vm2219, %vm2220
      %v2222 = vsel %vm2221, %v2214, %v2218
      %v2223 = vand.u32 2147483647, %v1814
      %vm2224 = vcmp.eq.f32.partialorder %v2223, 8.507059e+37
      %v2225 = vand.u32 %v1814, 2147483648
      %v2226 = vor.u32 1.1754944e-38, %v2225
      %v2227 = vsel %vm2224, %v2226, %v2222
      %v2228 = vmul.f32 1.0, %v2227
      %v2229 = vrcp.pop %v1815
      %v2230 = vmul.f32 %v1815, %v2229
      %v2231 = vsub.f32 1.0, %v2230
      %v2232 = vmul.f32 %v2229, %v2231
      %v2233 = vadd.f32 %v2229, %v2232
      %vm2234 = vweird.f32 %v1815
      %vm2235 = vweird.f32 %v2229
      %vm2236 = vmor %vm2234, %vm2235
      %v2237 = vsel %vm2236, %v2229, %v2233
      %v2238 = vand.u32 2147483647, %v1815
      %vm2239 = vcmp.eq.f32.partialorder %v2238, 8.507059e+37
      %v2240 = vand.u32 %v1815, 2147483648
      %v2241 = vor.u32 1.1754944e-38, %v2240
      %v2242 = vsel %vm2239, %v2241, %v2237
      %v2243 = vmul.f32 1.0, %v2242
      %v2244 = vrcp.pop %v1816
      %v2245 = vmul.f32 %v1816, %v2244
      %v2246 = vsub.f32 1.0, %v2245
      %v2247 = vmul.f32 %v2244, %v2246
      %v2248 = vadd.f32 %v2244, %v2247
      %vm2249 = vweird.f32 %v1816
      %vm2250 = vweird.f32 %v2244
      %vm2251 = vmor %vm2249, %vm2250
      %v2252 = vsel %vm2251, %v2244, %v2248
      %v2253 = vand.u32 2147483647, %v1816
      %vm2254 = vcmp.eq.f32.partialorder %v2253, 8.507059e+37
      %v2255 = vand.u32 %v1816, 2147483648
      %v2256 = vor.u32 1.1754944e-38, %v2255
      %v2257 = vsel %vm2254, %v2256, %v2252
      %v2258 = vmul.f32 1.0, %v2257
      %v2259 = vrcp.pop %v1817
      %v2260 = vmul.f32 %v1817, %v2259
      %v2261 = vsub.f32 1.0, %v2260
      %v2262 = vmul.f32 %v2259, %v2261
      %v2263 = vadd.f32 %v2259, %v2262
      %vm2264 = vweird.f32 %v1817
      %vm2265 = vweird.f32 %v2259
      %vm2266 = vmor %vm2264, %vm2265
      %v2267 = vsel %vm2266, %v2259, %v2263
      %v2268 = vand.u32 2147483647, %v1817
      %vm2269 = vcmp.eq.f32.partialorder %v2268, 8.507059e+37
      %v2270 = vand.u32 %v1817, 2147483648
      %v2271 = vor.u32 1.1754944e-38, %v2270
      %v2272 = vsel %vm2269, %v2271, %v2267
      %v2273 = vmul.f32 1.0, %v2272
      %v2274 = vrcp.pop %v1818
      %v2275 = vmul.f32 %v1818, %v2274
      %v2276 = vsub.f32 1.0, %v2275
      %v2277 = vmul.f32 %v2274, %v2276
      %v2278 = vadd.f32 %v2274, %v2277
      %vm2279 = vweird.f32 %v1818
      %vm2280 = vweird.f32 %v2274
      %vm2281 = vmor %vm2279, %vm2280
      %v2282 = vsel %vm2281, %v2274, %v2278
      %v2283 = vand.u32 2147483647, %v1818
      %vm2284 = vcmp.eq.f32.partialorder %v2283, 8.507059e+37
      %v2285 = vand.u32 %v1818, 2147483648
      %v2286 = vor.u32 1.1754944e-38, %v2285
      %v2287 = vsel %vm2284, %v2286, %v2282
      %v2288 = vmul.f32 1.0, %v2287
      %v2289 = vrcp.pop %v1819
      %v2290 = vmul.f32 %v1819, %v2289
      %v2291 = vsub.f32 1.0, %v2290
      %v2292 = vmul.f32 %v2289, %v2291
      %v2293 = vadd.f32 %v2289, %v2292
      %vm2294 = vweird.f32 %v1819
      %vm2295 = vweird.f32 %v2289
      %vm2296 = vmor %vm2294, %vm2295
      %v2297 = vsel %vm2296, %v2289, %v2293
      %v2298 = vand.u32 2147483647, %v1819
      %vm2299 = vcmp.eq.f32.partialorder %v2298, 8.507059e+37
      %v2300 = vand.u32 %v1819, 2147483648
      %v2301 = vor.u32 1.1754944e-38, %v2300
      %v2302 = vsel %vm2299, %v2301, %v2297
      %v2303 = vmul.f32 1.0, %v2302
      %v2304 = vrcp.pop %v1820
      %v2305 = vmul.f32 %v1820, %v2304
      %v2306 = vsub.f32 1.0, %v2305
      %v2307 = vmul.f32 %v2304, %v2306
      %v2308 = vadd.f32 %v2304, %v2307
      %vm2309 = vweird.f32 %v1820
      %vm2310 = vweird.f32 %v2304
      %vm2311 = vmor %vm2309, %vm2310
      %v2312 = vsel %vm2311, %v2304, %v2308
      %v2313 = vand.u32 2147483647, %v1820
      %vm2314 = vcmp.eq.f32.partialorder %v2313, 8.507059e+37
      %v2315 = vand.u32 %v1820, 2147483648
      %v2316 = vor.u32 1.1754944e-38, %v2315
      %v2317 = vsel %vm2314, %v2316, %v2312
      %v2318 = vmul.f32 1.0, %v2317
      %v2319 = vrcp.pop %v1821
      %v2320 = vmul.f32 %v1821, %v2319
      %v2321 = vsub.f32 1.0, %v2320
      %v2322 = vmul.f32 %v2319, %v2321
      %v2323 = vadd.f32 %v2319, %v2322
      %vm2324 = vweird.f32 %v1821
      %vm2325 = vweird.f32 %v2319
      %vm2326 = vmor %vm2324, %vm2325
      %v2327 = vsel %vm2326, %v2319, %v2323
      %v2328 = vand.u32 2147483647, %v1821
      %vm2329 = vcmp.eq.f32.partialorder %v2328, 8.507059e+37
      %v2330 = vand.u32 %v1821, 2147483648
      %v2331 = vor.u32 1.1754944e-38, %v2330
      %v2332 = vsel %vm2329, %v2331, %v2327
      %v2333 = vmul.f32 1.0, %v2332
      %v2334 = vrcp.pop %v1822
      %v2335 = vmul.f32 %v1822, %v2334
      %v2336 = vsub.f32 1.0, %v2335
      %v2337 = vmul.f32 %v2334, %v2336
      %v2338 = vadd.f32 %v2334, %v2337
      %vm2339 = vweird.f32 %v1822
      %vm2340 = vweird.f32 %v2334
      %vm2341 = vmor %vm2339, %vm2340
      %v2342 = vsel %vm2341, %v2334, %v2338
      %v2343 = vand.u32 2147483647, %v1822
      %vm2344 = vcmp.eq.f32.partialorder %v2343, 8.507059e+37
      %v2345 = vand.u32 %v1822, 2147483648
      %v2346 = vor.u32 1.1754944e-38, %v2345
      %v2347 = vsel %vm2344, %v2346, %v2342
      %v2348 = vmul.f32 1.0, %v2347
      %v2349 = vrcp.pop %v1823
      %v2350 = vmul.f32 %v1823, %v2349
      %v2351 = vsub.f32 1.0, %v2350
      %v2352 = vmul.f32 %v2349, %v2351
      %v2353 = vadd.f32 %v2349, %v2352
      %vm2354 = vweird.f32 %v1823
      %vm2355 = vweird.f32 %v2349
      %vm2356 = vmor %vm2354, %vm2355
      %v2357 = vsel %vm2356, %v2349, %v2353
      %v2358 = vand.u32 2147483647, %v1823
      %vm2359 = vcmp.eq.f32.partialorder %v2358, 8.507059e+37
      %v2360 = vand.u32 %v1823, 2147483648
      %v2361 = vor.u32 1.1754944e-38, %v2360
      %v2362 = vsel %vm2359, %v2361, %v2357
      %v2363 = vmul.f32 1.0, %v2362
      %v2364 = vrcp.pop %v1824
      %v2365 = vmul.f32 %v1824, %v2364
      %v2366 = vsub.f32 1.0, %v2365
      %v2367 = vmul.f32 %v2364, %v2366
      %v2368 = vadd.f32 %v2364, %v2367
      %vm2369 = vweird.f32 %v1824
      %vm2370 = vweird.f32 %v2364
      %vm2371 = vmor %vm2369, %vm2370
      %v2372 = vsel %vm2371, %v2364, %v2368
      %v2373 = vand.u32 2147483647, %v1824
      %vm2374 = vcmp.eq.f32.partialorder %v2373, 8.507059e+37
      %v2375 = vand.u32 %v1824, 2147483648
      %v2376 = vor.u32 1.1754944e-38, %v2375
      %v2377 = vsel %vm2374, %v2376, %v2372
      %v2378 = vmul.f32 1.0, %v2377
      %v2379 = vrcp.pop %v1825
      %v2380 = vmul.f32 %v1825, %v2379
      %v2381 = vsub.f32 1.0, %v2380
      %v2382 = vmul.f32 %v2379, %v2381
      %v2383 = vadd.f32 %v2379, %v2382
      %vm2384 = vweird.f32 %v1825
      %vm2385 = vweird.f32 %v2379
      %vm2386 = vmor %vm2384, %vm2385
      %v2387 = vsel %vm2386, %v2379, %v2383
      %v2388 = vand.u32 2147483647, %v1825
      %vm2389 = vcmp.eq.f32.partialorder %v2388, 8.507059e+37
      %v2390 = vand.u32 %v1825, 2147483648
      %v2391 = vor.u32 1.1754944e-38, %v2390
      %v2392 = vsel %vm2389, %v2391, %v2387
      %v2393 = vmul.f32 1.0, %v2392
      %v2394 = vrcp.pop %v1826
      %v2395 = vmul.f32 %v1826, %v2394
      %v2396 = vsub.f32 1.0, %v2395
      %v2397 = vmul.f32 %v2394, %v2396
      %v2398 = vadd.f32 %v2394, %v2397
      %vm2399 = vweird.f32 %v1826
      %vm2400 = vweird.f32 %v2394
      %vm2401 = vmor %vm2399, %vm2400
      %v2402 = vsel %vm2401, %v2394, %v2398
      %v2403 = vand.u32 2147483647, %v1826
      %vm2404 = vcmp.eq.f32.partialorder %v2403, 8.507059e+37
      %v2405 = vand.u32 %v1826, 2147483648
      %v2406 = vor.u32 1.1754944e-38, %v2405
      %v2407 = vsel %vm2404, %v2406, %v2402
      %v2408 = vmul.f32 1.0, %v2407
      %v2409 = vrcp.pop %v1827
      %v2410 = vmul.f32 %v1827, %v2409
      %v2411 = vsub.f32 1.0, %v2410
      %v2412 = vmul.f32 %v2409, %v2411
      %v2413 = vadd.f32 %v2409, %v2412
      %vm2414 = vweird.f32 %v1827
      %vm2415 = vweird.f32 %v2409
      %vm2416 = vmor %vm2414, %vm2415
      %v2417 = vsel %vm2416, %v2409, %v2413
      %v2418 = vand.u32 2147483647, %v1827
      %vm2419 = vcmp.eq.f32.partialorder %v2418, 8.507059e+37
      %v2420 = vand.u32 %v1827, 2147483648
      %v2421 = vor.u32 1.1754944e-38, %v2420
      %v2422 = vsel %vm2419, %v2421, %v2417
      %v2423 = vmul.f32 1.0, %v2422
      %v2424 = vrcp.pop %v1828
      %v2425 = vmul.f32 %v1828, %v2424
      %v2426 = vsub.f32 1.0, %v2425
      %v2427 = vmul.f32 %v2424, %v2426
      %v2428 = vadd.f32 %v2424, %v2427
      %vm2429 = vweird.f32 %v1828
      %vm2430 = vweird.f32 %v2424
      %vm2431 = vmor %vm2429, %vm2430
      %v2432 = vsel %vm2431, %v2424, %v2428
      %v2433 = vand.u32 2147483647, %v1828
      %vm2434 = vcmp.eq.f32.partialorder %v2433, 8.507059e+37
      %v2435 = vand.u32 %v1828, 2147483648
      %v2436 = vor.u32 1.1754944e-38, %v2435
      %v2437 = vsel %vm2434, %v2436, %v2432
      %v2438 = vmul.f32 1.0, %v2437
      %v2439 = vrcp.pop %v1829
      %v2440 = vmul.f32 %v1829, %v2439
      %v2441 = vsub.f32 1.0, %v2440
      %v2442 = vmul.f32 %v2439, %v2441
      %v2443 = vadd.f32 %v2439, %v2442
      %vm2444 = vweird.f32 %v1829
      %vm2445 = vweird.f32 %v2439
      %vm2446 = vmor %vm2444, %vm2445
      %v2447 = vsel %vm2446, %v2439, %v2443
      %v2448 = vand.u32 2147483647, %v1829
      %vm2449 = vcmp.eq.f32.partialorder %v2448, 8.507059e+37
      %v2450 = vand.u32 %v1829, 2147483648
      %v2451 = vor.u32 1.1754944e-38, %v2450
      %v2452 = vsel %vm2449, %v2451, %v2447
      %v2453 = vmul.f32 1.0, %v2452
      %v2454 = vrcp.pop %v1830
      %v2455 = vmul.f32 %v1830, %v2454
      %v2456 = vsub.f32 1.0, %v2455
      %v2457 = vmul.f32 %v2454, %v2456
      %v2458 = vadd.f32 %v2454, %v2457
      %vm2459 = vweird.f32 %v1830
      %vm2460 = vweird.f32 %v2454
      %vm2461 = vmor %vm2459, %vm2460
      %v2462 = vsel %vm2461, %v2454, %v2458
      %v2463 = vand.u32 2147483647, %v1830
      %vm2464 = vcmp.eq.f32.partialorder %v2463, 8.507059e+37
      %v2465 = vand.u32 %v1830, 2147483648
      %v2466 = vor.u32 1.1754944e-38, %v2465
      %v2467 = vsel %vm2464, %v2466, %v2462
      %v2468 = vmul.f32 1.0, %v2467
      %v2469 = vrcp.pop %v1831
      %v2470 = vmul.f32 %v1831, %v2469
      %v2471 = vsub.f32 1.0, %v2470
      %v2472 = vmul.f32 %v2469, %v2471
      %v2473 = vadd.f32 %v2469, %v2472
      %vm2474 = vweird.f32 %v1831
      %vm2475 = vweird.f32 %v2469
      %vm2476 = vmor %vm2474, %vm2475
      %v2477 = vsel %vm2476, %v2469, %v2473
      %v2478 = vand.u32 2147483647, %v1831
      %vm2479 = vcmp.eq.f32.partialorder %v2478, 8.507059e+37
      %v2480 = vand.u32 %v1831, 2147483648
      %v2481 = vor.u32 1.1754944e-38, %v2480
      %v2482 = vsel %vm2479, %v2481, %v2477
      %v2483 = vmul.f32 1.0, %v2482
      %v2484 = vrcp.pop %v1832
      %v2485 = vmul.f32 %v1832, %v2484
      %v2486 = vsub.f32 1.0, %v2485
      %v2487 = vmul.f32 %v2484, %v2486
      %v2488 = vadd.f32 %v2484, %v2487
      %vm2489 = vweird.f32 %v1832
      %vm2490 = vweird.f32 %v2484
      %vm2491 = vmor %vm2489, %vm2490
      %v2492 = vsel %vm2491, %v2484, %v2488
      %v2493 = vand.u32 2147483647, %v1832
      %vm2494 = vcmp.eq.f32.partialorder %v2493, 8.507059e+37
      %v2495 = vand.u32 %v1832, 2147483648
      %v2496 = vor.u32 1.1754944e-38, %v2495
      %v2497 = vsel %vm2494, %v2496, %v2492
      %v2498 = vmul.f32 1.0, %v2497
      %v2499 = vrcp.pop %v1833
      %v2500 = vmul.f32 %v1833, %v2499
      %v2501 = vsub.f32 1.0, %v2500
      %v2502 = vmul.f32 %v2499, %v2501
      %v2503 = vadd.f32 %v2499, %v2502
      %vm2504 = vweird.f32 %v1833
      %vm2505 = vweird.f32 %v2499
      %vm2506 = vmor %vm2504, %vm2505
      %v2507 = vsel %vm2506, %v2499, %v2503
      %v2508 = vand.u32 2147483647, %v1833
      %vm2509 = vcmp.eq.f32.partialorder %v2508, 8.507059e+37
      %v2510 = vand.u32 %v1833, 2147483648
      %v2511 = vor.u32 1.1754944e-38, %v2510
      %v2512 = vsel %vm2509, %v2511, %v2507
      %v2513 = vmul.f32 1.0, %v2512
      %v2514 = vrcp.pop %v1834
      %v2515 = vmul.f32 %v1834, %v2514
      %v2516 = vsub.f32 1.0, %v2515
      %v2517 = vmul.f32 %v2514, %v2516
      %v2518 = vadd.f32 %v2514, %v2517
      %vm2519 = vweird.f32 %v1834
      %vm2520 = vweird.f32 %v2514
      %vm2521 = vmor %vm2519, %vm2520
      %v2522 = vsel %vm2521, %v2514, %v2518
      %v2523 = vand.u32 2147483647, %v1834
      %vm2524 = vcmp.eq.f32.partialorder %v2523, 8.507059e+37
      %v2525 = vand.u32 %v1834, 2147483648
      %v2526 = vor.u32 1.1754944e-38, %v2525
      %v2527 = vsel %vm2524, %v2526, %v2522
      %v2528 = vmul.f32 1.0, %v2527
      %v2529 = vrcp.pop %v1835
      %v2530 = vmul.f32 %v1835, %v2529
      %v2531 = vsub.f32 1.0, %v2530
      %v2532 = vmul.f32 %v2529, %v2531
      %v2533 = vadd.f32 %v2529, %v2532
      %vm2534 = vweird.f32 %v1835
      %vm2535 = vweird.f32 %v2529
      %vm2536 = vmor %vm2534, %vm2535
      %v2537 = vsel %vm2536, %v2529, %v2533
      %v2538 = vand.u32 2147483647, %v1835
      %vm2539 = vcmp.eq.f32.partialorder %v2538, 8.507059e+37
      %v2540 = vand.u32 %v1835, 2147483648
      %v2541 = vor.u32 1.1754944e-38, %v2540
      %v2542 = vsel %vm2539, %v2541, %v2537
      %v2543 = vmul.f32 1.0, %v2542
      %v2544 = vrcp.pop %v1836
      %v2545 = vmul.f32 %v1836, %v2544
      %v2546 = vsub.f32 1.0, %v2545
      %v2547 = vmul.f32 %v2544, %v2546
      %v2548 = vadd.f32 %v2544, %v2547
      %vm2549 = vweird.f32 %v1836
      %vm2550 = vweird.f32 %v2544
      %vm2551 = vmor %vm2549, %vm2550
      %v2552 = vsel %vm2551, %v2544, %v2548
      %v2553 = vand.u32 2147483647, %v1836
      %vm2554 = vcmp.eq.f32.partialorder %v2553, 8.507059e+37
      %v2555 = vand.u32 %v1836, 2147483648
      %v2556 = vor.u32 1.1754944e-38, %v2555
      %v2557 = vsel %vm2554, %v2556, %v2552
      %v2558 = vmul.f32 1.0, %v2557
      %v2559 = vrcp.pop %v1837
      %v2560 = vmul.f32 %v1837, %v2559
      %v2561 = vsub.f32 1.0, %v2560
      %v2562 = vmul.f32 %v2559, %v2561
      %v2563 = vadd.f32 %v2559, %v2562
      %vm2564 = vweird.f32 %v1837
      %vm2565 = vweird.f32 %v2559
      %vm2566 = vmor %vm2564, %vm2565
      %v2567 = vsel %vm2566, %v2559, %v2563
      %v2568 = vand.u32 2147483647, %v1837
      %vm2569 = vcmp.eq.f32.partialorder %v2568, 8.507059e+37
      %v2570 = vand.u32 %v1837, 2147483648
      %v2571 = vor.u32 1.1754944e-38, %v2570
      %v2572 = vsel %vm2569, %v2571, %v2567
      %v2573 = vmul.f32 1.0, %v2572
      %v2574 = vrcp.pop %v1838
      %v2575 = vmul.f32 %v1838, %v2574
      %v2576 = vsub.f32 1.0, %v2575
      %v2577 = vmul.f32 %v2574, %v2576
      %v2578 = vadd.f32 %v2574, %v2577
      %vm2579 = vweird.f32 %v1838
      %vm2580 = vweird.f32 %v2574
      %vm2581 = vmor %vm2579, %vm2580
      %v2582 = vsel %vm2581, %v2574, %v2578
      %v2583 = vand.u32 2147483647, %v1838
      %vm2584 = vcmp.eq.f32.partialorder %v2583, 8.507059e+37
      %v2585 = vand.u32 %v1838, 2147483648
      %v2586 = vor.u32 1.1754944e-38, %v2585
      %v2587 = vsel %vm2584, %v2586, %v2582
      %v2588 = vmul.f32 1.0, %v2587
      %v2589 = vrcp.pop %v1839
      %v2590 = vmul.f32 %v1839, %v2589
      %v2591 = vsub.f32 1.0, %v2590
      %v2592 = vmul.f32 %v2589, %v2591
      %v2593 = vadd.f32 %v2589, %v2592
      %vm2594 = vweird.f32 %v1839
      %vm2595 = vweird.f32 %v2589
      %vm2596 = vmor %vm2594, %vm2595
      %v2597 = vsel %vm2596, %v2589, %v2593
      %v2598 = vand.u32 2147483647, %v1839
      %vm2599 = vcmp.eq.f32.partialorder %v2598, 8.507059e+37
      %v2600 = vand.u32 %v1839, 2147483648
      %v2601 = vor.u32 1.1754944e-38, %v2600
      %v2602 = vsel %vm2599, %v2601, %v2597
      %v2603 = vmul.f32 1.0, %v2602
      %v2604 = vrcp.pop %v1840
      %v2605 = vmul.f32 %v1840, %v2604
      %v2606 = vsub.f32 1.0, %v2605
      %v2607 = vmul.f32 %v2604, %v2606
      %v2608 = vadd.f32 %v2604, %v2607
      %vm2609 = vweird.f32 %v1840
      %vm2610 = vweird.f32 %v2604
      %vm2611 = vmor %vm2609, %vm2610
      %v2612 = vsel %vm2611, %v2604, %v2608
      %v2613 = vand.u32 2147483647, %v1840
      %vm2614 = vcmp.eq.f32.partialorder %v2613, 8.507059e+37
      %v2615 = vand.u32 %v1840, 2147483648
      %v2616 = vor.u32 1.1754944e-38, %v2615
      %v2617 = vsel %vm2614, %v2616, %v2612
      %v2618 = vmul.f32 1.0, %v2617
      %v2619 = vrcp.pop %v1841
      %v2620 = vmul.f32 %v1841, %v2619
      %v2621 = vsub.f32 1.0, %v2620
      %v2622 = vmul.f32 %v2619, %v2621
      %v2623 = vadd.f32 %v2619, %v2622
      %vm2624 = vweird.f32 %v1841
      %vm2625 = vweird.f32 %v2619
      %vm2626 = vmor %vm2624, %vm2625
      %v2627 = vsel %vm2626, %v2619, %v2623
      %v2628 = vand.u32 2147483647, %v1841
      %vm2629 = vcmp.eq.f32.partialorder %v2628, 8.507059e+37
      %v2630 = vand.u32 %v1841, 2147483648
      %v2631 = vor.u32 1.1754944e-38, %v2630
      %v2632 = vsel %vm2629, %v2631, %v2627
      %v2633 = vmul.f32 1.0, %v2632
      %v2634 = vrcp.pop %v1842
      %v2635 = vmul.f32 %v1842, %v2634
      %v2636 = vsub.f32 1.0, %v2635
      %v2637 = vmul.f32 %v2634, %v2636
      %v2638 = vadd.f32 %v2634, %v2637
      %vm2639 = vweird.f32 %v1842
      %vm2640 = vweird.f32 %v2634
      %vm2641 = vmor %vm2639, %vm2640
      %v2642 = vsel %vm2641, %v2634, %v2638
      %v2643 = vand.u32 2147483647, %v1842
      %vm2644 = vcmp.eq.f32.partialorder %v2643, 8.507059e+37
      %v2645 = vand.u32 %v1842, 2147483648
      %v2646 = vor.u32 1.1754944e-38, %v2645
      %v2647 = vsel %vm2644, %v2646, %v2642
      %v2648 = vmul.f32 1.0, %v2647
      %v2649 = vrcp.pop %v1843
      %v2650 = vmul.f32 %v1843, %v2649
      %v2651 = vsub.f32 1.0, %v2650
      %v2652 = vmul.f32 %v2649, %v2651
      %v2653 = vadd.f32 %v2649, %v2652
      %vm2654 = vweird.f32 %v1843
      %vm2655 = vweird.f32 %v2649
      %vm2656 = vmor %vm2654, %vm2655
      %v2657 = vsel %vm2656, %v2649, %v2653
      %v2658 = vand.u32 2147483647, %v1843
      %vm2659 = vcmp.eq.f32.partialorder %v2658, 8.507059e+37
      %v2660 = vand.u32 %v1843, 2147483648
      %v2661 = vor.u32 1.1754944e-38, %v2660
      %v2662 = vsel %vm2659, %v2661, %v2657
      %v2663 = vmul.f32 1.0, %v2662
      %v2664 = vrcp.pop %v1844
      %v2665 = vmul.f32 %v1844, %v2664
      %v2666 = vsub.f32 1.0, %v2665
      %v2667 = vmul.f32 %v2664, %v2666
      %v2668 = vadd.f32 %v2664, %v2667
      %vm2669 = vweird.f32 %v1844
      %vm2670 = vweird.f32 %v2664
      %vm2671 = vmor %vm2669, %vm2670
      %v2672 = vsel %vm2671, %v2664, %v2668
      %v2673 = vand.u32 2147483647, %v1844
      %vm2674 = vcmp.eq.f32.partialorder %v2673, 8.507059e+37
      %v2675 = vand.u32 %v1844, 2147483648
      %v2676 = vor.u32 1.1754944e-38, %v2675
      %v2677 = vsel %vm2674, %v2676, %v2672
      %v2678 = vmul.f32 1.0, %v2677
      %v2679 = vrcp.pop %v1845
      %v2680 = vmul.f32 %v1845, %v2679
      %v2681 = vsub.f32 1.0, %v2680
      %v2682 = vmul.f32 %v2679, %v2681
      %v2683 = vadd.f32 %v2679, %v2682
      %vm2684 = vweird.f32 %v1845
      %vm2685 = vweird.f32 %v2679
      %vm2686 = vmor %vm2684, %vm2685
      %v2687 = vsel %vm2686, %v2679, %v2683
      %v2688 = vand.u32 2147483647, %v1845
      %vm2689 = vcmp.eq.f32.partialorder %v2688, 8.507059e+37
      %v2690 = vand.u32 %v1845, 2147483648
      %v2691 = vor.u32 1.1754944e-38, %v2690
      %v2692 = vsel %vm2689, %v2691, %v2687
      %v2693 = vmul.f32 1.0, %v2692
      %v2694 = vrcp.pop %v1846
      %v2695 = vmul.f32 %v1846, %v2694
      %v2696 = vsub.f32 1.0, %v2695
      %v2697 = vmul.f32 %v2694, %v2696
      %v2698 = vadd.f32 %v2694, %v2697
      %vm2699 = vweird.f32 %v1846
      %vm2700 = vweird.f32 %v2694
      %vm2701 = vmor %vm2699, %vm2700
      %v2702 = vsel %vm2701, %v2694, %v2698
      %v2703 = vand.u32 2147483647, %v1846
      %vm2704 = vcmp.eq.f32.partialorder %v2703, 8.507059e+37
      %v2705 = vand.u32 %v1846, 2147483648
      %v2706 = vor.u32 1.1754944e-38, %v2705
      %v2707 = vsel %vm2704, %v2706, %v2702
      %v2708 = vmul.f32 1.0, %v2707
      %v2709 = vrcp.pop %v1847
      %v2710 = vmul.f32 %v1847, %v2709
      %v2711 = vsub.f32 1.0, %v2710
      %v2712 = vmul.f32 %v2709, %v2711
      %v2713 = vadd.f32 %v2709, %v2712
      %vm2714 = vweird.f32 %v1847
      %vm2715 = vweird.f32 %v2709
      %vm2716 = vmor %vm2714, %vm2715
      %v2717 = vsel %vm2716, %v2709, %v2713
      %v2718 = vand.u32 2147483647, %v1847
      %vm2719 = vcmp.eq.f32.partialorder %v2718, 8.507059e+37
      %v2720 = vand.u32 %v1847, 2147483648
      %v2721 = vor.u32 1.1754944e-38, %v2720
      %v2722 = vsel %vm2719, %v2721, %v2717
      %v2723 = vmul.f32 1.0, %v2722
      %v2724 = vrcp.pop %v1848
      %v2725 = vmul.f32 %v1848, %v2724
      %v2726 = vsub.f32 1.0, %v2725
      %v2727 = vmul.f32 %v2724, %v2726
      %v2728 = vadd.f32 %v2724, %v2727
      %vm2729 = vweird.f32 %v1848
      %vm2730 = vweird.f32 %v2724
      %vm2731 = vmor %vm2729, %vm2730
      %v2732 = vsel %vm2731, %v2724, %v2728
      %v2733 = vand.u32 2147483647, %v1848
      %vm2734 = vcmp.eq.f32.partialorder %v2733, 8.507059e+37
      %v2735 = vand.u32 %v1848, 2147483648
      %v2736 = vor.u32 1.1754944e-38, %v2735
      %v2737 = vsel %vm2734, %v2736, %v2732
      %v2738 = vmul.f32 1.0, %v2737
      %v2739 = vrcp.pop %v1849
      %v2740 = vmul.f32 %v1849, %v2739
      %v2741 = vsub.f32 1.0, %v2740
      %v2742 = vmul.f32 %v2739, %v2741
      %v2743 = vadd.f32 %v2739, %v2742
      %vm2744 = vweird.f32 %v1849
      %vm2745 = vweird.f32 %v2739
      %vm2746 = vmor %vm2744, %vm2745
      %v2747 = vsel %vm2746, %v2739, %v2743
      %v2748 = vand.u32 2147483647, %v1849
      %vm2749 = vcmp.eq.f32.partialorder %v2748, 8.507059e+37
      %v2750 = vand.u32 %v1849, 2147483648
      %v2751 = vor.u32 1.1754944e-38, %v2750
      %v2752 = vsel %vm2749, %v2751, %v2747
      %v2753 = vmul.f32 1.0, %v2752
      %v2754 = vrcp.pop %v1850
      %v2755 = vmul.f32 %v1850, %v2754
      %v2756 = vsub.f32 1.0, %v2755
      %v2757 = vmul.f32 %v2754, %v2756
      %v2758 = vadd.f32 %v2754, %v2757
      %vm2759 = vweird.f32 %v1850
      %vm2760 = vweird.f32 %v2754
      %vm2761 = vmor %vm2759, %vm2760
      %v2762 = vsel %vm2761, %v2754, %v2758
      %v2763 = vand.u32 2147483647, %v1850
      %vm2764 = vcmp.eq.f32.partialorder %v2763, 8.507059e+37
      %v2765 = vand.u32 %v1850, 2147483648
      %v2766 = vor.u32 1.1754944e-38, %v2765
      %v2767 = vsel %vm2764, %v2766, %v2762
      %v2768 = vmul.f32 1.0, %v2767
      %v2769 = vrcp.pop %v1851
      %v2770 = vmul.f32 %v1851, %v2769
      %v2771 = vsub.f32 1.0, %v2770
      %v2772 = vmul.f32 %v2769, %v2771
      %v2773 = vadd.f32 %v2769, %v2772
      %vm2774 = vweird.f32 %v1851
      %vm2775 = vweird.f32 %v2769
      %vm2776 = vmor %vm2774, %vm2775
      %v2777 = vsel %vm2776, %v2769, %v2773
      %v2778 = vand.u32 2147483647, %v1851
      %vm2779 = vcmp.eq.f32.partialorder %v2778, 8.507059e+37
      %v2780 = vand.u32 %v1851, 2147483648
      %v2781 = vor.u32 1.1754944e-38, %v2780
      %v2782 = vsel %vm2779, %v2781, %v2777
      %v2783 = vmul.f32 1.0, %v2782
      %v2784 = vrcp.pop %v1852
      %v2785 = vmul.f32 %v1852, %v2784
      %v2786 = vsub.f32 1.0, %v2785
      %v2787 = vmul.f32 %v2784, %v2786
      %v2788 = vadd.f32 %v2784, %v2787
      %vm2789 = vweird.f32 %v1852
      %vm2790 = vweird.f32 %v2784
      %vm2791 = vmor %vm2789, %vm2790
      %v2792 = vsel %vm2791, %v2784, %v2788
      %v2793 = vand.u32 2147483647, %v1852
      %vm2794 = vcmp.eq.f32.partialorder %v2793, 8.507059e+37
      %v2795 = vand.u32 %v1852, 2147483648
      %v2796 = vor.u32 1.1754944e-38, %v2795
      %v2797 = vsel %vm2794, %v2796, %v2792
      %v2798 = vmul.f32 1.0, %v2797
      %v2799 = vrcp.pop %v1853
      %v2800 = vmul.f32 %v1853, %v2799
      %v2801 = vsub.f32 1.0, %v2800
      %v2802 = vmul.f32 %v2799, %v2801
      %v2803 = vadd.f32 %v2799, %v2802
      %vm2804 = vweird.f32 %v1853
      %vm2805 = vweird.f32 %v2799
      %vm2806 = vmor %vm2804, %vm2805
      %v2807 = vsel %vm2806, %v2799, %v2803
      %v2808 = vand.u32 2147483647, %v1853
      %vm2809 = vcmp.eq.f32.partialorder %v2808, 8.507059e+37
      %v2810 = vand.u32 %v1853, 2147483648
      %v2811 = vor.u32 1.1754944e-38, %v2810
      %v2812 = vsel %vm2809, %v2811, %v2807
      %v2813 = vmul.f32 1.0, %v2812
      %2815 = vset.pattern.permute.xlu0 0
      %2816 = vperm.xlu0 %2815, %v1868
      %v2817 = vpop.permute.xlu0 %2816
      %2820 = vset.pattern.permute.xlu0 0
      %2821 = vperm.xlu0 %2820, %v1883
      %v2822 = vpop.permute.xlu0 %2821
      %2825 = vset.pattern.permute.xlu0 0
      %2826 = vperm.xlu0 %2825, %v1898
      %v2827 = vpop.permute.xlu0 %2826
      %2830 = vset.pattern.permute.xlu0 0
      %2831 = vperm.xlu0 %2830, %v1913
      %v2832 = vpop.permute.xlu0 %2831
      %2835 = vset.pattern.permute.xlu0 0
      %2836 = vperm.xlu0 %2835, %v1928
      %v2837 = vpop.permute.xlu0 %2836
      %2840 = vset.pattern.permute.xlu0 0
      %2841 = vperm.xlu0 %2840, %v1943
      %v2842 = vpop.permute.xlu0 %2841
      %2845 = vset.pattern.permute.xlu0 0
      %2846 = vperm.xlu0 %2845, %v1958
      %v2847 = vpop.permute.xlu0 %2846
      %2850 = vset.pattern.permute.xlu0 0
      %2851 = vperm.xlu0 %2850, %v1973
      %v2852 = vpop.permute.xlu0 %2851
      %2855 = vset.pattern.permute.xlu0 0
      %2856 = vperm.xlu0 %2855, %v1988
      %v2857 = vpop.permute.xlu0 %2856
      %2860 = vset.pattern.permute.xlu0 0
      %2861 = vperm.xlu0 %2860, %v2003
      %v2862 = vpop.permute.xlu0 %2861
      %2865 = vset.pattern.permute.xlu0 0
      %2866 = vperm.xlu0 %2865, %v2018
      %v2867 = vpop.permute.xlu0 %2866
      %2870 = vset.pattern.permute.xlu0 0
      %2871 = vperm.xlu0 %2870, %v2033
      %v2872 = vpop.permute.xlu0 %2871
      %2875 = vset.pattern.permute.xlu0 0
      %2876 = vperm.xlu0 %2875, %v2048
      %v2877 = vpop.permute.xlu0 %2876
      %2880 = vset.pattern.permute.xlu0 0
      %2881 = vperm.xlu0 %2880, %v2063
      %v2882 = vpop.permute.xlu0 %2881
      %2885 = vset.pattern.permute.xlu0 0
      %2886 = vperm.xlu0 %2885, %v2078
      %v2887 = vpop.permute.xlu0 %2886
      %2890 = vset.pattern.permute.xlu0 0
      %2891 = vperm.xlu0 %2890, %v2093
      %v2892 = vpop.permute.xlu0 %2891
      %2895 = vset.pattern.permute.xlu0 0
      %2896 = vperm.xlu0 %2895, %v2108
      %v2897 = vpop.permute.xlu0 %2896
      %2900 = vset.pattern.permute.xlu0 0
      %2901 = vperm.xlu0 %2900, %v2123
      %v2902 = vpop.permute.xlu0 %2901
      %2905 = vset.pattern.permute.xlu0 0
      %2906 = vperm.xlu0 %2905, %v2138
      %v2907 = vpop.permute.xlu0 %2906
      %2910 = vset.pattern.permute.xlu0 0
      %2911 = vperm.xlu0 %2910, %v2153
      %v2912 = vpop.permute.xlu0 %2911
      %2915 = vset.pattern.permute.xlu0 0
      %2916 = vperm.xlu0 %2915, %v2168
      %v2917 = vpop.permute.xlu0 %2916
      %2920 = vset.pattern.permute.xlu0 0
      %2921 = vperm.xlu0 %2920, %v2183
      %v2922 = vpop.permute.xlu0 %2921
      %2925 = vset.pattern.permute.xlu0 0
      %2926 = vperm.xlu0 %2925, %v2198
      %v2927 = vpop.permute.xlu0 %2926
      %2930 = vset.pattern.permute.xlu0 0
      %2931 = vperm.xlu0 %2930, %v2213
      %v2932 = vpop.permute.xlu0 %2931
      %2935 = vset.pattern.permute.xlu0 0
      %2936 = vperm.xlu0 %2935, %v2228
      %v2937 = vpop.permute.xlu0 %2936
      %2940 = vset.pattern.permute.xlu0 0
      %2941 = vperm.xlu0 %2940, %v2243
      %v2942 = vpop.permute.xlu0 %2941
      %2945 = vset.pattern.permute.xlu0 0
      %2946 = vperm.xlu0 %2945, %v2258
      %v2947 = vpop.permute.xlu0 %2946
      %2950 = vset.pattern.permute.xlu0 0
      %2951 = vperm.xlu0 %2950, %v2273
      %v2952 = vpop.permute.xlu0 %2951
      %2955 = vset.pattern.permute.xlu0 0
      %2956 = vperm.xlu0 %2955, %v2288
      %v2957 = vpop.permute.xlu0 %2956
      %2960 = vset.pattern.permute.xlu0 0
      %2961 = vperm.xlu0 %2960, %v2303
      %v2962 = vpop.permute.xlu0 %2961
      %2965 = vset.pattern.permute.xlu0 0
      %2966 = vperm.xlu0 %2965, %v2318
      %v2967 = vpop.permute.xlu0 %2966
      %2970 = vset.pattern.permute.xlu0 0
      %2971 = vperm.xlu0 %2970, %v2333
      %v2972 = vpop.permute.xlu0 %2971
      %2975 = vset.pattern.permute.xlu0 0
      %2976 = vperm.xlu0 %2975, %v2348
      %v2977 = vpop.permute.xlu0 %2976
      %2980 = vset.pattern.permute.xlu0 0
      %2981 = vperm.xlu0 %2980, %v2363
      %v2982 = vpop.permute.xlu0 %2981
      %2985 = vset.pattern.permute.xlu0 0
      %2986 = vperm.xlu0 %2985, %v2378
      %v2987 = vpop.permute.xlu0 %2986
      %2990 = vset.pattern.permute.xlu0 0
      %2991 = vperm.xlu0 %2990, %v2393
      %v2992 = vpop.permute.xlu0 %2991
      %2995 = vset.pattern.permute.xlu0 0
      %2996 = vperm.xlu0 %2995, %v2408
      %v2997 = vpop.permute.xlu0 %2996
      %3000 = vset.pattern.permute.xlu0 0
      %3001 = vperm.xlu0 %3000, %v2423
      %v3002 = vpop.permute.xlu0 %3001
      %3005 = vset.pattern.permute.xlu0 0
      %3006 = vperm.xlu0 %3005, %v2438
      %v3007 = vpop.permute.xlu0 %3006
      %3010 = vset.pattern.permute.xlu0 0
      %3011 = vperm.xlu0 %3010, %v2453
      %v3012 = vpop.permute.xlu0 %3011
      %3015 = vset.pattern.permute.xlu0 0
      %3016 = vperm.xlu0 %3015, %v2468
      %v3017 = vpop.permute.xlu0 %3016
      %3020 = vset.pattern.permute.xlu0 0
      %3021 = vperm.xlu0 %3020, %v2483
      %v3022 = vpop.permute.xlu0 %3021
      %3025 = vset.pattern.permute.xlu0 0
      %3026 = vperm.xlu0 %3025, %v2498
      %v3027 = vpop.permute.xlu0 %3026
      %3030 = vset.pattern.permute.xlu0 0
      %3031 = vperm.xlu0 %3030, %v2513
      %v3032 = vpop.permute.xlu0 %3031
      %3035 = vset.pattern.permute.xlu0 0
      %3036 = vperm.xlu0 %3035, %v2528
      %v3037 = vpop.permute.xlu0 %3036
      %3040 = vset.pattern.permute.xlu0 0
      %3041 = vperm.xlu0 %3040, %v2543
      %v3042 = vpop.permute.xlu0 %3041
      %3045 = vset.pattern.permute.xlu0 0
      %3046 = vperm.xlu0 %3045, %v2558
      %v3047 = vpop.permute.xlu0 %3046
      %3050 = vset.pattern.permute.xlu0 0
      %3051 = vperm.xlu0 %3050, %v2573
      %v3052 = vpop.permute.xlu0 %3051
      %3055 = vset.pattern.permute.xlu0 0
      %3056 = vperm.xlu0 %3055, %v2588
      %v3057 = vpop.permute.xlu0 %3056
      %3060 = vset.pattern.permute.xlu0 0
      %3061 = vperm.xlu0 %3060, %v2603
      %v3062 = vpop.permute.xlu0 %3061
      %3065 = vset.pattern.permute.xlu0 0
      %3066 = vperm.xlu0 %3065, %v2618
      %v3067 = vpop.permute.xlu0 %3066
      %3070 = vset.pattern.permute.xlu0 0
      %3071 = vperm.xlu0 %3070, %v2633
      %v3072 = vpop.permute.xlu0 %3071
      %3075 = vset.pattern.permute.xlu0 0
      %3076 = vperm.xlu0 %3075, %v2648
      %v3077 = vpop.permute.xlu0 %3076
      %3080 = vset.pattern.permute.xlu0 0
      %3081 = vperm.xlu0 %3080, %v2663
      %v3082 = vpop.permute.xlu0 %3081
      %3085 = vset.pattern.permute.xlu0 0
      %3086 = vperm.xlu0 %3085, %v2678
      %v3087 = vpop.permute.xlu0 %3086
      %3090 = vset.pattern.permute.xlu0 0
      %3091 = vperm.xlu0 %3090, %v2693
      %v3092 = vpop.permute.xlu0 %3091
      %3095 = vset.pattern.permute.xlu0 0
      %3096 = vperm.xlu0 %3095, %v2708
      %v3097 = vpop.permute.xlu0 %3096
      %3100 = vset.pattern.permute.xlu0 0
      %3101 = vperm.xlu0 %3100, %v2723
      %v3102 = vpop.permute.xlu0 %3101
      %3105 = vset.pattern.permute.xlu0 0
      %3106 = vperm.xlu0 %3105, %v2738
      %v3107 = vpop.permute.xlu0 %3106
      %3110 = vset.pattern.permute.xlu0 0
      %3111 = vperm.xlu0 %3110, %v2753
      %v3112 = vpop.permute.xlu0 %3111
      %3115 = vset.pattern.permute.xlu0 0
      %3116 = vperm.xlu0 %3115, %v2768
      %v3117 = vpop.permute.xlu0 %3116
      %3120 = vset.pattern.permute.xlu0 0
      %3121 = vperm.xlu0 %3120, %v2783
      %v3122 = vpop.permute.xlu0 %3121
      %3125 = vset.pattern.permute.xlu0 0
      %3126 = vperm.xlu0 %3125, %v2798
      %v3127 = vpop.permute.xlu0 %3126
      %3130 = vset.pattern.permute.xlu0 0
      %3131 = vperm.xlu0 %3130, %v2813
      %v3132 = vpop.permute.xlu0 %3131
      %v3134 = vmul.f32 %v406, %v2817
      %v3135 = vmul.f32 %v407, %v2822
      %v3136 = vmul.f32 %v408, %v2827
      %v3137 = vmul.f32 %v409, %v2832
      %v3138 = vmul.f32 %v410, %v2837
      %v3139 = vmul.f32 %v411, %v2842
      %v3140 = vmul.f32 %v412, %v2847
      %v3141 = vmul.f32 %v413, %v2852
      %v3142 = vmul.f32 %v414, %v2857
      %v3143 = vmul.f32 %v415, %v2862
      %v3144 = vmul.f32 %v416, %v2867
      %v3145 = vmul.f32 %v417, %v2872
      %v3146 = vmul.f32 %v418, %v2877
      %v3147 = vmul.f32 %v419, %v2882
      %v3148 = vmul.f32 %v420, %v2887
      %v3149 = vmul.f32 %v421, %v2892
      %v3150 = vmul.f32 %v422, %v2897
      %v3151 = vmul.f32 %v423, %v2902
      %v3152 = vmul.f32 %v424, %v2907
      %v3153 = vmul.f32 %v425, %v2912
      %v3154 = vmul.f32 %v426, %v2917
      %v3155 = vmul.f32 %v427, %v2922
      %v3156 = vmul.f32 %v428, %v2927
      %v3157 = vmul.f32 %v429, %v2932
      %v3158 = vmul.f32 %v430, %v2937
      %v3159 = vmul.f32 %v431, %v2942
      %v3160 = vmul.f32 %v432, %v2947
      %v3161 = vmul.f32 %v433, %v2952
      %v3162 = vmul.f32 %v434, %v2957
      %v3163 = vmul.f32 %v435, %v2962
      %v3164 = vmul.f32 %v436, %v2967
      %v3165 = vmul.f32 %v437, %v2972
      %v3166 = vmul.f32 %v438, %v2977
      %v3167 = vmul.f32 %v439, %v2982
      %v3168 = vmul.f32 %v440, %v2987
      %v3169 = vmul.f32 %v441, %v2992
      %v3170 = vmul.f32 %v442, %v2997
      %v3171 = vmul.f32 %v443, %v3002
      %v3172 = vmul.f32 %v444, %v3007
      %v3173 = vmul.f32 %v445, %v3012
      %v3174 = vmul.f32 %v446, %v3017
      %v3175 = vmul.f32 %v447, %v3022
      %v3176 = vmul.f32 %v448, %v3027
      %v3177 = vmul.f32 %v449, %v3032
      %v3178 = vmul.f32 %v450, %v3037
      %v3179 = vmul.f32 %v451, %v3042
      %v3180 = vmul.f32 %v452, %v3047
      %v3181 = vmul.f32 %v453, %v3052
      %v3182 = vmul.f32 %v454, %v3057
      %v3183 = vmul.f32 %v455, %v3062
      %v3184 = vmul.f32 %v456, %v3067
      %v3185 = vmul.f32 %v457, %v3072
      %v3186 = vmul.f32 %v458, %v3077
      %v3187 = vmul.f32 %v459, %v3082
      %v3188 = vmul.f32 %v460, %v3087
      %v3189 = vmul.f32 %v461, %v3092
      %v3190 = vmul.f32 %v462, %v3097
      %v3191 = vmul.f32 %v463, %v3102
      %v3192 = vmul.f32 %v464, %v3107
      %v3193 = vmul.f32 %v465, %v3112
      %v3194 = vmul.f32 %v466, %v3117
      %v3195 = vmul.f32 %v467, %v3122
      %v3196 = vmul.f32 %v468, %v3127
      %v3197 = vmul.f32 %v469, %v3132
      %3198 = vst.msk [vmem:[%s339] sm:$0xff] %vm576, %v3134
      %3199 = vst.msk [vmem:[%s339 + $0x8] sm:$0xff] %vm576, %v3135
      %3200 = vst.msk [vmem:[%s339 + $0x10] sm:$0xff] %vm576, %v3136
      %3201 = vst.msk [vmem:[%s339 + $0x18] sm:$0xff] %vm576, %v3137
      %3202 = vst.msk [vmem:[%s339 + $0x20] sm:$0xff] %vm576, %v3138
      %3203 = vst.msk [vmem:[%s339 + $0x28] sm:$0xff] %vm576, %v3139
      %3204 = vst.msk [vmem:[%s339 + $0x30] sm:$0xff] %vm576, %v3140
      %3205 = vst.msk [vmem:[%s339 + $0x38] sm:$0xff] %vm576, %v3141
      %3206 = vst.msk [vmem:[%s339 + $0x40] sm:$0xff] %vm576, %v3142
      %3207 = vst.msk [vmem:[%s339 + $0x48] sm:$0xff] %vm576, %v3143
      %3208 = vst.msk [vmem:[%s339 + $0x50] sm:$0xff] %vm576, %v3144
      %3209 = vst.msk [vmem:[%s339 + $0x58] sm:$0xff] %vm576, %v3145
      %3210 = vst.msk [vmem:[%s339 + $0x60] sm:$0xff] %vm576, %v3146
      %3211 = vst.msk [vmem:[%s339 + $0x68] sm:$0xff] %vm576, %v3147
      %3212 = vst.msk [vmem:[%s339 + $0x70] sm:$0xff] %vm576, %v3148
      %3213 = vst.msk [vmem:[%s339 + $0x78] sm:$0xff] %vm576, %v3149
      %3214 = vst.msk [vmem:[%s339 + $0x80] sm:$0xff] %vm576, %v3150
      %3215 = vst.msk [vmem:[%s339 + $0x88] sm:$0xff] %vm576, %v3151
      %3216 = vst.msk [vmem:[%s339 + $0x90] sm:$0xff] %vm576, %v3152
      %3217 = vst.msk [vmem:[%s339 + $0x98] sm:$0xff] %vm576, %v3153
      %3218 = vst.msk [vmem:[%s339 + $0xa0] sm:$0xff] %vm576, %v3154
      %3219 = vst.msk [vmem:[%s339 + $0xa8] sm:$0xff] %vm576, %v3155
      %3220 = vst.msk [vmem:[%s339 + $0xb0] sm:$0xff] %vm576, %v3156
      %3221 = vst.msk [vmem:[%s339 + $0xb8] sm:$0xff] %vm576, %v3157
      %3222 = vst.msk [vmem:[%s339 + $0xc0] sm:$0xff] %vm576, %v3158
      %3223 = vst.msk [vmem:[%s339 + $0xc8] sm:$0xff] %vm576, %v3159
      %3224 = vst.msk [vmem:[%s339 + $0xd0] sm:$0xff] %vm576, %v3160
      %3225 = vst.msk [vmem:[%s339 + $0xd8] sm:$0xff] %vm576, %v3161
      %3226 = vst.msk [vmem:[%s339 + $0xe0] sm:$0xff] %vm576, %v3162
      %3227 = vst.msk [vmem:[%s339 + $0xe8] sm:$0xff] %vm576, %v3163
      %3228 = vst.msk [vmem:[%s339 + $0xf0] sm:$0xff] %vm576, %v3164
      %3229 = vst.msk [vmem:[%s339 + $0xf8] sm:$0xff] %vm576, %v3165
      %3230 = vst.msk [vmem:[%s339 + $0x100] sm:$0xff] %vm576, %v3166
      %3231 = vst.msk [vmem:[%s339 + $0x108] sm:$0xff] %vm576, %v3167
      %3232 = vst.msk [vmem:[%s339 + $0x110] sm:$0xff] %vm576, %v3168
      %3233 = vst.msk [vmem:[%s339 + $0x118] sm:$0xff] %vm576, %v3169
      %3234 = vst.msk [vmem:[%s339 + $0x120] sm:$0xff] %vm576, %v3170
      %3235 = vst.msk [vmem:[%s339 + $0x128] sm:$0xff] %vm576, %v3171
      %3236 = vst.msk [vmem:[%s339 + $0x130] sm:$0xff] %vm576, %v3172
      %3237 = vst.msk [vmem:[%s339 + $0x138] sm:$0xff] %vm576, %v3173
      %3238 = vst.msk [vmem:[%s339 + $0x140] sm:$0xff] %vm576, %v3174
      %3239 = vst.msk [vmem:[%s339 + $0x148] sm:$0xff] %vm576, %v3175
      %3240 = vst.msk [vmem:[%s339 + $0x150] sm:$0xff] %vm576, %v3176
      %3241 = vst.msk [vmem:[%s339 + $0x158] sm:$0xff] %vm576, %v3177
      %3242 = vst.msk [vmem:[%s339 + $0x160] sm:$0xff] %vm576, %v3178
      %3243 = vst.msk [vmem:[%s339 + $0x168] sm:$0xff] %vm576, %v3179
      %3244 = vst.msk [vmem:[%s339 + $0x170] sm:$0xff] %vm576, %v3180
      %3245 = vst.msk [vmem:[%s339 + $0x178] sm:$0xff] %vm576, %v3181
      %3246 = vst.msk [vmem:[%s339 + $0x180] sm:$0xff] %vm576, %v3182
      %3247 = vst.msk [vmem:[%s339 + $0x188] sm:$0xff] %vm576, %v3183
      %3248 = vst.msk [vmem:[%s339 + $0x190] sm:$0xff] %vm576, %v3184
      %3249 = vst.msk [vmem:[%s339 + $0x198] sm:$0xff] %vm576, %v3185
      %3250 = vst.msk [vmem:[%s339 + $0x1a0] sm:$0xff] %vm576, %v3186
      %3251 = vst.msk [vmem:[%s339 + $0x1a8] sm:$0xff] %vm576, %v3187
      %3252 = vst.msk [vmem:[%s339 + $0x1b0] sm:$0xff] %vm576, %v3188
      %3253 = vst.msk [vmem:[%s339 + $0x1b8] sm:$0xff] %vm576, %v3189
      %3254 = vst.msk [vmem:[%s339 + $0x1c0] sm:$0xff] %vm576, %v3190
      %3255 = vst.msk [vmem:[%s339 + $0x1c8] sm:$0xff] %vm576, %v3191
      %3256 = vst.msk [vmem:[%s339 + $0x1d0] sm:$0xff] %vm576, %v3192
      %3257 = vst.msk [vmem:[%s339 + $0x1d8] sm:$0xff] %vm576, %v3193
      %3258 = vst.msk [vmem:[%s339 + $0x1e0] sm:$0xff] %vm576, %v3194
      %3259 = vst.msk [vmem:[%s339 + $0x1e8] sm:$0xff] %vm576, %v3195
      %3260 = vst.msk [vmem:[%s339 + $0x1f0] sm:$0xff] %vm576, %v3196
      %3261 = vst.msk [vmem:[%s339 + $0x1f8] sm:$0xff] %vm576, %v3197
      %s3262 = smul.u32 64, %s22
      %p3263 = scmp.lt.s32.totalorder %s21, 1
      %s3264 = scalar_select %p3263, %s21, 1
      %p3265 = scmp.lt.s32.totalorder %s3262, 127
      %s3266 = scalar_select %p3265, %s3262, 127
      %s3267 = smul.addr %s3264, 128
      %s3268 = sadd.s32 %s3266, %s3267
      %s3269 = smul.addr %s3268, 8
      %s3270 = scalar_lea.vmem %s6, %s3269
      // Predicated region
      $region45: #{augmented_attention_forward.5} parent=43 // pred_check
        %p3271 = pneg %p194
      $region46: #{augmented_attention_forward.5} parent=43 // pred_check_branch
        %3273 = sbr.rel (%p3271) target = $region48
      $region47: #{augmented_attention_forward.5} parent=43 // pred_region
        %s3274 = smul.u32 64, %s22
      $region48: #{augmented_attention_forward.5} parent=43 // pred_fallthru
        _
    $region44: #{augmented_attention_forward.5} parent=5 // pred_fallthru
      _
    %p3275 = scmp.le.s32.totalorder 2, %s12
    // Predicated region
    $region49: #{augmented_attention_forward.5} parent=5 // pred_check
      %p3276 = pneg %p3275
    $region50: #{augmented_attention_forward.5} parent=5 // pred_check_branch
      %3278 = sbr.rel (%p3276) target = $region52
    $region51: #{augmented_attention_forward.5} parent=5 // pred_region
      %s3279 = ssub.s32 %s12, 2
      // Predicated region
      $region53: #{augmented_attention_forward.5} parent=51 // pred_check
        %p3280 = pneg %p200
      $region54: #{augmented_attention_forward.5} parent=51 // pred_check_branch
        %3282 = sbr.rel (%p3280) target = $region56
      $region55: #{augmented_attention_forward.5} parent=51 // pred_region
        %s3283 = smul.u32 64, %s24
        %p3284 = scmp.lt.s32.totalorder %s23, 1
        %s3285 = scalar_select %p3284, %s23, 1
        %p3286 = scmp.lt.s32.totalorder %s3283, 127
        %s3287 = scalar_select %p3286, %s3283, 127
        %s3288 = smul.addr %s3285, 128
        %s3289 = sadd.s32 %s3287, %s3288
        %s3290 = smul.addr %s3289, 8
        %s3291 = scalar_lea.vmem %s6, %s3290
      $region56: #{augmented_attention_forward.5} parent=51 // pred_fallthru
        _
    $region52: #{augmented_attention_forward.5} parent=5 // pred_fallthru
      _
  $region6: #{augmented_attention_forward.5} parent=0 // loop_footer
    %s16 = sadd.s32 1, %s12
  $region7: #{augmented_attention_forward.5} parent=0 // loop_footer_branch
    %11 = sbr.rel target = $region3
  $region8: #{augmented_attention_forward.5} parent=0 // loop_exit
    _

</llo_original>
